<compile_context>
chip_gen: v6e
topology: v6e:2x2x1
jax: 0.10.0
libtpu: 0.0.40
codegen_flags: <defaults>
</compile_context>

<pallas_src>
import functools

import jax
import jax.numpy as jnp
from jax import lax
from jax.experimental import pallas as pl
from jax.experimental.pallas import tpu as pltpu


OUT_DIM = 2       # Linear(hidden, 2)
OUT_PAD = 128     # lane-dense padded output width
LANE = 128
SUBLANE = 8


def _round_up(x, m):
    return (x + m - 1) // m * m


def _cdiv(a, b):
    return (a + b - 1) // b


def _lstm_head_kernel(
    xp1_ref,     # (T*TB, 4*Hp)  layer-1 input projection (x@Wih1 + b1), gates [i,f,o,g]
    whh1_ref,    # (Hp, 4*Hp)
    wih2_ref,    # (Hp, 4*Hp)
    whh2_ref,    # (Hp, 4*Hp)
    b2_ref,      # (1, 4*Hp)     b_ih2 + b_hh2
    gamma_ref,   # (1, Hp)       LayerNorm weight (zero-padded)
    beta_ref,    # (1, Hp)       LayerNorm bias (zero-padded)
    fcw_ref,     # (Hp, OUT_PAD) zero-padded fc weight
    fcb_ref,     # (1, OUT_PAD)  zero-padded fc bias
    out_ref,     # (TB, OUT_PAD)
    *,
    seq_len,     # T  (static)
    batch_tile,  # TB (static)
    hidden,      # H  true hidden size (static)
    hidden_pad,  # Hp lane-padded hidden size (static)
):
    T = seq_len
    TB = batch_tile
    H = hidden
    Hp = hidden_pad

    whh1 = whh1_ref[...]
    wih2 = wih2_ref[...]
    whh2 = whh2_ref[...]
    b2 = b2_ref[...]

    def gates(z, c):
        # Gate order [i, f, o, g]: one contiguous sigmoid over 3*Hp lanes, all
        # slices 128-lane aligned.
        sig = jax.nn.sigmoid(z[:, :3 * Hp])
        g_g = jnp.tanh(z[:, 3 * Hp:])
        i_g = sig[:, 0 * Hp:1 * Hp]
        f_g = sig[:, 1 * Hp:2 * Hp]
        o_g = sig[:, 2 * Hp:3 * Hp]
        c_new = f_g * c + i_g * g_g
        h_new = o_g * jnp.tanh(c_new)
        return h_new, c_new

    zeros_h = jnp.zeros((TB, Hp), jnp.float32)

    # Prologue: layer-1 step 0 (h1_{-1} = 0, so z1 is just the projected input).
    h1, c1 = gates(xp1_ref[pl.ds(0, TB), :], zeros_h)
    h2, c2 = zeros_h, zeros_h

    # Wavefront: iteration t computes layer-1 step t and layer-2 step t-1.
    # All three matmuls read only the carry -> mutually independent work that
    # hides the MXU latency of the serial recurrence.
    def wavefront(t, carry):
        h1, c1, h2, c2 = carry
        r = pl.multiple_of(t * TB, TB)
        z1 = xp1_ref[pl.ds(r, TB), :] + jnp.dot(
            h1, whh1, preferred_element_type=jnp.float32)
        z2 = (b2
              + jnp.dot(h1, wih2, preferred_element_type=jnp.float32)
              + jnp.dot(h2, whh2, preferred_element_type=jnp.float32))
        h1n, c1n = gates(z1, c1)
        h2n, c2n = gates(z2, c2)
        return (h1n, c1n, h2n, c2n)

    h1, c1, h2, c2 = lax.fori_loop(1, T, wavefront, (h1, c1, h2, c2),
                                   unroll=True)

    # Epilogue: layer-2 step T-1 (the last-timestep output).
    z2 = (b2
          + jnp.dot(h1, wih2, preferred_element_type=jnp.float32)
          + jnp.dot(h2, whh2, preferred_element_type=jnp.float32))
    h2, _ = gates(z2, c2)

    # LayerNorm over the TRUE hidden size H (padded lanes of h2 are exactly 0,
    # so sums over Hp lanes equal sums over H; eps=1e-5, biased variance).
    inv_h = jnp.float32(1.0 / H)
    mean = jnp.sum(h2, axis=-1, keepdims=True) * inv_h
    var = jnp.maximum(
        jnp.sum(h2 * h2, axis=-1, keepdims=True) * inv_h - mean * mean, 0.0)
    ln = (h2 - mean) * lax.rsqrt(var + 1e-5)
    ln = ln * gamma_ref[...] + beta_ref[...]

    # Dropout(p=0.3) is identity in eval mode.
    # Final Linear, padded to 128 output lanes -> lane-dense store.
    out_ref[...] = (
        jnp.dot(ln, fcw_ref[...], preferred_element_type=jnp.float32)
        + fcb_ref[...]
    )


def _reorder_and_pad_gate_cols(w, H, Hp):
    """(K, 4H) in PyTorch gate order (i, f, g, o) -> (K, 4Hp) in order (i, f, o, g).

    Padded columns are zero so padded z/h/c lanes stay exactly zero in-kernel.
    """
    pad = ((0, 0), (0, Hp - H))
    wi = jnp.pad(w[:, 0 * H:1 * H], pad)
    wf = jnp.pad(w[:, 1 * H:2 * H], pad)
    wg = jnp.pad(w[:, 2 * H:3 * H], pad)
    wo = jnp.pad(w[:, 3 * H:4 * H], pad)
    return jnp.concatenate([wi, wf, wo, wg], axis=1)


@jax.jit
def regularized_lstm_forward(x, params):
    """x: (B, T, I) batch_first float32.  Returns (B, 2) logits."""
    B, T, I = x.shape
    H = params["whh1"].shape[0]
    Hp = _round_up(H, LANE)
    G = 4 * Hp
    f32 = jnp.float32

    # Batch tiling: TB capped at 64 (vreg pressure in the unrolled recurrence);
    # for B >= 16 pick TB so n_tiles >= 2 (v7x can shard the parallel axis
    # across both TensorCores).  Harmless on single-TC v5e/v6e.
    if B >= 16:
        TB = min(64, _round_up(_cdiv(B, 2), SUBLANE))
    else:
        TB = _round_up(B, SUBLANE)
    B_pad = _round_up(B, TB)
    n_tiles = B_pad // TB

    # ---- weight prep: gate reorder [i,f,o,g], hidden zero-padded to Hp lanes.
    wih1 = _reorder_and_pad_gate_cols(params["wih1"].astype(f32), H, Hp)       # (I, 4Hp)
    b1 = _reorder_and_pad_gate_cols(params["b1"].astype(f32), H, Hp)           # (1, 4Hp)
    whh1 = jnp.pad(_reorder_and_pad_gate_cols(params["whh1"].astype(f32), H, Hp),
                   ((0, Hp - H), (0, 0)))                                      # (Hp, 4Hp)
    wih2 = jnp.pad(_reorder_and_pad_gate_cols(params["wih2"].astype(f32), H, Hp),
                   ((0, Hp - H), (0, 0)))                                      # (Hp, 4Hp)
    whh2 = jnp.pad(_reorder_and_pad_gate_cols(params["whh2"].astype(f32), H, Hp),
                   ((0, Hp - H), (0, 0)))                                      # (Hp, 4Hp)
    b2 = _reorder_and_pad_gate_cols(params["b2"].astype(f32), H, Hp)           # (1, 4Hp)
    gamma = jnp.pad(params["gamma"].astype(f32), ((0, 0), (0, Hp - H)))        # (1, Hp)
    beta = jnp.pad(params["beta"].astype(f32), ((0, 0), (0, Hp - H)))          # (1, Hp)
    fcw = jnp.pad(params["fcw"].astype(f32),
                  ((0, Hp - H), (0, OUT_PAD - OUT_DIM)))                       # (Hp, OUT_PAD)
    fcb = jnp.pad(params["fcb"].astype(f32), ((0, 0), (0, OUT_PAD - OUT_DIM)))  # (1, OUT_PAD)

    # ---- layer-1 input projection hoisted to the wrapper (K = I is tiny; a K=4
    #      MXU pass inside the kernel would have near-zero utilization).
    x_tm = jnp.transpose(x.astype(f32), (1, 0, 2))                   # (T, B, I)
    x_tm = jnp.pad(x_tm, ((0, 0), (0, B_pad - B), (0, 0)))           # (T, B_pad, I)
    xp1 = jnp.einsum("tbi,ig->tbg", x_tm, wih1) + b1                 # (T, B_pad, 4Hp)
    xp1_tiles = (xp1.reshape(T, n_tiles, TB, G)
                 .transpose(1, 0, 2, 3)
                 .reshape(n_tiles, T * TB, G))                       # (n_tiles, T*TB, 4Hp)

    kernel_inputs = (xp1_tiles, whh1, wih2, whh2, b2, gamma, beta, fcw, fcb)

    vmem_resident = pl.BlockSpec(memory_space=pltpu.MemorySpace.VMEM)
    in_specs = [
        # per grid step: one (T*TB, 4Hp) projected-input slab (tile dim squeezed)
        pl.BlockSpec((None, T * TB, G), lambda b: (b, 0, 0)),
    ] + [vmem_resident] * (len(kernel_inputs) - 1)
    out_specs = pl.BlockSpec((TB, OUT_PAD), lambda b: (b, 0))

    # Scoped-VMEM budget from the lane-padded footprint: resident weights plus
    # double-buffered xp1 / out blocks; capped at ~75% of physical VMEM
    # (64 MiB/TC on v7x -> ~48 MiB cap; 128 MiB on v5e/v6e).
    weight_bytes = sum(int(a.size) * a.dtype.itemsize for a in kernel_inputs[1:])
    block_bytes = 4 * 2 * (T * TB * G + TB * OUT_PAD)
    footprint = weight_bytes + block_bytes
    try:
        cap = int(0.75 * pltpu.get_tpu_info().vmem_capacity_bytes)
    except Exception:  # conservative fallback if the query is unavailable
        cap = 48 << 20
    vmem_limit = int(min(cap, max(32 << 20, 2 * footprint)))

    out = pl.pallas_call(
        functools.partial(_lstm_head_kernel, seq_len=T, batch_tile=TB,
                          hidden=H, hidden_pad=Hp),
        out_shape=jax.ShapeDtypeStruct((B_pad, OUT_PAD), jnp.float32),
        grid=(n_tiles,),
        in_specs=in_specs,
        out_specs=out_specs,
        compiler_params=pltpu.CompilerParams(
            dimension_semantics=("parallel",),
            vmem_limit_bytes=vmem_limit,
        ),
    )(*kernel_inputs)

    return out[:B, :OUT_DIM]


def init_params(key, input_size, hidden_size):
    """Deterministic init mirroring the nn.Module's shapes.

    PyTorch stores W_ih: (4H, I), W_hh: (4H, H), fc.weight: (2, H); we store
    them pre-transposed for row-major right-multiplication, in PyTorch gate
    order (i, f, g, o).  The wrapper reorders/pads them for the kernel.
    """
    H = hidden_size
    I = input_size
    bound = 1.0 / jnp.sqrt(jnp.float32(H))
    keys = jax.random.split(key, 12)

    def u(k, shape):
        return jax.random.uniform(k, shape, jnp.float32, -bound, bound)

    return {
        # layer 1
        "wih1": u(keys[0], (I, 4 * H)),
        "whh1": u(keys[1], (H, 4 * H)),
        "b1": u(keys[2], (1, 4 * H)) + u(keys[3], (1, 4 * H)),   # b_ih + b_hh
        # layer 2
        "wih2": u(keys[4], (H, 4 * H)),
        "whh2": u(keys[5], (H, 4 * H)),
        "b2": u(keys[6], (1, 4 * H)) + u(keys[7], (1, 4 * H)),
        # LayerNorm(H): weight=1, bias=0 (PyTorch default)
        "gamma": jnp.ones((1, H), jnp.float32),
        "beta": jnp.zeros((1, H), jnp.float32),
        # fc: Linear(H, 2)
        "fcw": u(keys[8], (H, OUT_DIM)),
        "fcb": u(keys[9], (1, OUT_DIM)),
    }


def reference_forward(x, params):
    """Pure-JAX reference (same math, PyTorch semantics) for a sanity check."""
    B, T, I = x.shape
    H = params["whh1"].shape[0]

    def cell(xt, h, c, wih, whh, b):
        z = xt @ wih + h @ whh + b
        i_g = jax.nn.sigmoid(z[:, 0 * H:1 * H])
        f_g = jax.nn.sigmoid(z[:, 1 * H:2 * H])
        g_g = jnp.tanh(z[:, 2 * H:3 * H])
        o_g = jax.nn.sigmoid(z[:, 3 * H:4 * H])
        c = f_g * c + i_g * g_g
        h = o_g * jnp.tanh(c)
        return h, c

    h1 = c1 = h2 = c2 = jnp.zeros((B, H), jnp.float32)
    for t in range(T):
        h1, c1 = cell(x[:, t, :], h1, c1, params["wih1"], params["whh1"], params["b1"])
        h2, c2 = cell(h1, h2, c2, params["wih2"], params["whh2"], params["b2"])
    mean = jnp.mean(h2, axis=-1, keepdims=True)
    var = jnp.mean((h2 - mean) ** 2, axis=-1, keepdims=True)
    ln = (h2 - mean) / jnp.sqrt(var + 1e-5) * params["gamma"] + params["beta"]
    return ln @ params["fcw"] + params["fcb"]


if __name__ == "__main__":
    B, T, I, H = 2, 8, 4, 64   # hidden_size=64 is the module default

    key = jax.random.PRNGKey(0)
    k_x, k_p = jax.random.split(key)
    x = jax.random.normal(k_x, (B, T, I), jnp.float32)
    params = init_params(k_p, input_size=I, hidden_size=H)

    out = regularized_lstm_forward(x, params)
    out = jax.block_until_ready(out)

    ref = reference_forward(x, params)
    assert out.shape == (B, OUT_DIM)
    assert jnp.allclose(out, ref, atol=1e-4, rtol=1e-4), (out, ref)

    print("KERNEL_OK")
</pallas_src>

<mosaic_0001>
module attributes {stable_mosaic.version = 11 : i64} {
  func.func @_lstm_head_kernel(%arg0: i32, %arg1: memref<1x64x512xf32, #tpu.memory_space<vmem>>, %arg2: memref<128x512xf32, #tpu.memory_space<vmem>>, %arg3: memref<128x512xf32, #tpu.memory_space<vmem>>, %arg4: memref<128x512xf32, #tpu.memory_space<vmem>>, %arg5: memref<1x512xf32, #tpu.memory_space<vmem>>, %arg6: memref<1x128xf32, #tpu.memory_space<vmem>>, %arg7: memref<1x128xf32, #tpu.memory_space<vmem>>, %arg8: memref<128x128xf32, #tpu.memory_space<vmem>>, %arg9: memref<1x128xf32, #tpu.memory_space<vmem>>, %arg10: memref<8x128xf32, #tpu.memory_space<vmem>>) attributes {dimension_semantics = [#tpu.dimension_semantics<parallel>], iteration_bounds = array<i64: 1>, scalar_prefetch = 0 : i64, scratch_operands = 0 : i64, tpu.core_type = #tpu.core_type<tc>, window_params = [{transform_indices = @transform_0, window_bounds = array<i64: 1, 64, 512>}, {pipeline_mode = #tpu.pipeline_mode<synchronous>, transform_indices = @transform_1, window_bounds = array<i64: 128, 512>}, {pipeline_mode = #tpu.pipeline_mode<synchronous>, transform_indices = @transform_2, window_bounds = array<i64: 128, 512>}, {pipeline_mode = #tpu.pipeline_mode<synchronous>, transform_indices = @transform_3, window_bounds = array<i64: 128, 512>}, {pipeline_mode = #tpu.pipeline_mode<synchronous>, transform_indices = @transform_4, window_bounds = array<i64: 1, 512>}, {pipeline_mode = #tpu.pipeline_mode<synchronous>, transform_indices = @transform_5, window_bounds = array<i64: 1, 128>}, {pipeline_mode = #tpu.pipeline_mode<synchronous>, transform_indices = @transform_6, window_bounds = array<i64: 1, 128>}, {pipeline_mode = #tpu.pipeline_mode<synchronous>, transform_indices = @transform_7, window_bounds = array<i64: 128, 128>}, {pipeline_mode = #tpu.pipeline_mode<synchronous>, transform_indices = @transform_8, window_bounds = array<i64: 1, 128>}, {transform_indices = @transform_9, window_bounds = array<i64: 8, 128>}]} {
    %c0 = arith.constant 0 : index
    %c0_0 = arith.constant 0 : index
    %0 = vector.load %arg2[%c0, %c0_0] : memref<128x512xf32, #tpu.memory_space<vmem>>, vector<128x512xf32>
    %c0_1 = arith.constant 0 : index
    %c0_2 = arith.constant 0 : index
    %1 = vector.load %arg3[%c0_1, %c0_2] : memref<128x512xf32, #tpu.memory_space<vmem>>, vector<128x512xf32>
    %c0_3 = arith.constant 0 : index
    %c0_4 = arith.constant 0 : index
    %2 = vector.load %arg4[%c0_3, %c0_4] : memref<128x512xf32, #tpu.memory_space<vmem>>, vector<128x512xf32>
    %c0_5 = arith.constant 0 : index
    %c0_6 = arith.constant 0 : index
    %3 = vector.load %arg5[%c0_5, %c0_6] : memref<1x512xf32, #tpu.memory_space<vmem>>, vector<1x512xf32>
    %cst = arith.constant 0.000000e+00 : f32
    %4 = vector.broadcast %cst : f32 to vector<8x128xf32>
    %c0_7 = arith.constant 0 : index
    %c0_8 = arith.constant 0 : index
    %c0_9 = arith.constant 0 : index
    %5 = vector.load %arg1[%c0_7, %c0_8, %c0_9] : memref<1x64x512xf32, #tpu.memory_space<vmem>>, vector<1x8x512xf32>
    %6 = vector.shape_cast %5 : vector<1x8x512xf32> to vector<8x512xf32>
    %7 = vector.extract_strided_slice %6 {offsets = [0, 0], sizes = [8, 384], strides = [1, 1]} : vector<8x512xf32> to vector<8x384xf32>
    %8 = arith.negf %7 : vector<8x384xf32>
    %9 = math.exp %8 : vector<8x384xf32>
    %cst_10 = arith.constant 1.000000e+00 : f32
    %10 = vector.broadcast %cst_10 : f32 to vector<8x384xf32>
    %11 = arith.addf %10, %9 : vector<8x384xf32>
    %12 = arith.divf %10, %11 : vector<8x384xf32>
    %13 = vector.extract_strided_slice %6 {offsets = [0, 384], sizes = [8, 128], strides = [1, 1]} : vector<8x512xf32> to vector<8x128xf32>
    %14 = math.tanh %13 : vector<8x128xf32>
    %15 = vector.extract_strided_slice %12 {offsets = [0, 0], sizes = [8, 128], strides = [1, 1]} : vector<8x384xf32> to vector<8x128xf32>
    %16 = vector.extract_strided_slice %12 {offsets = [0, 128], sizes = [8, 128], strides = [1, 1]} : vector<8x384xf32> to vector<8x128xf32>
    %17 = vector.extract_strided_slice %12 {offsets = [0, 256], sizes = [8, 128], strides = [1, 1]} : vector<8x384xf32> to vector<8x128xf32>
    %18 = arith.mulf %16, %4 : vector<8x128xf32>
    %19 = arith.mulf %15, %14 : vector<8x128xf32>
    %20 = arith.addf %18, %19 : vector<8x128xf32>
    %21 = math.tanh %20 : vector<8x128xf32>
    %22 = arith.mulf %17, %21 : vector<8x128xf32>
    %c1_i32 = arith.constant 1 : i32
    %c8_i32 = arith.constant 8 : i32
    %23 = arith.muli %c1_i32, %c8_i32 : i32
    %24 = tpu.assume_multiple %23, 8 : i32
    %c0_11 = arith.constant 0 : index
    %25 = arith.index_cast %24 : i32 to index
    %c0_12 = arith.constant 0 : index
    %26 = vector.load %arg1[%c0_11, %25, %c0_12] : memref<1x64x512xf32, #tpu.memory_space<vmem>>, vector<1x8x512xf32>
    %27 = vector.shape_cast %26 : vector<1x8x512xf32> to vector<8x512xf32>
    %cst_13 = arith.constant dense<0.000000e+00> : vector<8x512xf32>
    %28 = tpu.matmul %22, %0, %cst_13 {dimension_numbers = #tpu.dot_dimension_numbers<[1], [0], [0], [1], [0, 0, 1, 1], [], []>} : vector<8x128xf32>, vector<128x512xf32>, vector<8x512xf32> -> vector<8x512xf32>
    %29 = arith.addf %27, %28 : vector<8x512xf32>
    %cst_14 = arith.constant dense<0.000000e+00> : vector<8x512xf32>
    %30 = tpu.matmul %22, %1, %cst_14 {dimension_numbers = #tpu.dot_dimension_numbers<[1], [0], [0], [1], [0, 0, 1, 1], [], []>} : vector<8x128xf32>, vector<128x512xf32>, vector<8x512xf32> -> vector<8x512xf32>
    %31 = vector.broadcast %3 : vector<1x512xf32> to vector<8x512xf32>
    %32 = arith.addf %31, %30 : vector<8x512xf32>
    %cst_15 = arith.constant dense<0.000000e+00> : vector<8x512xf32>
    %33 = tpu.matmul %4, %2, %cst_15 {dimension_numbers = #tpu.dot_dimension_numbers<[1], [0], [0], [1], [0, 0, 1, 1], [], []>} : vector<8x128xf32>, vector<128x512xf32>, vector<8x512xf32> -> vector<8x512xf32>
    %34 = arith.addf %32, %33 : vector<8x512xf32>
    %35 = vector.extract_strided_slice %29 {offsets = [0, 0], sizes = [8, 384], strides = [1, 1]} : vector<8x512xf32> to vector<8x384xf32>
    %36 = arith.negf %35 : vector<8x384xf32>
    %37 = math.exp %36 : vector<8x384xf32>
    %cst_16 = arith.constant 1.000000e+00 : f32
    %38 = vector.broadcast %cst_16 : f32 to vector<8x384xf32>
    %39 = arith.addf %38, %37 : vector<8x384xf32>
    %40 = arith.divf %38, %39 : vector<8x384xf32>
    %41 = vector.extract_strided_slice %29 {offsets = [0, 384], sizes = [8, 128], strides = [1, 1]} : vector<8x512xf32> to vector<8x128xf32>
    %42 = math.tanh %41 : vector<8x128xf32>
    %43 = vector.extract_strided_slice %40 {offsets = [0, 0], sizes = [8, 128], strides = [1, 1]} : vector<8x384xf32> to vector<8x128xf32>
    %44 = vector.extract_strided_slice %40 {offsets = [0, 128], sizes = [8, 128], strides = [1, 1]} : vector<8x384xf32> to vector<8x128xf32>
    %45 = vector.extract_strided_slice %40 {offsets = [0, 256], sizes = [8, 128], strides = [1, 1]} : vector<8x384xf32> to vector<8x128xf32>
    %46 = arith.mulf %44, %20 : vector<8x128xf32>
    %47 = arith.mulf %43, %42 : vector<8x128xf32>
    %48 = arith.addf %46, %47 : vector<8x128xf32>
    %49 = math.tanh %48 : vector<8x128xf32>
    %50 = arith.mulf %45, %49 : vector<8x128xf32>
    %51 = vector.extract_strided_slice %34 {offsets = [0, 0], sizes = [8, 384], strides = [1, 1]} : vector<8x512xf32> to vector<8x384xf32>
    %52 = arith.negf %51 : vector<8x384xf32>
    %53 = math.exp %52 : vector<8x384xf32>
    %cst_17 = arith.constant 1.000000e+00 : f32
    %54 = vector.broadcast %cst_17 : f32 to vector<8x384xf32>
    %55 = arith.addf %54, %53 : vector<8x384xf32>
    %56 = arith.divf %54, %55 : vector<8x384xf32>
    %57 = vector.extract_strided_slice %34 {offsets = [0, 384], sizes = [8, 128], strides = [1, 1]} : vector<8x512xf32> to vector<8x128xf32>
    %58 = math.tanh %57 : vector<8x128xf32>
    %59 = vector.extract_strided_slice %56 {offsets = [0, 0], sizes = [8, 128], strides = [1, 1]} : vector<8x384xf32> to vector<8x128xf32>
    %60 = vector.extract_strided_slice %56 {offsets = [0, 128], sizes = [8, 128], strides = [1, 1]} : vector<8x384xf32> to vector<8x128xf32>
    %61 = vector.extract_strided_slice %56 {offsets = [0, 256], sizes = [8, 128], strides = [1, 1]} : vector<8x384xf32> to vector<8x128xf32>
    %62 = arith.mulf %60, %4 : vector<8x128xf32>
    %63 = arith.mulf %59, %58 : vector<8x128xf32>
    %64 = arith.addf %62, %63 : vector<8x128xf32>
    %65 = math.tanh %64 : vector<8x128xf32>
    %66 = arith.mulf %61, %65 : vector<8x128xf32>
    %c2_i32 = arith.constant 2 : i32
    %c8_i32_18 = arith.constant 8 : i32
    %67 = arith.muli %c2_i32, %c8_i32_18 : i32
    %68 = tpu.assume_multiple %67, 8 : i32
    %c0_19 = arith.constant 0 : index
    %69 = arith.index_cast %68 : i32 to index
    %c0_20 = arith.constant 0 : index
    %70 = vector.load %arg1[%c0_19, %69, %c0_20] : memref<1x64x512xf32, #tpu.memory_space<vmem>>, vector<1x8x512xf32>
    %71 = vector.shape_cast %70 : vector<1x8x512xf32> to vector<8x512xf32>
    %cst_21 = arith.constant dense<0.000000e+00> : vector<8x512xf32>
    %72 = tpu.matmul %50, %0, %cst_21 {dimension_numbers = #tpu.dot_dimension_numbers<[1], [0], [0], [1], [0, 0, 1, 1], [], []>} : vector<8x128xf32>, vector<128x512xf32>, vector<8x512xf32> -> vector<8x512xf32>
    %73 = arith.addf %71, %72 : vector<8x512xf32>
    %cst_22 = arith.constant dense<0.000000e+00> : vector<8x512xf32>
    %74 = tpu.matmul %50, %1, %cst_22 {dimension_numbers = #tpu.dot_dimension_numbers<[1], [0], [0], [1], [0, 0, 1, 1], [], []>} : vector<8x128xf32>, vector<128x512xf32>, vector<8x512xf32> -> vector<8x512xf32>
    %75 = vector.broadcast %3 : vector<1x512xf32> to vector<8x512xf32>
    %76 = arith.addf %75, %74 : vector<8x512xf32>
    %cst_23 = arith.constant dense<0.000000e+00> : vector<8x512xf32>
    %77 = tpu.matmul %66, %2, %cst_23 {dimension_numbers = #tpu.dot_dimension_numbers<[1], [0], [0], [1], [0, 0, 1, 1], [], []>} : vector<8x128xf32>, vector<128x512xf32>, vector<8x512xf32> -> vector<8x512xf32>
    %78 = arith.addf %76, %77 : vector<8x512xf32>
    %79 = vector.extract_strided_slice %73 {offsets = [0, 0], sizes = [8, 384], strides = [1, 1]} : vector<8x512xf32> to vector<8x384xf32>
    %80 = arith.negf %79 : vector<8x384xf32>
    %81 = math.exp %80 : vector<8x384xf32>
    %cst_24 = arith.constant 1.000000e+00 : f32
    %82 = vector.broadcast %cst_24 : f32 to vector<8x384xf32>
    %83 = arith.addf %82, %81 : vector<8x384xf32>
    %84 = arith.divf %82, %83 : vector<8x384xf32>
    %85 = vector.extract_strided_slice %73 {offsets = [0, 384], sizes = [8, 128], strides = [1, 1]} : vector<8x512xf32> to vector<8x128xf32>
    %86 = math.tanh %85 : vector<8x128xf32>
    %87 = vector.extract_strided_slice %84 {offsets = [0, 0], sizes = [8, 128], strides = [1, 1]} : vector<8x384xf32> to vector<8x128xf32>
    %88 = vector.extract_strided_slice %84 {offsets = [0, 128], sizes = [8, 128], strides = [1, 1]} : vector<8x384xf32> to vector<8x128xf32>
    %89 = vector.extract_strided_slice %84 {offsets = [0, 256], sizes = [8, 128], strides = [1, 1]} : vector<8x384xf32> to vector<8x128xf32>
    %90 = arith.mulf %88, %48 : vector<8x128xf32>
    %91 = arith.mulf %87, %86 : vector<8x128xf32>
    %92 = arith.addf %90, %91 : vector<8x128xf32>
    %93 = math.tanh %92 : vector<8x128xf32>
    %94 = arith.mulf %89, %93 : vector<8x128xf32>
    %95 = vector.extract_strided_slice %78 {offsets = [0, 0], sizes = [8, 384], strides = [1, 1]} : vector<8x512xf32> to vector<8x384xf32>
    %96 = arith.negf %95 : vector<8x384xf32>
    %97 = math.exp %96 : vector<8x384xf32>
    %cst_25 = arith.constant 1.000000e+00 : f32
    %98 = vector.broadcast %cst_25 : f32 to vector<8x384xf32>
    %99 = arith.addf %98, %97 : vector<8x384xf32>
    %100 = arith.divf %98, %99 : vector<8x384xf32>
    %101 = vector.extract_strided_slice %78 {offsets = [0, 384], sizes = [8, 128], strides = [1, 1]} : vector<8x512xf32> to vector<8x128xf32>
    %102 = math.tanh %101 : vector<8x128xf32>
    %103 = vector.extract_strided_slice %100 {offsets = [0, 0], sizes = [8, 128], strides = [1, 1]} : vector<8x384xf32> to vector<8x128xf32>
    %104 = vector.extract_strided_slice %100 {offsets = [0, 128], sizes = [8, 128], strides = [1, 1]} : vector<8x384xf32> to vector<8x128xf32>
    %105 = vector.extract_strided_slice %100 {offsets = [0, 256], sizes = [8, 128], strides = [1, 1]} : vector<8x384xf32> to vector<8x128xf32>
    %106 = arith.mulf %104, %64 : vector<8x128xf32>
    %107 = arith.mulf %103, %102 : vector<8x128xf32>
    %108 = arith.addf %106, %107 : vector<8x128xf32>
    %109 = math.tanh %108 : vector<8x128xf32>
    %110 = arith.mulf %105, %109 : vector<8x128xf32>
    %c3_i32 = arith.constant 3 : i32
    %c8_i32_26 = arith.constant 8 : i32
    %111 = arith.muli %c3_i32, %c8_i32_26 : i32
    %112 = tpu.assume_multiple %111, 8 : i32
    %c0_27 = arith.constant 0 : index
    %113 = arith.index_cast %112 : i32 to index
    %c0_28 = arith.constant 0 : index
    %114 = vector.load %arg1[%c0_27, %113, %c0_28] : memref<1x64x512xf32, #tpu.memory_space<vmem>>, vector<1x8x512xf32>
    %115 = vector.shape_cast %114 : vector<1x8x512xf32> to vector<8x512xf32>
    %cst_29 = arith.constant dense<0.000000e+00> : vector<8x512xf32>
    %116 = tpu.matmul %94, %0, %cst_29 {dimension_numbers = #tpu.dot_dimension_numbers<[1], [0], [0], [1], [0, 0, 1, 1], [], []>} : vector<8x128xf32>, vector<128x512xf32>, vector<8x512xf32> -> vector<8x512xf32>
    %117 = arith.addf %115, %116 : vector<8x512xf32>
    %cst_30 = arith.constant dense<0.000000e+00> : vector<8x512xf32>
    %118 = tpu.matmul %94, %1, %cst_30 {dimension_numbers = #tpu.dot_dimension_numbers<[1], [0], [0], [1], [0, 0, 1, 1], [], []>} : vector<8x128xf32>, vector<128x512xf32>, vector<8x512xf32> -> vector<8x512xf32>
    %119 = vector.broadcast %3 : vector<1x512xf32> to vector<8x512xf32>
    %120 = arith.addf %119, %118 : vector<8x512xf32>
    %cst_31 = arith.constant dense<0.000000e+00> : vector<8x512xf32>
    %121 = tpu.matmul %110, %2, %cst_31 {dimension_numbers = #tpu.dot_dimension_numbers<[1], [0], [0], [1], [0, 0, 1, 1], [], []>} : vector<8x128xf32>, vector<128x512xf32>, vector<8x512xf32> -> vector<8x512xf32>
    %122 = arith.addf %120, %121 : vector<8x512xf32>
    %123 = vector.extract_strided_slice %117 {offsets = [0, 0], sizes = [8, 384], strides = [1, 1]} : vector<8x512xf32> to vector<8x384xf32>
    %124 = arith.negf %123 : vector<8x384xf32>
    %125 = math.exp %124 : vector<8x384xf32>
    %cst_32 = arith.constant 1.000000e+00 : f32
    %126 = vector.broadcast %cst_32 : f32 to vector<8x384xf32>
    %127 = arith.addf %126, %125 : vector<8x384xf32>
    %128 = arith.divf %126, %127 : vector<8x384xf32>
    %129 = vector.extract_strided_slice %117 {offsets = [0, 384], sizes = [8, 128], strides = [1, 1]} : vector<8x512xf32> to vector<8x128xf32>
    %130 = math.tanh %129 : vector<8x128xf32>
    %131 = vector.extract_strided_slice %128 {offsets = [0, 0], sizes = [8, 128], strides = [1, 1]} : vector<8x384xf32> to vector<8x128xf32>
    %132 = vector.extract_strided_slice %128 {offsets = [0, 128], sizes = [8, 128], strides = [1, 1]} : vector<8x384xf32> to vector<8x128xf32>
    %133 = vector.extract_strided_slice %128 {offsets = [0, 256], sizes = [8, 128], strides = [1, 1]} : vector<8x384xf32> to vector<8x128xf32>
    %134 = arith.mulf %132, %92 : vector<8x128xf32>
    %135 = arith.mulf %131, %130 : vector<8x128xf32>
    %136 = arith.addf %134, %135 : vector<8x128xf32>
    %137 = math.tanh %136 : vector<8x128xf32>
    %138 = arith.mulf %133, %137 : vector<8x128xf32>
    %139 = vector.extract_strided_slice %122 {offsets = [0, 0], sizes = [8, 384], strides = [1, 1]} : vector<8x512xf32> to vector<8x384xf32>
    %140 = arith.negf %139 : vector<8x384xf32>
    %141 = math.exp %140 : vector<8x384xf32>
    %cst_33 = arith.constant 1.000000e+00 : f32
    %142 = vector.broadcast %cst_33 : f32 to vector<8x384xf32>
    %143 = arith.addf %142, %141 : vector<8x384xf32>
    %144 = arith.divf %142, %143 : vector<8x384xf32>
    %145 = vector.extract_strided_slice %122 {offsets = [0, 384], sizes = [8, 128], strides = [1, 1]} : vector<8x512xf32> to vector<8x128xf32>
    %146 = math.tanh %145 : vector<8x128xf32>
    %147 = vector.extract_strided_slice %144 {offsets = [0, 0], sizes = [8, 128], strides = [1, 1]} : vector<8x384xf32> to vector<8x128xf32>
    %148 = vector.extract_strided_slice %144 {offsets = [0, 128], sizes = [8, 128], strides = [1, 1]} : vector<8x384xf32> to vector<8x128xf32>
    %149 = vector.extract_strided_slice %144 {offsets = [0, 256], sizes = [8, 128], strides = [1, 1]} : vector<8x384xf32> to vector<8x128xf32>
    %150 = arith.mulf %148, %108 : vector<8x128xf32>
    %151 = arith.mulf %147, %146 : vector<8x128xf32>
    %152 = arith.addf %150, %151 : vector<8x128xf32>
    %153 = math.tanh %152 : vector<8x128xf32>
    %154 = arith.mulf %149, %153 : vector<8x128xf32>
    %c4_i32 = arith.constant 4 : i32
    %c8_i32_34 = arith.constant 8 : i32
    %155 = arith.muli %c4_i32, %c8_i32_34 : i32
    %156 = tpu.assume_multiple %155, 8 : i32
    %c0_35 = arith.constant 0 : index
    %157 = arith.index_cast %156 : i32 to index
    %c0_36 = arith.constant 0 : index
    %158 = vector.load %arg1[%c0_35, %157, %c0_36] : memref<1x64x512xf32, #tpu.memory_space<vmem>>, vector<1x8x512xf32>
    %159 = vector.shape_cast %158 : vector<1x8x512xf32> to vector<8x512xf32>
    %cst_37 = arith.constant dense<0.000000e+00> : vector<8x512xf32>
    %160 = tpu.matmul %138, %0, %cst_37 {dimension_numbers = #tpu.dot_dimension_numbers<[1], [0], [0], [1], [0, 0, 1, 1], [], []>} : vector<8x128xf32>, vector<128x512xf32>, vector<8x512xf32> -> vector<8x512xf32>
    %161 = arith.addf %159, %160 : vector<8x512xf32>
    %cst_38 = arith.constant dense<0.000000e+00> : vector<8x512xf32>
    %162 = tpu.matmul %138, %1, %cst_38 {dimension_numbers = #tpu.dot_dimension_numbers<[1], [0], [0], [1], [0, 0, 1, 1], [], []>} : vector<8x128xf32>, vector<128x512xf32>, vector<8x512xf32> -> vector<8x512xf32>
    %163 = vector.broadcast %3 : vector<1x512xf32> to vector<8x512xf32>
    %164 = arith.addf %163, %162 : vector<8x512xf32>
    %cst_39 = arith.constant dense<0.000000e+00> : vector<8x512xf32>
    %165 = tpu.matmul %154, %2, %cst_39 {dimension_numbers = #tpu.dot_dimension_numbers<[1], [0], [0], [1], [0, 0, 1, 1], [], []>} : vector<8x128xf32>, vector<128x512xf32>, vector<8x512xf32> -> vector<8x512xf32>
    %166 = arith.addf %164, %165 : vector<8x512xf32>
    %167 = vector.extract_strided_slice %161 {offsets = [0, 0], sizes = [8, 384], strides = [1, 1]} : vector<8x512xf32> to vector<8x384xf32>
    %168 = arith.negf %167 : vector<8x384xf32>
    %169 = math.exp %168 : vector<8x384xf32>
    %cst_40 = arith.constant 1.000000e+00 : f32
    %170 = vector.broadcast %cst_40 : f32 to vector<8x384xf32>
    %171 = arith.addf %170, %169 : vector<8x384xf32>
    %172 = arith.divf %170, %171 : vector<8x384xf32>
    %173 = vector.extract_strided_slice %161 {offsets = [0, 384], sizes = [8, 128], strides = [1, 1]} : vector<8x512xf32> to vector<8x128xf32>
    %174 = math.tanh %173 : vector<8x128xf32>
    %175 = vector.extract_strided_slice %172 {offsets = [0, 0], sizes = [8, 128], strides = [1, 1]} : vector<8x384xf32> to vector<8x128xf32>
    %176 = vector.extract_strided_slice %172 {offsets = [0, 128], sizes = [8, 128], strides = [1, 1]} : vector<8x384xf32> to vector<8x128xf32>
    %177 = vector.extract_strided_slice %172 {offsets = [0, 256], sizes = [8, 128], strides = [1, 1]} : vector<8x384xf32> to vector<8x128xf32>
    %178 = arith.mulf %176, %136 : vector<8x128xf32>
    %179 = arith.mulf %175, %174 : vector<8x128xf32>
    %180 = arith.addf %178, %179 : vector<8x128xf32>
    %181 = math.tanh %180 : vector<8x128xf32>
    %182 = arith.mulf %177, %181 : vector<8x128xf32>
    %183 = vector.extract_strided_slice %166 {offsets = [0, 0], sizes = [8, 384], strides = [1, 1]} : vector<8x512xf32> to vector<8x384xf32>
    %184 = arith.negf %183 : vector<8x384xf32>
    %185 = math.exp %184 : vector<8x384xf32>
    %cst_41 = arith.constant 1.000000e+00 : f32
    %186 = vector.broadcast %cst_41 : f32 to vector<8x384xf32>
    %187 = arith.addf %186, %185 : vector<8x384xf32>
    %188 = arith.divf %186, %187 : vector<8x384xf32>
    %189 = vector.extract_strided_slice %166 {offsets = [0, 384], sizes = [8, 128], strides = [1, 1]} : vector<8x512xf32> to vector<8x128xf32>
    %190 = math.tanh %189 : vector<8x128xf32>
    %191 = vector.extract_strided_slice %188 {offsets = [0, 0], sizes = [8, 128], strides = [1, 1]} : vector<8x384xf32> to vector<8x128xf32>
    %192 = vector.extract_strided_slice %188 {offsets = [0, 128], sizes = [8, 128], strides = [1, 1]} : vector<8x384xf32> to vector<8x128xf32>
    %193 = vector.extract_strided_slice %188 {offsets = [0, 256], sizes = [8, 128], strides = [1, 1]} : vector<8x384xf32> to vector<8x128xf32>
    %194 = arith.mulf %192, %152 : vector<8x128xf32>
    %195 = arith.mulf %191, %190 : vector<8x128xf32>
    %196 = arith.addf %194, %195 : vector<8x128xf32>
    %197 = math.tanh %196 : vector<8x128xf32>
    %198 = arith.mulf %193, %197 : vector<8x128xf32>
    %c5_i32 = arith.constant 5 : i32
    %c8_i32_42 = arith.constant 8 : i32
    %199 = arith.muli %c5_i32, %c8_i32_42 : i32
    %200 = tpu.assume_multiple %199, 8 : i32
    %c0_43 = arith.constant 0 : index
    %201 = arith.index_cast %200 : i32 to index
    %c0_44 = arith.constant 0 : index
    %202 = vector.load %arg1[%c0_43, %201, %c0_44] : memref<1x64x512xf32, #tpu.memory_space<vmem>>, vector<1x8x512xf32>
    %203 = vector.shape_cast %202 : vector<1x8x512xf32> to vector<8x512xf32>
    %cst_45 = arith.constant dense<0.000000e+00> : vector<8x512xf32>
    %204 = tpu.matmul %182, %0, %cst_45 {dimension_numbers = #tpu.dot_dimension_numbers<[1], [0], [0], [1], [0, 0, 1, 1], [], []>} : vector<8x128xf32>, vector<128x512xf32>, vector<8x512xf32> -> vector<8x512xf32>
    %205 = arith.addf %203, %204 : vector<8x512xf32>
    %cst_46 = arith.constant dense<0.000000e+00> : vector<8x512xf32>
    %206 = tpu.matmul %182, %1, %cst_46 {dimension_numbers = #tpu.dot_dimension_numbers<[1], [0], [0], [1], [0, 0, 1, 1], [], []>} : vector<8x128xf32>, vector<128x512xf32>, vector<8x512xf32> -> vector<8x512xf32>
    %207 = vector.broadcast %3 : vector<1x512xf32> to vector<8x512xf32>
    %208 = arith.addf %207, %206 : vector<8x512xf32>
    %cst_47 = arith.constant dense<0.000000e+00> : vector<8x512xf32>
    %209 = tpu.matmul %198, %2, %cst_47 {dimension_numbers = #tpu.dot_dimension_numbers<[1], [0], [0], [1], [0, 0, 1, 1], [], []>} : vector<8x128xf32>, vector<128x512xf32>, vector<8x512xf32> -> vector<8x512xf32>
    %210 = arith.addf %208, %209 : vector<8x512xf32>
    %211 = vector.extract_strided_slice %205 {offsets = [0, 0], sizes = [8, 384], strides = [1, 1]} : vector<8x512xf32> to vector<8x384xf32>
    %212 = arith.negf %211 : vector<8x384xf32>
    %213 = math.exp %212 : vector<8x384xf32>
    %cst_48 = arith.constant 1.000000e+00 : f32
    %214 = vector.broadcast %cst_48 : f32 to vector<8x384xf32>
    %215 = arith.addf %214, %213 : vector<8x384xf32>
    %216 = arith.divf %214, %215 : vector<8x384xf32>
    %217 = vector.extract_strided_slice %205 {offsets = [0, 384], sizes = [8, 128], strides = [1, 1]} : vector<8x512xf32> to vector<8x128xf32>
    %218 = math.tanh %217 : vector<8x128xf32>
    %219 = vector.extract_strided_slice %216 {offsets = [0, 0], sizes = [8, 128], strides = [1, 1]} : vector<8x384xf32> to vector<8x128xf32>
    %220 = vector.extract_strided_slice %216 {offsets = [0, 128], sizes = [8, 128], strides = [1, 1]} : vector<8x384xf32> to vector<8x128xf32>
    %221 = vector.extract_strided_slice %216 {offsets = [0, 256], sizes = [8, 128], strides = [1, 1]} : vector<8x384xf32> to vector<8x128xf32>
    %222 = arith.mulf %220, %180 : vector<8x128xf32>
    %223 = arith.mulf %219, %218 : vector<8x128xf32>
    %224 = arith.addf %222, %223 : vector<8x128xf32>
    %225 = math.tanh %224 : vector<8x128xf32>
    %226 = arith.mulf %221, %225 : vector<8x128xf32>
    %227 = vector.extract_strided_slice %210 {offsets = [0, 0], sizes = [8, 384], strides = [1, 1]} : vector<8x512xf32> to vector<8x384xf32>
    %228 = arith.negf %227 : vector<8x384xf32>
    %229 = math.exp %228 : vector<8x384xf32>
    %cst_49 = arith.constant 1.000000e+00 : f32
    %230 = vector.broadcast %cst_49 : f32 to vector<8x384xf32>
    %231 = arith.addf %230, %229 : vector<8x384xf32>
    %232 = arith.divf %230, %231 : vector<8x384xf32>
    %233 = vector.extract_strided_slice %210 {offsets = [0, 384], sizes = [8, 128], strides = [1, 1]} : vector<8x512xf32> to vector<8x128xf32>
    %234 = math.tanh %233 : vector<8x128xf32>
    %235 = vector.extract_strided_slice %232 {offsets = [0, 0], sizes = [8, 128], strides = [1, 1]} : vector<8x384xf32> to vector<8x128xf32>
    %236 = vector.extract_strided_slice %232 {offsets = [0, 128], sizes = [8, 128], strides = [1, 1]} : vector<8x384xf32> to vector<8x128xf32>
    %237 = vector.extract_strided_slice %232 {offsets = [0, 256], sizes = [8, 128], strides = [1, 1]} : vector<8x384xf32> to vector<8x128xf32>
    %238 = arith.mulf %236, %196 : vector<8x128xf32>
    %239 = arith.mulf %235, %234 : vector<8x128xf32>
    %240 = arith.addf %238, %239 : vector<8x128xf32>
    %241 = math.tanh %240 : vector<8x128xf32>
    %242 = arith.mulf %237, %241 : vector<8x128xf32>
    %c6_i32 = arith.constant 6 : i32
    %c8_i32_50 = arith.constant 8 : i32
    %243 = arith.muli %c6_i32, %c8_i32_50 : i32
    %244 = tpu.assume_multiple %243, 8 : i32
    %c0_51 = arith.constant 0 : index
    %245 = arith.index_cast %244 : i32 to index
    %c0_52 = arith.constant 0 : index
    %246 = vector.load %arg1[%c0_51, %245, %c0_52] : memref<1x64x512xf32, #tpu.memory_space<vmem>>, vector<1x8x512xf32>
    %247 = vector.shape_cast %246 : vector<1x8x512xf32> to vector<8x512xf32>
    %cst_53 = arith.constant dense<0.000000e+00> : vector<8x512xf32>
    %248 = tpu.matmul %226, %0, %cst_53 {dimension_numbers = #tpu.dot_dimension_numbers<[1], [0], [0], [1], [0, 0, 1, 1], [], []>} : vector<8x128xf32>, vector<128x512xf32>, vector<8x512xf32> -> vector<8x512xf32>
    %249 = arith.addf %247, %248 : vector<8x512xf32>
    %cst_54 = arith.constant dense<0.000000e+00> : vector<8x512xf32>
    %250 = tpu.matmul %226, %1, %cst_54 {dimension_numbers = #tpu.dot_dimension_numbers<[1], [0], [0], [1], [0, 0, 1, 1], [], []>} : vector<8x128xf32>, vector<128x512xf32>, vector<8x512xf32> -> vector<8x512xf32>
    %251 = vector.broadcast %3 : vector<1x512xf32> to vector<8x512xf32>
    %252 = arith.addf %251, %250 : vector<8x512xf32>
    %cst_55 = arith.constant dense<0.000000e+00> : vector<8x512xf32>
    %253 = tpu.matmul %242, %2, %cst_55 {dimension_numbers = #tpu.dot_dimension_numbers<[1], [0], [0], [1], [0, 0, 1, 1], [], []>} : vector<8x128xf32>, vector<128x512xf32>, vector<8x512xf32> -> vector<8x512xf32>
    %254 = arith.addf %252, %253 : vector<8x512xf32>
    %255 = vector.extract_strided_slice %249 {offsets = [0, 0], sizes = [8, 384], strides = [1, 1]} : vector<8x512xf32> to vector<8x384xf32>
    %256 = arith.negf %255 : vector<8x384xf32>
    %257 = math.exp %256 : vector<8x384xf32>
    %cst_56 = arith.constant 1.000000e+00 : f32
    %258 = vector.broadcast %cst_56 : f32 to vector<8x384xf32>
    %259 = arith.addf %258, %257 : vector<8x384xf32>
    %260 = arith.divf %258, %259 : vector<8x384xf32>
    %261 = vector.extract_strided_slice %249 {offsets = [0, 384], sizes = [8, 128], strides = [1, 1]} : vector<8x512xf32> to vector<8x128xf32>
    %262 = math.tanh %261 : vector<8x128xf32>
    %263 = vector.extract_strided_slice %260 {offsets = [0, 0], sizes = [8, 128], strides = [1, 1]} : vector<8x384xf32> to vector<8x128xf32>
    %264 = vector.extract_strided_slice %260 {offsets = [0, 128], sizes = [8, 128], strides = [1, 1]} : vector<8x384xf32> to vector<8x128xf32>
    %265 = vector.extract_strided_slice %260 {offsets = [0, 256], sizes = [8, 128], strides = [1, 1]} : vector<8x384xf32> to vector<8x128xf32>
    %266 = arith.mulf %264, %224 : vector<8x128xf32>
    %267 = arith.mulf %263, %262 : vector<8x128xf32>
    %268 = arith.addf %266, %267 : vector<8x128xf32>
    %269 = math.tanh %268 : vector<8x128xf32>
    %270 = arith.mulf %265, %269 : vector<8x128xf32>
    %271 = vector.extract_strided_slice %254 {offsets = [0, 0], sizes = [8, 384], strides = [1, 1]} : vector<8x512xf32> to vector<8x384xf32>
    %272 = arith.negf %271 : vector<8x384xf32>
    %273 = math.exp %272 : vector<8x384xf32>
    %cst_57 = arith.constant 1.000000e+00 : f32
    %274 = vector.broadcast %cst_57 : f32 to vector<8x384xf32>
    %275 = arith.addf %274, %273 : vector<8x384xf32>
    %276 = arith.divf %274, %275 : vector<8x384xf32>
    %277 = vector.extract_strided_slice %254 {offsets = [0, 384], sizes = [8, 128], strides = [1, 1]} : vector<8x512xf32> to vector<8x128xf32>
    %278 = math.tanh %277 : vector<8x128xf32>
    %279 = vector.extract_strided_slice %276 {offsets = [0, 0], sizes = [8, 128], strides = [1, 1]} : vector<8x384xf32> to vector<8x128xf32>
    %280 = vector.extract_strided_slice %276 {offsets = [0, 128], sizes = [8, 128], strides = [1, 1]} : vector<8x384xf32> to vector<8x128xf32>
    %281 = vector.extract_strided_slice %276 {offsets = [0, 256], sizes = [8, 128], strides = [1, 1]} : vector<8x384xf32> to vector<8x128xf32>
    %282 = arith.mulf %280, %240 : vector<8x128xf32>
    %283 = arith.mulf %279, %278 : vector<8x128xf32>
    %284 = arith.addf %282, %283 : vector<8x128xf32>
    %285 = math.tanh %284 : vector<8x128xf32>
    %286 = arith.mulf %281, %285 : vector<8x128xf32>
    %c7_i32 = arith.constant 7 : i32
    %c8_i32_58 = arith.constant 8 : i32
    %287 = arith.muli %c7_i32, %c8_i32_58 : i32
    %288 = tpu.assume_multiple %287, 8 : i32
    %c0_59 = arith.constant 0 : index
    %289 = arith.index_cast %288 : i32 to index
    %c0_60 = arith.constant 0 : index
    %290 = vector.load %arg1[%c0_59, %289, %c0_60] : memref<1x64x512xf32, #tpu.memory_space<vmem>>, vector<1x8x512xf32>
    %291 = vector.shape_cast %290 : vector<1x8x512xf32> to vector<8x512xf32>
    %cst_61 = arith.constant dense<0.000000e+00> : vector<8x512xf32>
    %292 = tpu.matmul %270, %0, %cst_61 {dimension_numbers = #tpu.dot_dimension_numbers<[1], [0], [0], [1], [0, 0, 1, 1], [], []>} : vector<8x128xf32>, vector<128x512xf32>, vector<8x512xf32> -> vector<8x512xf32>
    %293 = arith.addf %291, %292 : vector<8x512xf32>
    %cst_62 = arith.constant dense<0.000000e+00> : vector<8x512xf32>
    %294 = tpu.matmul %270, %1, %cst_62 {dimension_numbers = #tpu.dot_dimension_numbers<[1], [0], [0], [1], [0, 0, 1, 1], [], []>} : vector<8x128xf32>, vector<128x512xf32>, vector<8x512xf32> -> vector<8x512xf32>
    %295 = vector.broadcast %3 : vector<1x512xf32> to vector<8x512xf32>
    %296 = arith.addf %295, %294 : vector<8x512xf32>
    %cst_63 = arith.constant dense<0.000000e+00> : vector<8x512xf32>
    %297 = tpu.matmul %286, %2, %cst_63 {dimension_numbers = #tpu.dot_dimension_numbers<[1], [0], [0], [1], [0, 0, 1, 1], [], []>} : vector<8x128xf32>, vector<128x512xf32>, vector<8x512xf32> -> vector<8x512xf32>
    %298 = arith.addf %296, %297 : vector<8x512xf32>
    %299 = vector.extract_strided_slice %293 {offsets = [0, 0], sizes = [8, 384], strides = [1, 1]} : vector<8x512xf32> to vector<8x384xf32>
    %300 = arith.negf %299 : vector<8x384xf32>
    %301 = math.exp %300 : vector<8x384xf32>
    %cst_64 = arith.constant 1.000000e+00 : f32
    %302 = vector.broadcast %cst_64 : f32 to vector<8x384xf32>
    %303 = arith.addf %302, %301 : vector<8x384xf32>
    %304 = arith.divf %302, %303 : vector<8x384xf32>
    %305 = vector.extract_strided_slice %293 {offsets = [0, 384], sizes = [8, 128], strides = [1, 1]} : vector<8x512xf32> to vector<8x128xf32>
    %306 = math.tanh %305 : vector<8x128xf32>
    %307 = vector.extract_strided_slice %304 {offsets = [0, 0], sizes = [8, 128], strides = [1, 1]} : vector<8x384xf32> to vector<8x128xf32>
    %308 = vector.extract_strided_slice %304 {offsets = [0, 128], sizes = [8, 128], strides = [1, 1]} : vector<8x384xf32> to vector<8x128xf32>
    %309 = vector.extract_strided_slice %304 {offsets = [0, 256], sizes = [8, 128], strides = [1, 1]} : vector<8x384xf32> to vector<8x128xf32>
    %310 = arith.mulf %308, %268 : vector<8x128xf32>
    %311 = arith.mulf %307, %306 : vector<8x128xf32>
    %312 = arith.addf %310, %311 : vector<8x128xf32>
    %313 = math.tanh %312 : vector<8x128xf32>
    %314 = arith.mulf %309, %313 : vector<8x128xf32>
    %315 = vector.extract_strided_slice %298 {offsets = [0, 0], sizes = [8, 384], strides = [1, 1]} : vector<8x512xf32> to vector<8x384xf32>
    %316 = arith.negf %315 : vector<8x384xf32>
    %317 = math.exp %316 : vector<8x384xf32>
    %cst_65 = arith.constant 1.000000e+00 : f32
    %318 = vector.broadcast %cst_65 : f32 to vector<8x384xf32>
    %319 = arith.addf %318, %317 : vector<8x384xf32>
    %320 = arith.divf %318, %319 : vector<8x384xf32>
    %321 = vector.extract_strided_slice %298 {offsets = [0, 384], sizes = [8, 128], strides = [1, 1]} : vector<8x512xf32> to vector<8x128xf32>
    %322 = math.tanh %321 : vector<8x128xf32>
    %323 = vector.extract_strided_slice %320 {offsets = [0, 0], sizes = [8, 128], strides = [1, 1]} : vector<8x384xf32> to vector<8x128xf32>
    %324 = vector.extract_strided_slice %320 {offsets = [0, 128], sizes = [8, 128], strides = [1, 1]} : vector<8x384xf32> to vector<8x128xf32>
    %325 = vector.extract_strided_slice %320 {offsets = [0, 256], sizes = [8, 128], strides = [1, 1]} : vector<8x384xf32> to vector<8x128xf32>
    %326 = arith.mulf %324, %284 : vector<8x128xf32>
    %327 = arith.mulf %323, %322 : vector<8x128xf32>
    %328 = arith.addf %326, %327 : vector<8x128xf32>
    %329 = math.tanh %328 : vector<8x128xf32>
    %330 = arith.mulf %325, %329 : vector<8x128xf32>
    %c7_i32_66 = arith.constant 7 : i32
    %cst_67 = arith.constant dense<0.000000e+00> : vector<8x512xf32>
    %331 = tpu.matmul %314, %1, %cst_67 {dimension_numbers = #tpu.dot_dimension_numbers<[1], [0], [0], [1], [0, 0, 1, 1], [], []>} : vector<8x128xf32>, vector<128x512xf32>, vector<8x512xf32> -> vector<8x512xf32>
    %332 = vector.broadcast %3 : vector<1x512xf32> to vector<8x512xf32>
    %333 = arith.addf %332, %331 : vector<8x512xf32>
    %cst_68 = arith.constant dense<0.000000e+00> : vector<8x512xf32>
    %334 = tpu.matmul %330, %2, %cst_68 {dimension_numbers = #tpu.dot_dimension_numbers<[1], [0], [0], [1], [0, 0, 1, 1], [], []>} : vector<8x128xf32>, vector<128x512xf32>, vector<8x512xf32> -> vector<8x512xf32>
    %335 = arith.addf %333, %334 : vector<8x512xf32>
    %336 = vector.extract_strided_slice %335 {offsets = [0, 0], sizes = [8, 384], strides = [1, 1]} : vector<8x512xf32> to vector<8x384xf32>
    %337 = arith.negf %336 : vector<8x384xf32>
    %338 = math.exp %337 : vector<8x384xf32>
    %cst_69 = arith.constant 1.000000e+00 : f32
    %339 = vector.broadcast %cst_69 : f32 to vector<8x384xf32>
    %340 = arith.addf %339, %338 : vector<8x384xf32>
    %341 = arith.divf %339, %340 : vector<8x384xf32>
    %342 = vector.extract_strided_slice %335 {offsets = [0, 384], sizes = [8, 128], strides = [1, 1]} : vector<8x512xf32> to vector<8x128xf32>
    %343 = math.tanh %342 : vector<8x128xf32>
    %344 = vector.extract_strided_slice %341 {offsets = [0, 0], sizes = [8, 128], strides = [1, 1]} : vector<8x384xf32> to vector<8x128xf32>
    %345 = vector.extract_strided_slice %341 {offsets = [0, 128], sizes = [8, 128], strides = [1, 1]} : vector<8x384xf32> to vector<8x128xf32>
    %346 = vector.extract_strided_slice %341 {offsets = [0, 256], sizes = [8, 128], strides = [1, 1]} : vector<8x384xf32> to vector<8x128xf32>
    %347 = arith.mulf %345, %328 : vector<8x128xf32>
    %348 = arith.mulf %344, %343 : vector<8x128xf32>
    %349 = arith.addf %347, %348 : vector<8x128xf32>
    %350 = math.tanh %349 : vector<8x128xf32>
    %351 = arith.mulf %346, %350 : vector<8x128xf32>
    %cst_70 = arith.constant dense<0.000000e+00> : vector<8xf32>
    %352 = vector.multi_reduction <add>, %351, %cst_70 [1] : vector<8x128xf32> to vector<8xf32>
    %353 = vector.shape_cast %352 : vector<8xf32> to vector<8x1xf32>
    %cst_71 = arith.constant 1.562500e-02 : f32
    %354 = vector.broadcast %cst_71 : f32 to vector<8x1xf32>
    %355 = arith.mulf %353, %354 : vector<8x1xf32>
    %356 = arith.mulf %351, %351 : vector<8x128xf32>
    %cst_72 = arith.constant dense<0.000000e+00> : vector<8xf32>
    %357 = vector.multi_reduction <add>, %356, %cst_72 [1] : vector<8x128xf32> to vector<8xf32>
    %358 = vector.shape_cast %357 : vector<8xf32> to vector<8x1xf32>
    %cst_73 = arith.constant 1.562500e-02 : f32
    %359 = vector.broadcast %cst_73 : f32 to vector<8x1xf32>
    %360 = arith.mulf %358, %359 : vector<8x1xf32>
    %361 = arith.mulf %355, %355 : vector<8x1xf32>
    %362 = arith.subf %360, %361 : vector<8x1xf32>
    %cst_74 = arith.constant 0.000000e+00 : f32
    %363 = vector.broadcast %cst_74 : f32 to vector<8x1xf32>
    %364 = arith.maximumf %362, %363 : vector<8x1xf32>
    %365 = vector.broadcast %355 : vector<8x1xf32> to vector<8x128xf32>
    %366 = arith.subf %351, %365 : vector<8x128xf32>
    %cst_75 = arith.constant 9.99999974E-6 : f32
    %367 = vector.broadcast %cst_75 : f32 to vector<8x1xf32>
    %368 = arith.addf %364, %367 : vector<8x1xf32>
    %369 = math.rsqrt %368 : vector<8x1xf32>
    %370 = vector.broadcast %369 : vector<8x1xf32> to vector<8x128xf32>
    %371 = arith.mulf %366, %370 : vector<8x128xf32>
    %c0_76 = arith.constant 0 : index
    %c0_77 = arith.constant 0 : index
    %372 = vector.load %arg6[%c0_76, %c0_77] : memref<1x128xf32, #tpu.memory_space<vmem>>, vector<1x128xf32>
    %373 = vector.broadcast %372 : vector<1x128xf32> to vector<8x128xf32>
    %374 = arith.mulf %371, %373 : vector<8x128xf32>
    %c0_78 = arith.constant 0 : index
    %c0_79 = arith.constant 0 : index
    %375 = vector.load %arg7[%c0_78, %c0_79] : memref<1x128xf32, #tpu.memory_space<vmem>>, vector<1x128xf32>
    %376 = vector.broadcast %375 : vector<1x128xf32> to vector<8x128xf32>
    %377 = arith.addf %374, %376 : vector<8x128xf32>
    %c0_80 = arith.constant 0 : index
    %c0_81 = arith.constant 0 : index
    %378 = vector.load %arg8[%c0_80, %c0_81] : memref<128x128xf32, #tpu.memory_space<vmem>>, vector<128x128xf32>
    %cst_82 = arith.constant dense<0.000000e+00> : vector<8x128xf32>
    %379 = tpu.matmul %377, %378, %cst_82 {dimension_numbers = #tpu.dot_dimension_numbers<[1], [0], [0], [1], [0, 0, 1, 1], [], []>} : vector<8x128xf32>, vector<128x128xf32>, vector<8x128xf32> -> vector<8x128xf32>
    %c0_83 = arith.constant 0 : index
    %c0_84 = arith.constant 0 : index
    %380 = vector.load %arg9[%c0_83, %c0_84] : memref<1x128xf32, #tpu.memory_space<vmem>>, vector<1x128xf32>
    %381 = vector.broadcast %380 : vector<1x128xf32> to vector<8x128xf32>
    %382 = arith.addf %379, %381 : vector<8x128xf32>
    %c0_85 = arith.constant 0 : index
    %c0_86 = arith.constant 0 : index
    %383 = vector.load %arg10[%c0_85, %c0_86] : memref<8x128xf32, #tpu.memory_space<vmem>>, vector<8x128xf32>
    tpu.vector_store %arg10[%c0_85, %c0_86], %382 {strides = array<i32>} : memref<8x128xf32, #tpu.memory_space<vmem>>, vector<8x128xf32>,
    return
  }
  func.func @transform_0(%arg0: i32) -> (i32, i32, i32) {
    %c0_i32 = arith.constant 0 : i32
    %c0_i32_0 = arith.constant 0 : i32
    %c0_i32_1 = arith.constant 0 : i32
    return %arg0, %c0_i32, %c0_i32_0 : i32, i32, i32
  }
  func.func @transform_1(%arg0: i32) -> (i32, i32) {
    %c0_i32 = arith.constant 0 : i32
    %c0_i32_0 = arith.constant 0 : i32
    %c0_i32_1 = arith.constant 0 : i32
    return %c0_i32, %c0_i32_0 : i32, i32
  }
  func.func @transform_2(%arg0: i32) -> (i32, i32) {
    %c0_i32 = arith.constant 0 : i32
    %c0_i32_0 = arith.constant 0 : i32
    %c0_i32_1 = arith.constant 0 : i32
    return %c0_i32, %c0_i32_0 : i32, i32
  }
  func.func @transform_3(%arg0: i32) -> (i32, i32) {
    %c0_i32 = arith.constant 0 : i32
    %c0_i32_0 = arith.constant 0 : i32
    %c0_i32_1 = arith.constant 0 : i32
    return %c0_i32, %c0_i32_0 : i32, i32
  }
  func.func @transform_4(%arg0: i32) -> (i32, i32) {
    %c0_i32 = arith.constant 0 : i32
    %c0_i32_0 = arith.constant 0 : i32
    %c0_i32_1 = arith.constant 0 : i32
    return %c0_i32, %c0_i32_0 : i32, i32
  }
  func.func @transform_5(%arg0: i32) -> (i32, i32) {
    %c0_i32 = arith.constant 0 : i32
    %c0_i32_0 = arith.constant 0 : i32
    %c0_i32_1 = arith.constant 0 : i32
    return %c0_i32, %c0_i32_0 : i32, i32
  }
  func.func @transform_6(%arg0: i32) -> (i32, i32) {
    %c0_i32 = arith.constant 0 : i32
    %c0_i32_0 = arith.constant 0 : i32
    %c0_i32_1 = arith.constant 0 : i32
    return %c0_i32, %c0_i32_0 : i32, i32
  }
  func.func @transform_7(%arg0: i32) -> (i32, i32) {
    %c0_i32 = arith.constant 0 : i32
    %c0_i32_0 = arith.constant 0 : i32
    %c0_i32_1 = arith.constant 0 : i32
    return %c0_i32, %c0_i32_0 : i32, i32
  }
  func.func @transform_8(%arg0: i32) -> (i32, i32) {
    %c0_i32 = arith.constant 0 : i32
    %c0_i32_0 = arith.constant 0 : i32
    %c0_i32_1 = arith.constant 0 : i32
    return %c0_i32, %c0_i32_0 : i32, i32
  }
  func.func @transform_9(%arg0: i32) -> (i32, i32) {
    %c0_i32 = arith.constant 0 : i32
    %c0_i32_0 = arith.constant 0 : i32
    return %arg0, %c0_i32 : i32, i32
  }
}

</mosaic_0001>

<llo_original>
// kernel: regularized_lstm_forward.1
$region0: #{regularized_lstm_forward.1}
  #allocation0 [shape = 'u32[]', space=smem, size = 0x4, offset = 0x4, fixed_abs, tag = 'smem constant byte address 0x4 - core index']
  #allocation1 [shape = 'u32[144,128]{1,0:T(1,128)}', space=vmem, size = 0x12000, scoped, tag = 'internal scratch']
  %s0 = inlined_call_operand.vmem [shape: f32[1,64,512], index: 0, kind: input, shape index: {}]
  %s1 = inlined_call_operand.vmem [shape: f32[128,512], index: 1, kind: input, shape index: {}]
  %s2 = inlined_call_operand.vmem [shape: f32[128,512], index: 2, kind: input, shape index: {}]
  %s3 = inlined_call_operand.vmem [shape: f32[128,512], index: 3, kind: input, shape index: {}]
  %s4 = inlined_call_operand.vmem [shape: f32[1,512], index: 4, kind: input, shape index: {}]
  %s5 = inlined_call_operand.vmem [shape: f32[1,128], index: 5, kind: input, shape index: {}]
  %s6 = inlined_call_operand.vmem [shape: f32[1,128], index: 6, kind: input, shape index: {}]
  %s7 = inlined_call_operand.vmem [shape: f32[128,128], index: 7, kind: input, shape index: {}]
  %s8 = inlined_call_operand.vmem [shape: f32[1,128], index: 8, kind: input, shape index: {}]
  %s9 = inlined_call_operand.vmem [shape: f32[8,128], index: 9, kind: output, shape index: {}]
  %s10 = sld [smem:[#allocation0]]
  $region46: #{regularized_lstm_forward.1} parent=0
    _
  %s12 = ssub.s32 1, %s10
  %s13 = scalar_select 0, %s12, %s10
  // Predicated region
  $region2: #{regularized_lstm_forward.1} parent=0 // pred_check
    _
  $region3: #{regularized_lstm_forward.1} parent=0 // pred_check_branch
    %15 = sbr.rel (0) target = $region5
  $region4: #{regularized_lstm_forward.1} parent=0 // pred_region
    _
  $region5: #{regularized_lstm_forward.1} parent=0 // pred_fallthru
    _
  // Predicated region
  $region6: #{regularized_lstm_forward.1} parent=0 // pred_check
    _
  $region7: #{regularized_lstm_forward.1} parent=0 // pred_check_branch
    %17 = sbr.rel (0) target = $region9
  $region8: #{regularized_lstm_forward.1} parent=0 // pred_region
    _
  $region9: #{regularized_lstm_forward.1} parent=0 // pred_fallthru
    _
  // Predicated region
  $region10: #{regularized_lstm_forward.1} parent=0 // pred_check
    _
  $region11: #{regularized_lstm_forward.1} parent=0 // pred_check_branch
    %19 = sbr.rel (0) target = $region13
  $region12: #{regularized_lstm_forward.1} parent=0 // pred_region
    _
  $region13: #{regularized_lstm_forward.1} parent=0 // pred_fallthru
    _
  // Predicated region
  $region14: #{regularized_lstm_forward.1} parent=0 // pred_check
    _
  $region15: #{regularized_lstm_forward.1} parent=0 // pred_check_branch
    %21 = sbr.rel (0) target = $region17
  $region16: #{regularized_lstm_forward.1} parent=0 // pred_region
    _
  $region17: #{regularized_lstm_forward.1} parent=0 // pred_fallthru
    _
  // Predicated region
  $region18: #{regularized_lstm_forward.1} parent=0 // pred_check
    _
  $region19: #{regularized_lstm_forward.1} parent=0 // pred_check_branch
    %23 = sbr.rel (0) target = $region21
  $region20: #{regularized_lstm_forward.1} parent=0 // pred_region
    _
  $region21: #{regularized_lstm_forward.1} parent=0 // pred_fallthru
    _
  // Predicated region
  $region22: #{regularized_lstm_forward.1} parent=0 // pred_check
    _
  $region23: #{regularized_lstm_forward.1} parent=0 // pred_check_branch
    %25 = sbr.rel (0) target = $region25
  $region24: #{regularized_lstm_forward.1} parent=0 // pred_region
    _
  $region25: #{regularized_lstm_forward.1} parent=0 // pred_fallthru
    _
  // Predicated region
  $region26: #{regularized_lstm_forward.1} parent=0 // pred_check
    _
  $region27: #{regularized_lstm_forward.1} parent=0 // pred_check_branch
    %27 = sbr.rel (0) target = $region29
  $region28: #{regularized_lstm_forward.1} parent=0 // pred_region
    _
  $region29: #{regularized_lstm_forward.1} parent=0 // pred_fallthru
    _
  // Predicated region
  $region30: #{regularized_lstm_forward.1} parent=0 // pred_check
    _
  $region31: #{regularized_lstm_forward.1} parent=0 // pred_check_branch
    %29 = sbr.rel (0) target = $region33
  $region32: #{regularized_lstm_forward.1} parent=0 // pred_region
    _
  $region33: #{regularized_lstm_forward.1} parent=0 // pred_fallthru
    _
  // Predicated region
  $region34: #{regularized_lstm_forward.1} parent=0 // pred_check
    _
  $region35: #{regularized_lstm_forward.1} parent=0 // pred_check_branch
    %31 = sbr.rel (0) target = $region37
  $region36: #{regularized_lstm_forward.1} parent=0 // pred_region
    _
  $region37: #{regularized_lstm_forward.1} parent=0 // pred_fallthru
    _
  %v32 = vld [vmem:[%s1] sm:$0xff]
  %v33 = vld [vmem:[%s1 + $0x8] sm:$0xff]
  %v34 = vld [vmem:[%s1 + $0x10] sm:$0xff]
  %v35 = vld [vmem:[%s1 + $0x18] sm:$0xff]
  %v36 = vld [vmem:[%s1 + $0x20] sm:$0xff]
  %v37 = vld [vmem:[%s1 + $0x28] sm:$0xff]
  %v38 = vld [vmem:[%s1 + $0x30] sm:$0xff]
  %v39 = vld [vmem:[%s1 + $0x38] sm:$0xff]
  %v40 = vld [vmem:[%s1 + $0x40] sm:$0xff]
  %v41 = vld [vmem:[%s1 + $0x48] sm:$0xff]
  %v42 = vld [vmem:[%s1 + $0x50] sm:$0xff]
  %v43 = vld [vmem:[%s1 + $0x58] sm:$0xff]
  %v44 = vld [vmem:[%s1 + $0x60] sm:$0xff]
  %v45 = vld [vmem:[%s1 + $0x68] sm:$0xff]
  %v46 = vld [vmem:[%s1 + $0x70] sm:$0xff]
  %v47 = vld [vmem:[%s1 + $0x78] sm:$0xff]
  %v48 = vld [vmem:[%s1 + $0x80] sm:$0xff]
  %v49 = vld [vmem:[%s1 + $0x88] sm:$0xff]
  %v50 = vld [vmem:[%s1 + $0x90] sm:$0xff]
  %v51 = vld [vmem:[%s1 + $0x98] sm:$0xff]
  %v52 = vld [vmem:[%s1 + $0xa0] sm:$0xff]
  %v53 = vld [vmem:[%s1 + $0xa8] sm:$0xff]
  %v54 = vld [vmem:[%s1 + $0xb0] sm:$0xff]
  %v55 = vld [vmem:[%s1 + $0xb8] sm:$0xff]
  %v56 = vld [vmem:[%s1 + $0xc0] sm:$0xff]
  %v57 = vld [vmem:[%s1 + $0xc8] sm:$0xff]
  %v58 = vld [vmem:[%s1 + $0xd0] sm:$0xff]
  %v59 = vld [vmem:[%s1 + $0xd8] sm:$0xff]
  %v60 = vld [vmem:[%s1 + $0xe0] sm:$0xff]
  %v61 = vld [vmem:[%s1 + $0xe8] sm:$0xff]
  %v62 = vld [vmem:[%s1 + $0xf0] sm:$0xff]
  %v63 = vld [vmem:[%s1 + $0xf8] sm:$0xff]
  %v64 = vld [vmem:[%s1 + $0x100] sm:$0xff]
  %v65 = vld [vmem:[%s1 + $0x108] sm:$0xff]
  %v66 = vld [vmem:[%s1 + $0x110] sm:$0xff]
  %v67 = vld [vmem:[%s1 + $0x118] sm:$0xff]
  %v68 = vld [vmem:[%s1 + $0x120] sm:$0xff]
  %v69 = vld [vmem:[%s1 + $0x128] sm:$0xff]
  %v70 = vld [vmem:[%s1 + $0x130] sm:$0xff]
  %v71 = vld [vmem:[%s1 + $0x138] sm:$0xff]
  %v72 = vld [vmem:[%s1 + $0x140] sm:$0xff]
  %v73 = vld [vmem:[%s1 + $0x148] sm:$0xff]
  %v74 = vld [vmem:[%s1 + $0x150] sm:$0xff]
  %v75 = vld [vmem:[%s1 + $0x158] sm:$0xff]
  %v76 = vld [vmem:[%s1 + $0x160] sm:$0xff]
  %v77 = vld [vmem:[%s1 + $0x168] sm:$0xff]
  %v78 = vld [vmem:[%s1 + $0x170] sm:$0xff]
  %v79 = vld [vmem:[%s1 + $0x178] sm:$0xff]
  %v80 = vld [vmem:[%s1 + $0x180] sm:$0xff]
  %v81 = vld [vmem:[%s1 + $0x188] sm:$0xff]
  %v82 = vld [vmem:[%s1 + $0x190] sm:$0xff]
  %v83 = vld [vmem:[%s1 + $0x198] sm:$0xff]
  %v84 = vld [vmem:[%s1 + $0x1a0] sm:$0xff]
  %v85 = vld [vmem:[%s1 + $0x1a8] sm:$0xff]
  %v86 = vld [vmem:[%s1 + $0x1b0] sm:$0xff]
  %v87 = vld [vmem:[%s1 + $0x1b8] sm:$0xff]
  %v88 = vld [vmem:[%s1 + $0x1c0] sm:$0xff]
  %v89 = vld [vmem:[%s1 + $0x1c8] sm:$0xff]
  %v90 = vld [vmem:[%s1 + $0x1d0] sm:$0xff]
  %v91 = vld [vmem:[%s1 + $0x1d8] sm:$0xff]
  %v92 = vld [vmem:[%s1 + $0x1e0] sm:$0xff]
  %v93 = vld [vmem:[%s1 + $0x1e8] sm:$0xff]
  %v94 = vld [vmem:[%s1 + $0x1f0] sm:$0xff]
  %v95 = vld [vmem:[%s1 + $0x1f8] sm:$0xff]
  %v96 = vld [vmem:[%s2] sm:$0xff]
  %v97 = vld [vmem:[%s2 + $0x8] sm:$0xff]
  %v98 = vld [vmem:[%s2 + $0x10] sm:$0xff]
  %v99 = vld [vmem:[%s2 + $0x18] sm:$0xff]
  %v100 = vld [vmem:[%s2 + $0x20] sm:$0xff]
  %v101 = vld [vmem:[%s2 + $0x28] sm:$0xff]
  %v102 = vld [vmem:[%s2 + $0x30] sm:$0xff]
  %v103 = vld [vmem:[%s2 + $0x38] sm:$0xff]
  %v104 = vld [vmem:[%s2 + $0x40] sm:$0xff]
  %v105 = vld [vmem:[%s2 + $0x48] sm:$0xff]
  %v106 = vld [vmem:[%s2 + $0x50] sm:$0xff]
  %v107 = vld [vmem:[%s2 + $0x58] sm:$0xff]
  %v108 = vld [vmem:[%s2 + $0x60] sm:$0xff]
  %v109 = vld [vmem:[%s2 + $0x68] sm:$0xff]
  %v110 = vld [vmem:[%s2 + $0x70] sm:$0xff]
  %v111 = vld [vmem:[%s2 + $0x78] sm:$0xff]
  %v112 = vld [vmem:[%s2 + $0x80] sm:$0xff]
  %v113 = vld [vmem:[%s2 + $0x88] sm:$0xff]
  %v114 = vld [vmem:[%s2 + $0x90] sm:$0xff]
  %v115 = vld [vmem:[%s2 + $0x98] sm:$0xff]
  %v116 = vld [vmem:[%s2 + $0xa0] sm:$0xff]
  %v117 = vld [vmem:[%s2 + $0xa8] sm:$0xff]
  %v118 = vld [vmem:[%s2 + $0xb0] sm:$0xff]
  %v119 = vld [vmem:[%s2 + $0xb8] sm:$0xff]
  %v120 = vld [vmem:[%s2 + $0xc0] sm:$0xff]
  %v121 = vld [vmem:[%s2 + $0xc8] sm:$0xff]
  %v122 = vld [vmem:[%s2 + $0xd0] sm:$0xff]
  %v123 = vld [vmem:[%s2 + $0xd8] sm:$0xff]
  %v124 = vld [vmem:[%s2 + $0xe0] sm:$0xff]
  %v125 = vld [vmem:[%s2 + $0xe8] sm:$0xff]
  %v126 = vld [vmem:[%s2 + $0xf0] sm:$0xff]
  %v127 = vld [vmem:[%s2 + $0xf8] sm:$0xff]
  %v128 = vld [vmem:[%s2 + $0x100] sm:$0xff]
  %v129 = vld [vmem:[%s2 + $0x108] sm:$0xff]
  %v130 = vld [vmem:[%s2 + $0x110] sm:$0xff]
  %v131 = vld [vmem:[%s2 + $0x118] sm:$0xff]
  %v132 = vld [vmem:[%s2 + $0x120] sm:$0xff]
  %v133 = vld [vmem:[%s2 + $0x128] sm:$0xff]
  %v134 = vld [vmem:[%s2 + $0x130] sm:$0xff]
  %v135 = vld [vmem:[%s2 + $0x138] sm:$0xff]
  %v136 = vld [vmem:[%s2 + $0x140] sm:$0xff]
  %v137 = vld [vmem:[%s2 + $0x148] sm:$0xff]
  %v138 = vld [vmem:[%s2 + $0x150] sm:$0xff]
  %v139 = vld [vmem:[%s2 + $0x158] sm:$0xff]
  %v140 = vld [vmem:[%s2 + $0x160] sm:$0xff]
  %v141 = vld [vmem:[%s2 + $0x168] sm:$0xff]
  %v142 = vld [vmem:[%s2 + $0x170] sm:$0xff]
  %v143 = vld [vmem:[%s2 + $0x178] sm:$0xff]
  %v144 = vld [vmem:[%s2 + $0x180] sm:$0xff]
  %v145 = vld [vmem:[%s2 + $0x188] sm:$0xff]
  %v146 = vld [vmem:[%s2 + $0x190] sm:$0xff]
  %v147 = vld [vmem:[%s2 + $0x198] sm:$0xff]
  %v148 = vld [vmem:[%s2 + $0x1a0] sm:$0xff]
  %v149 = vld [vmem:[%s2 + $0x1a8] sm:$0xff]
  %v150 = vld [vmem:[%s2 + $0x1b0] sm:$0xff]
  %v151 = vld [vmem:[%s2 + $0x1b8] sm:$0xff]
  %v152 = vld [vmem:[%s2 + $0x1c0] sm:$0xff]
  %v153 = vld [vmem:[%s2 + $0x1c8] sm:$0xff]
  %v154 = vld [vmem:[%s2 + $0x1d0] sm:$0xff]
  %v155 = vld [vmem:[%s2 + $0x1d8] sm:$0xff]
  %v156 = vld [vmem:[%s2 + $0x1e0] sm:$0xff]
  %v157 = vld [vmem:[%s2 + $0x1e8] sm:$0xff]
  %v158 = vld [vmem:[%s2 + $0x1f0] sm:$0xff]
  %v159 = vld [vmem:[%s2 + $0x1f8] sm:$0xff]
  %v160 = vld [vmem:[%s3] sm:$0xff]
  %v161 = vld [vmem:[%s3 + $0x8] sm:$0xff]
  %v162 = vld [vmem:[%s3 + $0x10] sm:$0xff]
  %v163 = vld [vmem:[%s3 + $0x18] sm:$0xff]
  %v164 = vld [vmem:[%s3 + $0x20] sm:$0xff]
  %v165 = vld [vmem:[%s3 + $0x28] sm:$0xff]
  %v166 = vld [vmem:[%s3 + $0x30] sm:$0xff]
  %v167 = vld [vmem:[%s3 + $0x38] sm:$0xff]
  %v168 = vld [vmem:[%s3 + $0x40] sm:$0xff]
  %v169 = vld [vmem:[%s3 + $0x48] sm:$0xff]
  %v170 = vld [vmem:[%s3 + $0x50] sm:$0xff]
  %v171 = vld [vmem:[%s3 + $0x58] sm:$0xff]
  %v172 = vld [vmem:[%s3 + $0x60] sm:$0xff]
  %v173 = vld [vmem:[%s3 + $0x68] sm:$0xff]
  %v174 = vld [vmem:[%s3 + $0x70] sm:$0xff]
  %v175 = vld [vmem:[%s3 + $0x78] sm:$0xff]
  %v176 = vld [vmem:[%s3 + $0x80] sm:$0xff]
  %v177 = vld [vmem:[%s3 + $0x88] sm:$0xff]
  %v178 = vld [vmem:[%s3 + $0x90] sm:$0xff]
  %v179 = vld [vmem:[%s3 + $0x98] sm:$0xff]
  %v180 = vld [vmem:[%s3 + $0xa0] sm:$0xff]
  %v181 = vld [vmem:[%s3 + $0xa8] sm:$0xff]
  %v182 = vld [vmem:[%s3 + $0xb0] sm:$0xff]
  %v183 = vld [vmem:[%s3 + $0xb8] sm:$0xff]
  %v184 = vld [vmem:[%s3 + $0xc0] sm:$0xff]
  %v185 = vld [vmem:[%s3 + $0xc8] sm:$0xff]
  %v186 = vld [vmem:[%s3 + $0xd0] sm:$0xff]
  %v187 = vld [vmem:[%s3 + $0xd8] sm:$0xff]
  %v188 = vld [vmem:[%s3 + $0xe0] sm:$0xff]
  %v189 = vld [vmem:[%s3 + $0xe8] sm:$0xff]
  %v190 = vld [vmem:[%s3 + $0xf0] sm:$0xff]
  %v191 = vld [vmem:[%s3 + $0xf8] sm:$0xff]
  %v192 = vld [vmem:[%s3 + $0x100] sm:$0xff]
  %v193 = vld [vmem:[%s3 + $0x108] sm:$0xff]
  %v194 = vld [vmem:[%s3 + $0x110] sm:$0xff]
  %v195 = vld [vmem:[%s3 + $0x118] sm:$0xff]
  %v196 = vld [vmem:[%s3 + $0x120] sm:$0xff]
  %v197 = vld [vmem:[%s3 + $0x128] sm:$0xff]
  %v198 = vld [vmem:[%s3 + $0x130] sm:$0xff]
  %v199 = vld [vmem:[%s3 + $0x138] sm:$0xff]
  %v200 = vld [vmem:[%s3 + $0x140] sm:$0xff]
  %v201 = vld [vmem:[%s3 + $0x148] sm:$0xff]
  %v202 = vld [vmem:[%s3 + $0x150] sm:$0xff]
  %v203 = vld [vmem:[%s3 + $0x158] sm:$0xff]
  %v204 = vld [vmem:[%s3 + $0x160] sm:$0xff]
  %v205 = vld [vmem:[%s3 + $0x168] sm:$0xff]
  %v206 = vld [vmem:[%s3 + $0x170] sm:$0xff]
  %v207 = vld [vmem:[%s3 + $0x178] sm:$0xff]
  %v208 = vld [vmem:[%s3 + $0x180] sm:$0xff]
  %v209 = vld [vmem:[%s3 + $0x188] sm:$0xff]
  %v210 = vld [vmem:[%s3 + $0x190] sm:$0xff]
  %v211 = vld [vmem:[%s3 + $0x198] sm:$0xff]
  %v212 = vld [vmem:[%s3 + $0x1a0] sm:$0xff]
  %v213 = vld [vmem:[%s3 + $0x1a8] sm:$0xff]
  %v214 = vld [vmem:[%s3 + $0x1b0] sm:$0xff]
  %v215 = vld [vmem:[%s3 + $0x1b8] sm:$0xff]
  %v216 = vld [vmem:[%s3 + $0x1c0] sm:$0xff]
  %v217 = vld [vmem:[%s3 + $0x1c8] sm:$0xff]
  %v218 = vld [vmem:[%s3 + $0x1d0] sm:$0xff]
  %v219 = vld [vmem:[%s3 + $0x1d8] sm:$0xff]
  %v220 = vld [vmem:[%s3 + $0x1e0] sm:$0xff]
  %v221 = vld [vmem:[%s3 + $0x1e8] sm:$0xff]
  %v222 = vld [vmem:[%s3 + $0x1f0] sm:$0xff]
  %v223 = vld [vmem:[%s3 + $0x1f8] sm:$0xff]
  %v224 = vld [vmem:[%s4] sm:$0xf]
  %v225 = vld [vmem:[%s0] sm:$0xff]
  %v226 = vld [vmem:[%s0 + $0x8] sm:$0xff]
  %v227 = vld [vmem:[%s0 + $0x10] sm:$0xff]
  %v228 = vld [vmem:[%s0 + $0x18] sm:$0xff]
  %v229 = vxor.u32 %v225, 2147483648
  %v230 = vxor.u32 %v226, 2147483648
  %v231 = vxor.u32 %v227, 2147483648
  %v232 = vmul.f32 %v229, 1.442695
  %v233 = vpow.pop %v232
  %v234 = vmul.f32 %v230, 1.442695
  %v235 = vpow.pop %v234
  %v236 = vmul.f32 %v231, 1.442695
  %v237 = vpow.pop %v236
  %v238 = vadd.f32 %v233, 1.0
  %v239 = vadd.f32 %v235, 1.0
  %v240 = vadd.f32 %v237, 1.0
  %v241 = vrcp.pop %v238
  %v242 = vmul.f32 1.0, %v241
  %v243 = vrcp.pop %v239
  %v244 = vmul.f32 1.0, %v243
  %v245 = vrcp.pop %v240
  %v246 = vmul.f32 1.0, %v245
  %v247 = vtanh.pop %v228
  %v248 = vmul.f32 %v244, 0.0
  %v249 = vmul.f32 %v242, %v247
  %v250 = vadd.f32 %v248, %v249
  %v251 = vtanh.pop %v250
  %v252 = vmul.f32 %v246, %v251
  %s253 = smul.u32 1, 4
  %s254 = smul.addr %s253, 8
  %s255 = scalar_lea.vmem %s0, %s254
  %v256 = vld [vmem:[%s255] sm:$0xff]
  %v257 = vld [vmem:[%s255 + $0x8] sm:$0xff]
  %v258 = vld [vmem:[%s255 + $0x10] sm:$0xff]
  %v259 = vld [vmem:[%s255 + $0x18] sm:$0xff]
  %260 = vmatprep.subr.mxu0 %v93
  %261 = vmatpush1.msra.mxu0 %v92
  %262 = vmatprep.subr.mxu0 %v89
  %263 = vmatpush1.msra.mxu0 %v88
  %264 = vmatprep.subr.mxu0 %v85
  %265 = vmatpush1.msra.mxu0 %v84
  %266 = vmatprep.subr.mxu0 %v81
  %267 = vmatpush1.msra.mxu0 %v80
  %268 = vmatprep.subr.mxu0 %v77
  %269 = vmatpush1.msra.mxu0 %v76
  %270 = vmatprep.subr.mxu0 %v73
  %271 = vmatpush1.msra.mxu0 %v72
  %272 = vmatprep.subr.mxu0 %v69
  %273 = vmatpush1.msra.mxu0 %v68
  %274 = vmatprep.subr.mxu0 %v65
  %275 = vmatpush1.msra.mxu0 %v64
  %276 = vmatprep.subr.mxu0 %v61
  %277 = vmatpush1.msra.mxu0 %v60
  %278 = vmatprep.subr.mxu0 %v57
  %279 = vmatpush1.msra.mxu0 %v56
  %280 = vmatprep.subr.mxu0 %v53
  %281 = vmatpush1.msra.mxu0 %v52
  %282 = vmatprep.subr.mxu0 %v49
  %283 = vmatpush1.msra.mxu0 %v48
  %284 = vmatprep.subr.mxu0 %v45
  %285 = vmatpush1.msra.mxu0 %v44
  %286 = vmatprep.subr.mxu0 %v41
  %287 = vmatpush1.msra.mxu0 %v40
  %288 = vmatprep.subr.mxu0 %v37
  %289 = vmatpush1.msra.mxu0 %v36
  %290 = vmatprep.subr.mxu0 %v33
  %291 = vmatpush1.msra.mxu0 %v32
  %292 = vmatprep.subr.mxu0 0.0
  %293 = vmatpush2.msra.mxu0 0.0
  %294 = vmatprep.subr.mxu0 0.0
  %295 = vmatpush2.msra.mxu0 0.0
  %296 = vmatprep.subr.mxu0 0.0
  %297 = vmatpush2.msra.mxu0 0.0
  %298 = vmatprep.subr.mxu0 0.0
  %299 = vmatpush2.msra.mxu0 0.0
  %300 = vmatprep.subr.mxu0 0.0
  %301 = vmatpush2.msra.mxu0 0.0
  %302 = vmatprep.subr.mxu0 0.0
  %303 = vmatpush2.msra.mxu0 0.0
  %304 = vmatprep.subr.mxu0 0.0
  %305 = vmatpush2.msra.mxu0 0.0
  %306 = vmatprep.subr.mxu0 0.0
  %307 = vmatpush2.msra.mxu0 0.0
  %308 = vmatprep.subr.mxu0 0.0
  %309 = vmatpush2.msra.mxu0 0.0
  %310 = vmatprep.subr.mxu0 0.0
  %311 = vmatpush2.msra.mxu0 0.0
  %312 = vmatprep.subr.mxu0 0.0
  %313 = vmatpush2.msra.mxu0 0.0
  %314 = vmatprep.subr.mxu0 0.0
  %315 = vmatpush2.msra.mxu0 0.0
  %316 = vmatprep.subr.mxu0 0.0
  %317 = vmatpush2.msra.mxu0 0.0
  %318 = vmatprep.subr.mxu0 0.0
  %319 = vmatpush2.msra.mxu0 0.0
  %320 = vmatprep.subr.mxu0 0.0
  %321 = vmatpush2.msra.mxu0 0.0
  %322 = vmatprep.subr.mxu0 0.0
  %323 = vmatpush2.msra.mxu0 0.0
  %324 = vmatprep.mubr.f32.mxu0 0.0
  %325 = vmatmul.mubr.f32.gmra.mxu0 %v252
  %v326 = vpop.f32.mrf.mxu0
  %v327 = vadd.f32 0.0, %v326
  %v328 = vpop.f32.mrf.mxu0
  %v329 = vadd.f32 0.0, %v328
  %330 = vdwg.mxu0
  %331 = vmatprep.subr.mxu0 %v95
  %332 = vmatpush1.msra.mxu0 %v94
  %333 = vmatprep.subr.mxu0 %v91
  %334 = vmatpush1.msra.mxu0 %v90
  %335 = vmatprep.subr.mxu0 %v87
  %336 = vmatpush1.msra.mxu0 %v86
  %337 = vmatprep.subr.mxu0 %v83
  %338 = vmatpush1.msra.mxu0 %v82
  %339 = vmatprep.subr.mxu0 %v79
  %340 = vmatpush1.msra.mxu0 %v78
  %341 = vmatprep.subr.mxu0 %v75
  %342 = vmatpush1.msra.mxu0 %v74
  %343 = vmatprep.subr.mxu0 %v71
  %344 = vmatpush1.msra.mxu0 %v70
  %345 = vmatprep.subr.mxu0 %v67
  %346 = vmatpush1.msra.mxu0 %v66
  %347 = vmatprep.subr.mxu0 %v63
  %348 = vmatpush1.msra.mxu0 %v62
  %349 = vmatprep.subr.mxu0 %v59
  %350 = vmatpush1.msra.mxu0 %v58
  %351 = vmatprep.subr.mxu0 %v55
  %352 = vmatpush1.msra.mxu0 %v54
  %353 = vmatprep.subr.mxu0 %v51
  %354 = vmatpush1.msra.mxu0 %v50
  %355 = vmatprep.subr.mxu0 %v47
  %356 = vmatpush1.msra.mxu0 %v46
  %357 = vmatprep.subr.mxu0 %v43
  %358 = vmatpush1.msra.mxu0 %v42
  %359 = vmatprep.subr.mxu0 %v39
  %360 = vmatpush1.msra.mxu0 %v38
  %361 = vmatprep.subr.mxu0 %v35
  %362 = vmatpush1.msra.mxu0 %v34
  %363 = vmatprep.subr.mxu0 0.0
  %364 = vmatpush2.msra.mxu0 0.0
  %365 = vmatprep.subr.mxu0 0.0
  %366 = vmatpush2.msra.mxu0 0.0
  %367 = vmatprep.subr.mxu0 0.0
  %368 = vmatpush2.msra.mxu0 0.0
  %369 = vmatprep.subr.mxu0 0.0
  %370 = vmatpush2.msra.mxu0 0.0
  %371 = vmatprep.subr.mxu0 0.0
  %372 = vmatpush2.msra.mxu0 0.0
  %373 = vmatprep.subr.mxu0 0.0
  %374 = vmatpush2.msra.mxu0 0.0
  %375 = vmatprep.subr.mxu0 0.0
  %376 = vmatpush2.msra.mxu0 0.0
  %377 = vmatprep.subr.mxu0 0.0
  %378 = vmatpush2.msra.mxu0 0.0
  %379 = vmatprep.subr.mxu0 0.0
  %380 = vmatpush2.msra.mxu0 0.0
  %381 = vmatprep.subr.mxu0 0.0
  %382 = vmatpush2.msra.mxu0 0.0
  %383 = vmatprep.subr.mxu0 0.0
  %384 = vmatpush2.msra.mxu0 0.0
  %385 = vmatprep.subr.mxu0 0.0
  %386 = vmatpush2.msra.mxu0 0.0
  %387 = vmatprep.subr.mxu0 0.0
  %388 = vmatpush2.msra.mxu0 0.0
  %389 = vmatprep.subr.mxu0 0.0
  %390 = vmatpush2.msra.mxu0 0.0
  %391 = vmatprep.subr.mxu0 0.0
  %392 = vmatpush2.msra.mxu0 0.0
  %393 = vmatprep.subr.mxu0 0.0
  %394 = vmatpush2.msra.mxu0 0.0
  %395 = vmatprep.mubr.f32.mxu0 0.0
  %396 = vmatmul.mubr.f32.gmra.mxu0 %v252
  %v397 = vpop.f32.mrf.mxu0
  %v398 = vadd.f32 0.0, %v397
  %v399 = vpop.f32.mrf.mxu0
  %v400 = vadd.f32 0.0, %v399
  %401 = vdwg.mxu0
  %v402 = vadd.f32 %v256, %v327
  %v403 = vadd.f32 %v257, %v329
  %v404 = vadd.f32 %v258, %v398
  %v405 = vadd.f32 %v259, %v400
  %406 = vmatprep.subr.mxu0 %v157
  %407 = vmatpush1.msra.mxu0 %v156
  %408 = vmatprep.subr.mxu0 %v153
  %409 = vmatpush1.msra.mxu0 %v152
  %410 = vmatprep.subr.mxu0 %v149
  %411 = vmatpush1.msra.mxu0 %v148
  %412 = vmatprep.subr.mxu0 %v145
  %413 = vmatpush1.msra.mxu0 %v144
  %414 = vmatprep.subr.mxu0 %v141
  %415 = vmatpush1.msra.mxu0 %v140
  %416 = vmatprep.subr.mxu0 %v137
  %417 = vmatpush1.msra.mxu0 %v136
  %418 = vmatprep.subr.mxu0 %v133
  %419 = vmatpush1.msra.mxu0 %v132
  %420 = vmatprep.subr.mxu0 %v129
  %421 = vmatpush1.msra.mxu0 %v128
  %422 = vmatprep.subr.mxu0 %v125
  %423 = vmatpush1.msra.mxu0 %v124
  %424 = vmatprep.subr.mxu0 %v121
  %425 = vmatpush1.msra.mxu0 %v120
  %426 = vmatprep.subr.mxu0 %v117
  %427 = vmatpush1.msra.mxu0 %v116
  %428 = vmatprep.subr.mxu0 %v113
  %429 = vmatpush1.msra.mxu0 %v112
  %430 = vmatprep.subr.mxu0 %v109
  %431 = vmatpush1.msra.mxu0 %v108
  %432 = vmatprep.subr.mxu0 %v105
  %433 = vmatpush1.msra.mxu0 %v104
  %434 = vmatprep.subr.mxu0 %v101
  %435 = vmatpush1.msra.mxu0 %v100
  %436 = vmatprep.subr.mxu0 %v97
  %437 = vmatpush1.msra.mxu0 %v96
  %438 = vmatprep.subr.mxu0 0.0
  %439 = vmatpush2.msra.mxu0 0.0
  %440 = vmatprep.subr.mxu0 0.0
  %441 = vmatpush2.msra.mxu0 0.0
  %442 = vmatprep.subr.mxu0 0.0
  %443 = vmatpush2.msra.mxu0 0.0
  %444 = vmatprep.subr.mxu0 0.0
  %445 = vmatpush2.msra.mxu0 0.0
  %446 = vmatprep.subr.mxu0 0.0
  %447 = vmatpush2.msra.mxu0 0.0
  %448 = vmatprep.subr.mxu0 0.0
  %449 = vmatpush2.msra.mxu0 0.0
  %450 = vmatprep.subr.mxu0 0.0
  %451 = vmatpush2.msra.mxu0 0.0
  %452 = vmatprep.subr.mxu0 0.0
  %453 = vmatpush2.msra.mxu0 0.0
  %454 = vmatprep.subr.mxu0 0.0
  %455 = vmatpush2.msra.mxu0 0.0
  %456 = vmatprep.subr.mxu0 0.0
  %457 = vmatpush2.msra.mxu0 0.0
  %458 = vmatprep.subr.mxu0 0.0
  %459 = vmatpush2.msra.mxu0 0.0
  %460 = vmatprep.subr.mxu0 0.0
  %461 = vmatpush2.msra.mxu0 0.0
  %462 = vmatprep.subr.mxu0 0.0
  %463 = vmatpush2.msra.mxu0 0.0
  %464 = vmatprep.subr.mxu0 0.0
  %465 = vmatpush2.msra.mxu0 0.0
  %466 = vmatprep.subr.mxu0 0.0
  %467 = vmatpush2.msra.mxu0 0.0
  %468 = vmatprep.subr.mxu0 0.0
  %469 = vmatpush2.msra.mxu0 0.0
  %470 = vmatprep.mubr.f32.mxu0 0.0
  %471 = vmatmul.mubr.f32.gmra.mxu0 %v252
  %v472 = vpop.f32.mrf.mxu0
  %v473 = vadd.f32 0.0, %v472
  %v474 = vpop.f32.mrf.mxu0
  %v475 = vadd.f32 0.0, %v474
  %476 = vdwg.mxu0
  %477 = vmatprep.subr.mxu0 %v159
  %478 = vmatpush1.msra.mxu0 %v158
  %479 = vmatprep.subr.mxu0 %v155
  %480 = vmatpush1.msra.mxu0 %v154
  %481 = vmatprep.subr.mxu0 %v151
  %482 = vmatpush1.msra.mxu0 %v150
  %483 = vmatprep.subr.mxu0 %v147
  %484 = vmatpush1.msra.mxu0 %v146
  %485 = vmatprep.subr.mxu0 %v143
  %486 = vmatpush1.msra.mxu0 %v142
  %487 = vmatprep.subr.mxu0 %v139
  %488 = vmatpush1.msra.mxu0 %v138
  %489 = vmatprep.subr.mxu0 %v135
  %490 = vmatpush1.msra.mxu0 %v134
  %491 = vmatprep.subr.mxu0 %v131
  %492 = vmatpush1.msra.mxu0 %v130
  %493 = vmatprep.subr.mxu0 %v127
  %494 = vmatpush1.msra.mxu0 %v126
  %495 = vmatprep.subr.mxu0 %v123
  %496 = vmatpush1.msra.mxu0 %v122
  %497 = vmatprep.subr.mxu0 %v119
  %498 = vmatpush1.msra.mxu0 %v118
  %499 = vmatprep.subr.mxu0 %v115
  %500 = vmatpush1.msra.mxu0 %v114
  %501 = vmatprep.subr.mxu0 %v111
  %502 = vmatpush1.msra.mxu0 %v110
  %503 = vmatprep.subr.mxu0 %v107
  %504 = vmatpush1.msra.mxu0 %v106
  %505 = vmatprep.subr.mxu0 %v103
  %506 = vmatpush1.msra.mxu0 %v102
  %507 = vmatprep.subr.mxu0 %v99
  %508 = vmatpush1.msra.mxu0 %v98
  %509 = vmatprep.subr.mxu0 0.0
  %510 = vmatpush2.msra.mxu0 0.0
  %511 = vmatprep.subr.mxu0 0.0
  %512 = vmatpush2.msra.mxu0 0.0
  %513 = vmatprep.subr.mxu0 0.0
  %514 = vmatpush2.msra.mxu0 0.0
  %515 = vmatprep.subr.mxu0 0.0
  %516 = vmatpush2.msra.mxu0 0.0
  %517 = vmatprep.subr.mxu0 0.0
  %518 = vmatpush2.msra.mxu0 0.0
  %519 = vmatprep.subr.mxu0 0.0
  %520 = vmatpush2.msra.mxu0 0.0
  %521 = vmatprep.subr.mxu0 0.0
  %522 = vmatpush2.msra.mxu0 0.0
  %523 = vmatprep.subr.mxu0 0.0
  %524 = vmatpush2.msra.mxu0 0.0
  %525 = vmatprep.subr.mxu0 0.0
  %526 = vmatpush2.msra.mxu0 0.0
  %527 = vmatprep.subr.mxu0 0.0
  %528 = vmatpush2.msra.mxu0 0.0
  %529 = vmatprep.subr.mxu0 0.0
  %530 = vmatpush2.msra.mxu0 0.0
  %531 = vmatprep.subr.mxu0 0.0
  %532 = vmatpush2.msra.mxu0 0.0
  %533 = vmatprep.subr.mxu0 0.0
  %534 = vmatpush2.msra.mxu0 0.0
  %535 = vmatprep.subr.mxu0 0.0
  %536 = vmatpush2.msra.mxu0 0.0
  %537 = vmatprep.subr.mxu0 0.0
  %538 = vmatpush2.msra.mxu0 0.0
  %539 = vmatprep.subr.mxu0 0.0
  %540 = vmatpush2.msra.mxu0 0.0
  %541 = vmatprep.mubr.f32.mxu0 0.0
  %542 = vmatmul.mubr.f32.gmra.mxu0 %v252
  %v543 = vpop.f32.mrf.mxu0
  %v544 = vadd.f32 0.0, %v543
  %v545 = vpop.f32.mrf.mxu0
  %v546 = vadd.f32 0.0, %v545
  %547 = vdwg.mxu0
  %v549 = vlaneseq
  %v550 = vshrl.u32 %v549, 7
  %v551 = vsub.s32 0, %v550
  %v552 = vrot.slane %v224, %v551
  %v553 = vlaneseq
  %v554 = vshrl.u32 %v553, 7
  %v555 = vsub.s32 1, %v554
  %v556 = vrot.slane %v224, %v555
  %v557 = vlaneseq
  %v558 = vshrl.u32 %v557, 7
  %v559 = vsub.s32 2, %v558
  %v560 = vrot.slane %v224, %v559
  %v561 = vlaneseq
  %v562 = vshrl.u32 %v561, 7
  %v563 = vsub.s32 3, %v562
  %v564 = vrot.slane %v224, %v563
  %v569 = vadd.f32 %v552, %v473
  %v570 = vadd.f32 %v556, %v475
  %v571 = vadd.f32 %v560, %v544
  %v572 = vadd.f32 %v564, %v546
  %573 = vmatprep.subr.mxu0 %v221
  %574 = vmatpush1.msra.mxu0 %v220
  %575 = vmatprep.subr.mxu0 %v217
  %576 = vmatpush1.msra.mxu0 %v216
  %577 = vmatprep.subr.mxu0 %v213
  %578 = vmatpush1.msra.mxu0 %v212
  %579 = vmatprep.subr.mxu0 %v209
  %580 = vmatpush1.msra.mxu0 %v208
  %581 = vmatprep.subr.mxu0 %v205
  %582 = vmatpush1.msra.mxu0 %v204
  %583 = vmatprep.subr.mxu0 %v201
  %584 = vmatpush1.msra.mxu0 %v200
  %585 = vmatprep.subr.mxu0 %v197
  %586 = vmatpush1.msra.mxu0 %v196
  %587 = vmatprep.subr.mxu0 %v193
  %588 = vmatpush1.msra.mxu0 %v192
  %589 = vmatprep.subr.mxu0 %v189
  %590 = vmatpush1.msra.mxu0 %v188
  %591 = vmatprep.subr.mxu0 %v185
  %592 = vmatpush1.msra.mxu0 %v184
  %593 = vmatprep.subr.mxu0 %v181
  %594 = vmatpush1.msra.mxu0 %v180
  %595 = vmatprep.subr.mxu0 %v177
  %596 = vmatpush1.msra.mxu0 %v176
  %597 = vmatprep.subr.mxu0 %v173
  %598 = vmatpush1.msra.mxu0 %v172
  %599 = vmatprep.subr.mxu0 %v169
  %600 = vmatpush1.msra.mxu0 %v168
  %601 = vmatprep.subr.mxu0 %v165
  %602 = vmatpush1.msra.mxu0 %v164
  %603 = vmatprep.subr.mxu0 %v161
  %604 = vmatpush1.msra.mxu0 %v160
  %605 = vmatprep.subr.mxu0 0.0
  %606 = vmatpush2.msra.mxu0 0.0
  %607 = vmatprep.subr.mxu0 0.0
  %608 = vmatpush2.msra.mxu0 0.0
  %609 = vmatprep.subr.mxu0 0.0
  %610 = vmatpush2.msra.mxu0 0.0
  %611 = vmatprep.subr.mxu0 0.0
  %612 = vmatpush2.msra.mxu0 0.0
  %613 = vmatprep.subr.mxu0 0.0
  %614 = vmatpush2.msra.mxu0 0.0
  %615 = vmatprep.subr.mxu0 0.0
  %616 = vmatpush2.msra.mxu0 0.0
  %617 = vmatprep.subr.mxu0 0.0
  %618 = vmatpush2.msra.mxu0 0.0
  %619 = vmatprep.subr.mxu0 0.0
  %620 = vmatpush2.msra.mxu0 0.0
  %621 = vmatprep.subr.mxu0 0.0
  %622 = vmatpush2.msra.mxu0 0.0
  %623 = vmatprep.subr.mxu0 0.0
  %624 = vmatpush2.msra.mxu0 0.0
  %625 = vmatprep.subr.mxu0 0.0
  %626 = vmatpush2.msra.mxu0 0.0
  %627 = vmatprep.subr.mxu0 0.0
  %628 = vmatpush2.msra.mxu0 0.0
  %629 = vmatprep.subr.mxu0 0.0
  %630 = vmatpush2.msra.mxu0 0.0
  %631 = vmatprep.subr.mxu0 0.0
  %632 = vmatpush2.msra.mxu0 0.0
  %633 = vmatprep.subr.mxu0 0.0
  %634 = vmatpush2.msra.mxu0 0.0
  %635 = vmatprep.subr.mxu0 0.0
  %636 = vmatpush2.msra.mxu0 0.0
  %637 = vmatprep.mubr.f32.mxu0 0.0
  %638 = vmatmul.mubr.f32.gmra.mxu0 0.0
  %v639 = vpop.f32.mrf.mxu0
  %v640 = vadd.f32 0.0, %v639
  %v641 = vpop.f32.mrf.mxu0
  %v642 = vadd.f32 0.0, %v641
  %643 = vdwg.mxu0
  %644 = vmatprep.subr.mxu0 %v223
  %645 = vmatpush1.msra.mxu0 %v222
  %646 = vmatprep.subr.mxu0 %v219
  %647 = vmatpush1.msra.mxu0 %v218
  %648 = vmatprep.subr.mxu0 %v215
  %649 = vmatpush1.msra.mxu0 %v214
  %650 = vmatprep.subr.mxu0 %v211
  %651 = vmatpush1.msra.mxu0 %v210
  %652 = vmatprep.subr.mxu0 %v207
  %653 = vmatpush1.msra.mxu0 %v206
  %654 = vmatprep.subr.mxu0 %v203
  %655 = vmatpush1.msra.mxu0 %v202
  %656 = vmatprep.subr.mxu0 %v199
  %657 = vmatpush1.msra.mxu0 %v198
  %658 = vmatprep.subr.mxu0 %v195
  %659 = vmatpush1.msra.mxu0 %v194
  %660 = vmatprep.subr.mxu0 %v191
  %661 = vmatpush1.msra.mxu0 %v190
  %662 = vmatprep.subr.mxu0 %v187
  %663 = vmatpush1.msra.mxu0 %v186
  %664 = vmatprep.subr.mxu0 %v183
  %665 = vmatpush1.msra.mxu0 %v182
  %666 = vmatprep.subr.mxu0 %v179
  %667 = vmatpush1.msra.mxu0 %v178
  %668 = vmatprep.subr.mxu0 %v175
  %669 = vmatpush1.msra.mxu0 %v174
  %670 = vmatprep.subr.mxu0 %v171
  %671 = vmatpush1.msra.mxu0 %v170
  %672 = vmatprep.subr.mxu0 %v167
  %673 = vmatpush1.msra.mxu0 %v166
  %674 = vmatprep.subr.mxu0 %v163
  %675 = vmatpush1.msra.mxu0 %v162
  %676 = vmatprep.subr.mxu0 0.0
  %677 = vmatpush2.msra.mxu0 0.0
  %678 = vmatprep.subr.mxu0 0.0
  %679 = vmatpush2.msra.mxu0 0.0
  %680 = vmatprep.subr.mxu0 0.0
  %681 = vmatpush2.msra.mxu0 0.0
  %682 = vmatprep.subr.mxu0 0.0
  %683 = vmatpush2.msra.mxu0 0.0
  %684 = vmatprep.subr.mxu0 0.0
  %685 = vmatpush2.msra.mxu0 0.0
  %686 = vmatprep.subr.mxu0 0.0
  %687 = vmatpush2.msra.mxu0 0.0
  %688 = vmatprep.subr.mxu0 0.0
  %689 = vmatpush2.msra.mxu0 0.0
  %690 = vmatprep.subr.mxu0 0.0
  %691 = vmatpush2.msra.mxu0 0.0
  %692 = vmatprep.subr.mxu0 0.0
  %693 = vmatpush2.msra.mxu0 0.0
  %694 = vmatprep.subr.mxu0 0.0
  %695 = vmatpush2.msra.mxu0 0.0
  %696 = vmatprep.subr.mxu0 0.0
  %697 = vmatpush2.msra.mxu0 0.0
  %698 = vmatprep.subr.mxu0 0.0
  %699 = vmatpush2.msra.mxu0 0.0
  %700 = vmatprep.subr.mxu0 0.0
  %701 = vmatpush2.msra.mxu0 0.0
  %702 = vmatprep.subr.mxu0 0.0
  %703 = vmatpush2.msra.mxu0 0.0
  %704 = vmatprep.subr.mxu0 0.0
  %705 = vmatpush2.msra.mxu0 0.0
  %706 = vmatprep.subr.mxu0 0.0
  %707 = vmatpush2.msra.mxu0 0.0
  %708 = vmatprep.mubr.f32.mxu0 0.0
  %709 = vmatmul.mubr.f32.gmra.mxu0 0.0
  %v710 = vpop.f32.mrf.mxu0
  %v711 = vadd.f32 0.0, %v710
  %v712 = vpop.f32.mrf.mxu0
  %v713 = vadd.f32 0.0, %v712
  %714 = vdwg.mxu0
  %v715 = vadd.f32 %v569, %v640
  %v716 = vadd.f32 %v570, %v642
  %v717 = vadd.f32 %v571, %v711
  %v718 = vadd.f32 %v572, %v713
  %v719 = vxor.u32 %v402, 2147483648
  %v720 = vxor.u32 %v403, 2147483648
  %v721 = vxor.u32 %v404, 2147483648
  %v722 = vmul.f32 %v719, 1.442695
  %v723 = vpow.pop %v722
  %v724 = vmul.f32 %v720, 1.442695
  %v725 = vpow.pop %v724
  %v726 = vmul.f32 %v721, 1.442695
  %v727 = vpow.pop %v726
  %v728 = vadd.f32 %v723, 1.0
  %v729 = vadd.f32 %v725, 1.0
  %v730 = vadd.f32 %v727, 1.0
  %v731 = vrcp.pop %v728
  %v732 = vmul.f32 1.0, %v731
  %v733 = vrcp.pop %v729
  %v734 = vmul.f32 1.0, %v733
  %v735 = vrcp.pop %v730
  %v736 = vmul.f32 1.0, %v735
  %v737 = vtanh.pop %v405
  %v738 = vmul.f32 %v734, %v250
  %v739 = vmul.f32 %v732, %v737
  %v740 = vadd.f32 %v738, %v739
  %v741 = vtanh.pop %v740
  %v742 = vmul.f32 %v736, %v741
  %v743 = vxor.u32 %v715, 2147483648
  %v744 = vxor.u32 %v716, 2147483648
  %v745 = vxor.u32 %v717, 2147483648
  %v746 = vmul.f32 %v743, 1.442695
  %v747 = vpow.pop %v746
  %v748 = vmul.f32 %v744, 1.442695
  %v749 = vpow.pop %v748
  %v750 = vmul.f32 %v745, 1.442695
  %v751 = vpow.pop %v750
  %v752 = vadd.f32 %v747, 1.0
  %v753 = vadd.f32 %v749, 1.0
  %v754 = vadd.f32 %v751, 1.0
  %v755 = vrcp.pop %v752
  %v756 = vmul.f32 1.0, %v755
  %v757 = vrcp.pop %v753
  %v758 = vmul.f32 1.0, %v757
  %v759 = vrcp.pop %v754
  %v760 = vmul.f32 1.0, %v759
  %v761 = vtanh.pop %v718
  %v762 = vmul.f32 %v758, 0.0
  %v763 = vmul.f32 %v756, %v761
  %v764 = vadd.f32 %v762, %v763
  %v765 = vtanh.pop %v764
  %v766 = vmul.f32 %v760, %v765
  %s767 = smul.u32 2, 4
  %s768 = smul.addr %s767, 8
  %s769 = scalar_lea.vmem %s0, %s768
  %v770 = vld [vmem:[%s769] sm:$0xff]
  %v771 = vld [vmem:[%s769 + $0x8] sm:$0xff]
  %v772 = vld [vmem:[%s769 + $0x10] sm:$0xff]
  %v773 = vld [vmem:[%s769 + $0x18] sm:$0xff]
  %774 = vmatprep.subr.mxu0 %v93
  %775 = vmatpush1.msra.mxu0 %v92
  %776 = vmatprep.subr.mxu0 %v89
  %777 = vmatpush1.msra.mxu0 %v88
  %778 = vmatprep.subr.mxu0 %v85
  %779 = vmatpush1.msra.mxu0 %v84
  %780 = vmatprep.subr.mxu0 %v81
  %781 = vmatpush1.msra.mxu0 %v80
  %782 = vmatprep.subr.mxu0 %v77
  %783 = vmatpush1.msra.mxu0 %v76
  %784 = vmatprep.subr.mxu0 %v73
  %785 = vmatpush1.msra.mxu0 %v72
  %786 = vmatprep.subr.mxu0 %v69
  %787 = vmatpush1.msra.mxu0 %v68
  %788 = vmatprep.subr.mxu0 %v65
  %789 = vmatpush1.msra.mxu0 %v64
  %790 = vmatprep.subr.mxu0 %v61
  %791 = vmatpush1.msra.mxu0 %v60
  %792 = vmatprep.subr.mxu0 %v57
  %793 = vmatpush1.msra.mxu0 %v56
  %794 = vmatprep.subr.mxu0 %v53
  %795 = vmatpush1.msra.mxu0 %v52
  %796 = vmatprep.subr.mxu0 %v49
  %797 = vmatpush1.msra.mxu0 %v48
  %798 = vmatprep.subr.mxu0 %v45
  %799 = vmatpush1.msra.mxu0 %v44
  %800 = vmatprep.subr.mxu0 %v41
  %801 = vmatpush1.msra.mxu0 %v40
  %802 = vmatprep.subr.mxu0 %v37
  %803 = vmatpush1.msra.mxu0 %v36
  %804 = vmatprep.subr.mxu0 %v33
  %805 = vmatpush1.msra.mxu0 %v32
  %806 = vmatprep.subr.mxu0 0.0
  %807 = vmatpush2.msra.mxu0 0.0
  %808 = vmatprep.subr.mxu0 0.0
  %809 = vmatpush2.msra.mxu0 0.0
  %810 = vmatprep.subr.mxu0 0.0
  %811 = vmatpush2.msra.mxu0 0.0
  %812 = vmatprep.subr.mxu0 0.0
  %813 = vmatpush2.msra.mxu0 0.0
  %814 = vmatprep.subr.mxu0 0.0
  %815 = vmatpush2.msra.mxu0 0.0
  %816 = vmatprep.subr.mxu0 0.0
  %817 = vmatpush2.msra.mxu0 0.0
  %818 = vmatprep.subr.mxu0 0.0
  %819 = vmatpush2.msra.mxu0 0.0
  %820 = vmatprep.subr.mxu0 0.0
  %821 = vmatpush2.msra.mxu0 0.0
  %822 = vmatprep.subr.mxu0 0.0
  %823 = vmatpush2.msra.mxu0 0.0
  %824 = vmatprep.subr.mxu0 0.0
  %825 = vmatpush2.msra.mxu0 0.0
  %826 = vmatprep.subr.mxu0 0.0
  %827 = vmatpush2.msra.mxu0 0.0
  %828 = vmatprep.subr.mxu0 0.0
  %829 = vmatpush2.msra.mxu0 0.0
  %830 = vmatprep.subr.mxu0 0.0
  %831 = vmatpush2.msra.mxu0 0.0
  %832 = vmatprep.subr.mxu0 0.0
  %833 = vmatpush2.msra.mxu0 0.0
  %834 = vmatprep.subr.mxu0 0.0
  %835 = vmatpush2.msra.mxu0 0.0
  %836 = vmatprep.subr.mxu0 0.0
  %837 = vmatpush2.msra.mxu0 0.0
  %838 = vmatprep.mubr.f32.mxu0 0.0
  %839 = vmatmul.mubr.f32.gmra.mxu0 %v742
  %v840 = vpop.f32.mrf.mxu0
  %v841 = vadd.f32 0.0, %v840
  %v842 = vpop.f32.mrf.mxu0
  %v843 = vadd.f32 0.0, %v842
  %844 = vdwg.mxu0
  %845 = vmatprep.subr.mxu0 %v95
  %846 = vmatpush1.msra.mxu0 %v94
  %847 = vmatprep.subr.mxu0 %v91
  %848 = vmatpush1.msra.mxu0 %v90
  %849 = vmatprep.subr.mxu0 %v87
  %850 = vmatpush1.msra.mxu0 %v86
  %851 = vmatprep.subr.mxu0 %v83
  %852 = vmatpush1.msra.mxu0 %v82
  %853 = vmatprep.subr.mxu0 %v79
  %854 = vmatpush1.msra.mxu0 %v78
  %855 = vmatprep.subr.mxu0 %v75
  %856 = vmatpush1.msra.mxu0 %v74
  %857 = vmatprep.subr.mxu0 %v71
  %858 = vmatpush1.msra.mxu0 %v70
  %859 = vmatprep.subr.mxu0 %v67
  %860 = vmatpush1.msra.mxu0 %v66
  %861 = vmatprep.subr.mxu0 %v63
  %862 = vmatpush1.msra.mxu0 %v62
  %863 = vmatprep.subr.mxu0 %v59
  %864 = vmatpush1.msra.mxu0 %v58
  %865 = vmatprep.subr.mxu0 %v55
  %866 = vmatpush1.msra.mxu0 %v54
  %867 = vmatprep.subr.mxu0 %v51
  %868 = vmatpush1.msra.mxu0 %v50
  %869 = vmatprep.subr.mxu0 %v47
  %870 = vmatpush1.msra.mxu0 %v46
  %871 = vmatprep.subr.mxu0 %v43
  %872 = vmatpush1.msra.mxu0 %v42
  %873 = vmatprep.subr.mxu0 %v39
  %874 = vmatpush1.msra.mxu0 %v38
  %875 = vmatprep.subr.mxu0 %v35
  %876 = vmatpush1.msra.mxu0 %v34
  %877 = vmatprep.subr.mxu0 0.0
  %878 = vmatpush2.msra.mxu0 0.0
  %879 = vmatprep.subr.mxu0 0.0
  %880 = vmatpush2.msra.mxu0 0.0
  %881 = vmatprep.subr.mxu0 0.0
  %882 = vmatpush2.msra.mxu0 0.0
  %883 = vmatprep.subr.mxu0 0.0
  %884 = vmatpush2.msra.mxu0 0.0
  %885 = vmatprep.subr.mxu0 0.0
  %886 = vmatpush2.msra.mxu0 0.0
  %887 = vmatprep.subr.mxu0 0.0
  %888 = vmatpush2.msra.mxu0 0.0
  %889 = vmatprep.subr.mxu0 0.0
  %890 = vmatpush2.msra.mxu0 0.0
  %891 = vmatprep.subr.mxu0 0.0
  %892 = vmatpush2.msra.mxu0 0.0
  %893 = vmatprep.subr.mxu0 0.0
  %894 = vmatpush2.msra.mxu0 0.0
  %895 = vmatprep.subr.mxu0 0.0
  %896 = vmatpush2.msra.mxu0 0.0
  %897 = vmatprep.subr.mxu0 0.0
  %898 = vmatpush2.msra.mxu0 0.0
  %899 = vmatprep.subr.mxu0 0.0
  %900 = vmatpush2.msra.mxu0 0.0
  %901 = vmatprep.subr.mxu0 0.0
  %902 = vmatpush2.msra.mxu0 0.0
  %903 = vmatprep.subr.mxu0 0.0
  %904 = vmatpush2.msra.mxu0 0.0
  %905 = vmatprep.subr.mxu0 0.0
  %906 = vmatpush2.msra.mxu0 0.0
  %907 = vmatprep.subr.mxu0 0.0
  %908 = vmatpush2.msra.mxu0 0.0
  %909 = vmatprep.mubr.f32.mxu0 0.0
  %910 = vmatmul.mubr.f32.gmra.mxu0 %v742
  %v911 = vpop.f32.mrf.mxu0
  %v912 = vadd.f32 0.0, %v911
  %v913 = vpop.f32.mrf.mxu0
  %v914 = vadd.f32 0.0, %v913
  %915 = vdwg.mxu0
  %v916 = vadd.f32 %v770, %v841
  %v917 = vadd.f32 %v771, %v843
  %v918 = vadd.f32 %v772, %v912
  %v919 = vadd.f32 %v773, %v914
  %920 = vmatprep.subr.mxu0 %v157
  %921 = vmatpush1.msra.mxu0 %v156
  %922 = vmatprep.subr.mxu0 %v153
  %923 = vmatpush1.msra.mxu0 %v152
  %924 = vmatprep.subr.mxu0 %v149
  %925 = vmatpush1.msra.mxu0 %v148
  %926 = vmatprep.subr.mxu0 %v145
  %927 = vmatpush1.msra.mxu0 %v144
  %928 = vmatprep.subr.mxu0 %v141
  %929 = vmatpush1.msra.mxu0 %v140
  %930 = vmatprep.subr.mxu0 %v137
  %931 = vmatpush1.msra.mxu0 %v136
  %932 = vmatprep.subr.mxu0 %v133
  %933 = vmatpush1.msra.mxu0 %v132
  %934 = vmatprep.subr.mxu0 %v129
  %935 = vmatpush1.msra.mxu0 %v128
  %936 = vmatprep.subr.mxu0 %v125
  %937 = vmatpush1.msra.mxu0 %v124
  %938 = vmatprep.subr.mxu0 %v121
  %939 = vmatpush1.msra.mxu0 %v120
  %940 = vmatprep.subr.mxu0 %v117
  %941 = vmatpush1.msra.mxu0 %v116
  %942 = vmatprep.subr.mxu0 %v113
  %943 = vmatpush1.msra.mxu0 %v112
  %944 = vmatprep.subr.mxu0 %v109
  %945 = vmatpush1.msra.mxu0 %v108
  %946 = vmatprep.subr.mxu0 %v105
  %947 = vmatpush1.msra.mxu0 %v104
  %948 = vmatprep.subr.mxu0 %v101
  %949 = vmatpush1.msra.mxu0 %v100
  %950 = vmatprep.subr.mxu0 %v97
  %951 = vmatpush1.msra.mxu0 %v96
  %952 = vmatprep.subr.mxu0 0.0
  %953 = vmatpush2.msra.mxu0 0.0
  %954 = vmatprep.subr.mxu0 0.0
  %955 = vmatpush2.msra.mxu0 0.0
  %956 = vmatprep.subr.mxu0 0.0
  %957 = vmatpush2.msra.mxu0 0.0
  %958 = vmatprep.subr.mxu0 0.0
  %959 = vmatpush2.msra.mxu0 0.0
  %960 = vmatprep.subr.mxu0 0.0
  %961 = vmatpush2.msra.mxu0 0.0
  %962 = vmatprep.subr.mxu0 0.0
  %963 = vmatpush2.msra.mxu0 0.0
  %964 = vmatprep.subr.mxu0 0.0
  %965 = vmatpush2.msra.mxu0 0.0
  %966 = vmatprep.subr.mxu0 0.0
  %967 = vmatpush2.msra.mxu0 0.0
  %968 = vmatprep.subr.mxu0 0.0
  %969 = vmatpush2.msra.mxu0 0.0
  %970 = vmatprep.subr.mxu0 0.0
  %971 = vmatpush2.msra.mxu0 0.0
  %972 = vmatprep.subr.mxu0 0.0
  %973 = vmatpush2.msra.mxu0 0.0
  %974 = vmatprep.subr.mxu0 0.0
  %975 = vmatpush2.msra.mxu0 0.0
  %976 = vmatprep.subr.mxu0 0.0
  %977 = vmatpush2.msra.mxu0 0.0
  %978 = vmatprep.subr.mxu0 0.0
  %979 = vmatpush2.msra.mxu0 0.0
  %980 = vmatprep.subr.mxu0 0.0
  %981 = vmatpush2.msra.mxu0 0.0
  %982 = vmatprep.subr.mxu0 0.0
  %983 = vmatpush2.msra.mxu0 0.0
  %984 = vmatprep.mubr.f32.mxu0 0.0
  %985 = vmatmul.mubr.f32.gmra.mxu0 %v742
  %v986 = vpop.f32.mrf.mxu0
  %v987 = vadd.f32 0.0, %v986
  %v988 = vpop.f32.mrf.mxu0
  %v989 = vadd.f32 0.0, %v988
  %990 = vdwg.mxu0
  %991 = vmatprep.subr.mxu0 %v159
  %992 = vmatpush1.msra.mxu0 %v158
  %993 = vmatprep.subr.mxu0 %v155
  %994 = vmatpush1.msra.mxu0 %v154
  %995 = vmatprep.subr.mxu0 %v151
  %996 = vmatpush1.msra.mxu0 %v150
  %997 = vmatprep.subr.mxu0 %v147
  %998 = vmatpush1.msra.mxu0 %v146
  %999 = vmatprep.subr.mxu0 %v143
  %1000 = vmatpush1.msra.mxu0 %v142
  %1001 = vmatprep.subr.mxu0 %v139
  %1002 = vmatpush1.msra.mxu0 %v138
  %1003 = vmatprep.subr.mxu0 %v135
  %1004 = vmatpush1.msra.mxu0 %v134
  %1005 = vmatprep.subr.mxu0 %v131
  %1006 = vmatpush1.msra.mxu0 %v130
  %1007 = vmatprep.subr.mxu0 %v127
  %1008 = vmatpush1.msra.mxu0 %v126
  %1009 = vmatprep.subr.mxu0 %v123
  %1010 = vmatpush1.msra.mxu0 %v122
  %1011 = vmatprep.subr.mxu0 %v119
  %1012 = vmatpush1.msra.mxu0 %v118
  %1013 = vmatprep.subr.mxu0 %v115
  %1014 = vmatpush1.msra.mxu0 %v114
  %1015 = vmatprep.subr.mxu0 %v111
  %1016 = vmatpush1.msra.mxu0 %v110
  %1017 = vmatprep.subr.mxu0 %v107
  %1018 = vmatpush1.msra.mxu0 %v106
  %1019 = vmatprep.subr.mxu0 %v103
  %1020 = vmatpush1.msra.mxu0 %v102
  %1021 = vmatprep.subr.mxu0 %v99
  %1022 = vmatpush1.msra.mxu0 %v98
  %1023 = vmatprep.subr.mxu0 0.0
  %1024 = vmatpush2.msra.mxu0 0.0
  %1025 = vmatprep.subr.mxu0 0.0
  %1026 = vmatpush2.msra.mxu0 0.0
  %1027 = vmatprep.subr.mxu0 0.0
  %1028 = vmatpush2.msra.mxu0 0.0
  %1029 = vmatprep.subr.mxu0 0.0
  %1030 = vmatpush2.msra.mxu0 0.0
  %1031 = vmatprep.subr.mxu0 0.0
  %1032 = vmatpush2.msra.mxu0 0.0
  %1033 = vmatprep.subr.mxu0 0.0
  %1034 = vmatpush2.msra.mxu0 0.0
  %1035 = vmatprep.subr.mxu0 0.0
  %1036 = vmatpush2.msra.mxu0 0.0
  %1037 = vmatprep.subr.mxu0 0.0
  %1038 = vmatpush2.msra.mxu0 0.0
  %1039 = vmatprep.subr.mxu0 0.0
  %1040 = vmatpush2.msra.mxu0 0.0
  %1041 = vmatprep.subr.mxu0 0.0
  %1042 = vmatpush2.msra.mxu0 0.0
  %1043 = vmatprep.subr.mxu0 0.0
  %1044 = vmatpush2.msra.mxu0 0.0
  %1045 = vmatprep.subr.mxu0 0.0
  %1046 = vmatpush2.msra.mxu0 0.0
  %1047 = vmatprep.subr.mxu0 0.0
  %1048 = vmatpush2.msra.mxu0 0.0
  %1049 = vmatprep.subr.mxu0 0.0
  %1050 = vmatpush2.msra.mxu0 0.0
  %1051 = vmatprep.subr.mxu0 0.0
  %1052 = vmatpush2.msra.mxu0 0.0
  %1053 = vmatprep.subr.mxu0 0.0
  %1054 = vmatpush2.msra.mxu0 0.0
  %1055 = vmatprep.mubr.f32.mxu0 0.0
  %1056 = vmatmul.mubr.f32.gmra.mxu0 %v742
  %v1057 = vpop.f32.mrf.mxu0
  %v1058 = vadd.f32 0.0, %v1057
  %v1059 = vpop.f32.mrf.mxu0
  %v1060 = vadd.f32 0.0, %v1059
  %1061 = vdwg.mxu0
  %v1062 = vadd.f32 %v552, %v987
  %v1063 = vadd.f32 %v556, %v989
  %v1064 = vadd.f32 %v560, %v1058
  %v1065 = vadd.f32 %v564, %v1060
  %1066 = vmatprep.subr.mxu0 %v221
  %1067 = vmatpush1.msra.mxu0 %v220
  %1068 = vmatprep.subr.mxu0 %v217
  %1069 = vmatpush1.msra.mxu0 %v216
  %1070 = vmatprep.subr.mxu0 %v213
  %1071 = vmatpush1.msra.mxu0 %v212
  %1072 = vmatprep.subr.mxu0 %v209
  %1073 = vmatpush1.msra.mxu0 %v208
  %1074 = vmatprep.subr.mxu0 %v205
  %1075 = vmatpush1.msra.mxu0 %v204
  %1076 = vmatprep.subr.mxu0 %v201
  %1077 = vmatpush1.msra.mxu0 %v200
  %1078 = vmatprep.subr.mxu0 %v197
  %1079 = vmatpush1.msra.mxu0 %v196
  %1080 = vmatprep.subr.mxu0 %v193
  %1081 = vmatpush1.msra.mxu0 %v192
  %1082 = vmatprep.subr.mxu0 %v189
  %1083 = vmatpush1.msra.mxu0 %v188
  %1084 = vmatprep.subr.mxu0 %v185
  %1085 = vmatpush1.msra.mxu0 %v184
  %1086 = vmatprep.subr.mxu0 %v181
  %1087 = vmatpush1.msra.mxu0 %v180
  %1088 = vmatprep.subr.mxu0 %v177
  %1089 = vmatpush1.msra.mxu0 %v176
  %1090 = vmatprep.subr.mxu0 %v173
  %1091 = vmatpush1.msra.mxu0 %v172
  %1092 = vmatprep.subr.mxu0 %v169
  %1093 = vmatpush1.msra.mxu0 %v168
  %1094 = vmatprep.subr.mxu0 %v165
  %1095 = vmatpush1.msra.mxu0 %v164
  %1096 = vmatprep.subr.mxu0 %v161
  %1097 = vmatpush1.msra.mxu0 %v160
  %1098 = vmatprep.subr.mxu0 0.0
  %1099 = vmatpush2.msra.mxu0 0.0
  %1100 = vmatprep.subr.mxu0 0.0
  %1101 = vmatpush2.msra.mxu0 0.0
  %1102 = vmatprep.subr.mxu0 0.0
  %1103 = vmatpush2.msra.mxu0 0.0
  %1104 = vmatprep.subr.mxu0 0.0
  %1105 = vmatpush2.msra.mxu0 0.0
  %1106 = vmatprep.subr.mxu0 0.0
  %1107 = vmatpush2.msra.mxu0 0.0
  %1108 = vmatprep.subr.mxu0 0.0
  %1109 = vmatpush2.msra.mxu0 0.0
  %1110 = vmatprep.subr.mxu0 0.0
  %1111 = vmatpush2.msra.mxu0 0.0
  %1112 = vmatprep.subr.mxu0 0.0
  %1113 = vmatpush2.msra.mxu0 0.0
  %1114 = vmatprep.subr.mxu0 0.0
  %1115 = vmatpush2.msra.mxu0 0.0
  %1116 = vmatprep.subr.mxu0 0.0
  %1117 = vmatpush2.msra.mxu0 0.0
  %1118 = vmatprep.subr.mxu0 0.0
  %1119 = vmatpush2.msra.mxu0 0.0
  %1120 = vmatprep.subr.mxu0 0.0
  %1121 = vmatpush2.msra.mxu0 0.0
  %1122 = vmatprep.subr.mxu0 0.0
  %1123 = vmatpush2.msra.mxu0 0.0
  %1124 = vmatprep.subr.mxu0 0.0
  %1125 = vmatpush2.msra.mxu0 0.0
  %1126 = vmatprep.subr.mxu0 0.0
  %1127 = vmatpush2.msra.mxu0 0.0
  %1128 = vmatprep.subr.mxu0 0.0
  %1129 = vmatpush2.msra.mxu0 0.0
  %1130 = vmatprep.mubr.f32.mxu0 0.0
  %1131 = vmatmul.mubr.f32.gmra.mxu0 %v766
  %v1132 = vpop.f32.mrf.mxu0
  %v1133 = vadd.f32 0.0, %v1132
  %v1134 = vpop.f32.mrf.mxu0
  %v1135 = vadd.f32 0.0, %v1134
  %1136 = vdwg.mxu0
  %1137 = vmatprep.subr.mxu0 %v223
  %1138 = vmatpush1.msra.mxu0 %v222
  %1139 = vmatprep.subr.mxu0 %v219
  %1140 = vmatpush1.msra.mxu0 %v218
  %1141 = vmatprep.subr.mxu0 %v215
  %1142 = vmatpush1.msra.mxu0 %v214
  %1143 = vmatprep.subr.mxu0 %v211
  %1144 = vmatpush1.msra.mxu0 %v210
  %1145 = vmatprep.subr.mxu0 %v207
  %1146 = vmatpush1.msra.mxu0 %v206
  %1147 = vmatprep.subr.mxu0 %v203
  %1148 = vmatpush1.msra.mxu0 %v202
  %1149 = vmatprep.subr.mxu0 %v199
  %1150 = vmatpush1.msra.mxu0 %v198
  %1151 = vmatprep.subr.mxu0 %v195
  %1152 = vmatpush1.msra.mxu0 %v194
  %1153 = vmatprep.subr.mxu0 %v191
  %1154 = vmatpush1.msra.mxu0 %v190
  %1155 = vmatprep.subr.mxu0 %v187
  %1156 = vmatpush1.msra.mxu0 %v186
  %1157 = vmatprep.subr.mxu0 %v183
  %1158 = vmatpush1.msra.mxu0 %v182
  %1159 = vmatprep.subr.mxu0 %v179
  %1160 = vmatpush1.msra.mxu0 %v178
  %1161 = vmatprep.subr.mxu0 %v175
  %1162 = vmatpush1.msra.mxu0 %v174
  %1163 = vmatprep.subr.mxu0 %v171
  %1164 = vmatpush1.msra.mxu0 %v170
  %1165 = vmatprep.subr.mxu0 %v167
  %1166 = vmatpush1.msra.mxu0 %v166
  %1167 = vmatprep.subr.mxu0 %v163
  %1168 = vmatpush1.msra.mxu0 %v162
  %1169 = vmatprep.subr.mxu0 0.0
  %1170 = vmatpush2.msra.mxu0 0.0
  %1171 = vmatprep.subr.mxu0 0.0
  %1172 = vmatpush2.msra.mxu0 0.0
  %1173 = vmatprep.subr.mxu0 0.0
  %1174 = vmatpush2.msra.mxu0 0.0
  %1175 = vmatprep.subr.mxu0 0.0
  %1176 = vmatpush2.msra.mxu0 0.0
  %1177 = vmatprep.subr.mxu0 0.0
  %1178 = vmatpush2.msra.mxu0 0.0
  %1179 = vmatprep.subr.mxu0 0.0
  %1180 = vmatpush2.msra.mxu0 0.0
  %1181 = vmatprep.subr.mxu0 0.0
  %1182 = vmatpush2.msra.mxu0 0.0
  %1183 = vmatprep.subr.mxu0 0.0
  %1184 = vmatpush2.msra.mxu0 0.0
  %1185 = vmatprep.subr.mxu0 0.0
  %1186 = vmatpush2.msra.mxu0 0.0
  %1187 = vmatprep.subr.mxu0 0.0
  %1188 = vmatpush2.msra.mxu0 0.0
  %1189 = vmatprep.subr.mxu0 0.0
  %1190 = vmatpush2.msra.mxu0 0.0
  %1191 = vmatprep.subr.mxu0 0.0
  %1192 = vmatpush2.msra.mxu0 0.0
  %1193 = vmatprep.subr.mxu0 0.0
  %1194 = vmatpush2.msra.mxu0 0.0
  %1195 = vmatprep.subr.mxu0 0.0
  %1196 = vmatpush2.msra.mxu0 0.0
  %1197 = vmatprep.subr.mxu0 0.0
  %1198 = vmatpush2.msra.mxu0 0.0
  %1199 = vmatprep.subr.mxu0 0.0
  %1200 = vmatpush2.msra.mxu0 0.0
  %1201 = vmatprep.mubr.f32.mxu0 0.0
  %1202 = vmatmul.mubr.f32.gmra.mxu0 %v766
  %v1203 = vpop.f32.mrf.mxu0
  %v1204 = vadd.f32 0.0, %v1203
  %v1205 = vpop.f32.mrf.mxu0
  %v1206 = vadd.f32 0.0, %v1205
  %1207 = vdwg.mxu0
  %v1208 = vadd.f32 %v1062, %v1133
  %v1209 = vadd.f32 %v1063, %v1135
  %v1210 = vadd.f32 %v1064, %v1204
  %v1211 = vadd.f32 %v1065, %v1206
  %v1212 = vxor.u32 %v916, 2147483648
  %v1213 = vxor.u32 %v917, 2147483648
  %v1214 = vxor.u32 %v918, 2147483648
  %v1215 = vmul.f32 %v1212, 1.442695
  %v1216 = vpow.pop %v1215
  %v1217 = vmul.f32 %v1213, 1.442695
  %v1218 = vpow.pop %v1217
  %v1219 = vmul.f32 %v1214, 1.442695
  %v1220 = vpow.pop %v1219
  %v1221 = vadd.f32 %v1216, 1.0
  %v1222 = vadd.f32 %v1218, 1.0
  %v1223 = vadd.f32 %v1220, 1.0
  %v1224 = vrcp.pop %v1221
  %v1225 = vmul.f32 1.0, %v1224
  %v1226 = vrcp.pop %v1222
  %v1227 = vmul.f32 1.0, %v1226
  %v1228 = vrcp.pop %v1223
  %v1229 = vmul.f32 1.0, %v1228
  %v1230 = vtanh.pop %v919
  %v1231 = vmul.f32 %v1227, %v740
  %v1232 = vmul.f32 %v1225, %v1230
  %v1233 = vadd.f32 %v1231, %v1232
  %v1234 = vtanh.pop %v1233
  %v1235 = vmul.f32 %v1229, %v1234
  %v1236 = vxor.u32 %v1208, 2147483648
  %v1237 = vxor.u32 %v1209, 2147483648
  %v1238 = vxor.u32 %v1210, 2147483648
  %v1239 = vmul.f32 %v1236, 1.442695
  %v1240 = vpow.pop %v1239
  %v1241 = vmul.f32 %v1237, 1.442695
  %v1242 = vpow.pop %v1241
  %v1243 = vmul.f32 %v1238, 1.442695
  %v1244 = vpow.pop %v1243
  %v1245 = vadd.f32 %v1240, 1.0
  %v1246 = vadd.f32 %v1242, 1.0
  %v1247 = vadd.f32 %v1244, 1.0
  %v1248 = vrcp.pop %v1245
  %v1249 = vmul.f32 1.0, %v1248
  %v1250 = vrcp.pop %v1246
  %v1251 = vmul.f32 1.0, %v1250
  %v1252 = vrcp.pop %v1247
  %v1253 = vmul.f32 1.0, %v1252
  %v1254 = vtanh.pop %v1211
  %v1255 = vmul.f32 %v1251, %v764
  %v1256 = vmul.f32 %v1249, %v1254
  %v1257 = vadd.f32 %v1255, %v1256
  %v1258 = vtanh.pop %v1257
  %v1259 = vmul.f32 %v1253, %v1258
  %s1260 = smul.u32 3, 4
  %s1261 = smul.addr %s1260, 8
  %s1262 = scalar_lea.vmem %s0, %s1261
  %v1263 = vld [vmem:[%s1262] sm:$0xff]
  %v1264 = vld [vmem:[%s1262 + $0x8] sm:$0xff]
  %v1265 = vld [vmem:[%s1262 + $0x10] sm:$0xff]
  %v1266 = vld [vmem:[%s1262 + $0x18] sm:$0xff]
  %1267 = vmatprep.subr.mxu0 %v93
  %1268 = vmatpush1.msra.mxu0 %v92
  %1269 = vmatprep.subr.mxu0 %v89
  %1270 = vmatpush1.msra.mxu0 %v88
  %1271 = vmatprep.subr.mxu0 %v85
  %1272 = vmatpush1.msra.mxu0 %v84
  %1273 = vmatprep.subr.mxu0 %v81
  %1274 = vmatpush1.msra.mxu0 %v80
  %1275 = vmatprep.subr.mxu0 %v77
  %1276 = vmatpush1.msra.mxu0 %v76
  %1277 = vmatprep.subr.mxu0 %v73
  %1278 = vmatpush1.msra.mxu0 %v72
  %1279 = vmatprep.subr.mxu0 %v69
  %1280 = vmatpush1.msra.mxu0 %v68
  %1281 = vmatprep.subr.mxu0 %v65
  %1282 = vmatpush1.msra.mxu0 %v64
  %1283 = vmatprep.subr.mxu0 %v61
  %1284 = vmatpush1.msra.mxu0 %v60
  %1285 = vmatprep.subr.mxu0 %v57
  %1286 = vmatpush1.msra.mxu0 %v56
  %1287 = vmatprep.subr.mxu0 %v53
  %1288 = vmatpush1.msra.mxu0 %v52
  %1289 = vmatprep.subr.mxu0 %v49
  %1290 = vmatpush1.msra.mxu0 %v48
  %1291 = vmatprep.subr.mxu0 %v45
  %1292 = vmatpush1.msra.mxu0 %v44
  %1293 = vmatprep.subr.mxu0 %v41
  %1294 = vmatpush1.msra.mxu0 %v40
  %1295 = vmatprep.subr.mxu0 %v37
  %1296 = vmatpush1.msra.mxu0 %v36
  %1297 = vmatprep.subr.mxu0 %v33
  %1298 = vmatpush1.msra.mxu0 %v32
  %1299 = vmatprep.subr.mxu0 0.0
  %1300 = vmatpush2.msra.mxu0 0.0
  %1301 = vmatprep.subr.mxu0 0.0
  %1302 = vmatpush2.msra.mxu0 0.0
  %1303 = vmatprep.subr.mxu0 0.0
  %1304 = vmatpush2.msra.mxu0 0.0
  %1305 = vmatprep.subr.mxu0 0.0
  %1306 = vmatpush2.msra.mxu0 0.0
  %1307 = vmatprep.subr.mxu0 0.0
  %1308 = vmatpush2.msra.mxu0 0.0
  %1309 = vmatprep.subr.mxu0 0.0
  %1310 = vmatpush2.msra.mxu0 0.0
  %1311 = vmatprep.subr.mxu0 0.0
  %1312 = vmatpush2.msra.mxu0 0.0
  %1313 = vmatprep.subr.mxu0 0.0
  %1314 = vmatpush2.msra.mxu0 0.0
  %1315 = vmatprep.subr.mxu0 0.0
  %1316 = vmatpush2.msra.mxu0 0.0
  %1317 = vmatprep.subr.mxu0 0.0
  %1318 = vmatpush2.msra.mxu0 0.0
  %1319 = vmatprep.subr.mxu0 0.0
  %1320 = vmatpush2.msra.mxu0 0.0
  %1321 = vmatprep.subr.mxu0 0.0
  %1322 = vmatpush2.msra.mxu0 0.0
  %1323 = vmatprep.subr.mxu0 0.0
  %1324 = vmatpush2.msra.mxu0 0.0
  %1325 = vmatprep.subr.mxu0 0.0
  %1326 = vmatpush2.msra.mxu0 0.0
  %1327 = vmatprep.subr.mxu0 0.0
  %1328 = vmatpush2.msra.mxu0 0.0
  %1329 = vmatprep.subr.mxu0 0.0
  %1330 = vmatpush2.msra.mxu0 0.0
  %1331 = vmatprep.mubr.f32.mxu0 0.0
  %1332 = vmatmul.mubr.f32.gmra.mxu0 %v1235
  %v1333 = vpop.f32.mrf.mxu0
  %v1334 = vadd.f32 0.0, %v1333
  %v1335 = vpop.f32.mrf.mxu0
  %v1336 = vadd.f32 0.0, %v1335
  %1337 = vdwg.mxu0
  %1338 = vmatprep.subr.mxu0 %v95
  %1339 = vmatpush1.msra.mxu0 %v94
  %1340 = vmatprep.subr.mxu0 %v91
  %1341 = vmatpush1.msra.mxu0 %v90
  %1342 = vmatprep.subr.mxu0 %v87
  %1343 = vmatpush1.msra.mxu0 %v86
  %1344 = vmatprep.subr.mxu0 %v83
  %1345 = vmatpush1.msra.mxu0 %v82
  %1346 = vmatprep.subr.mxu0 %v79
  %1347 = vmatpush1.msra.mxu0 %v78
  %1348 = vmatprep.subr.mxu0 %v75
  %1349 = vmatpush1.msra.mxu0 %v74
  %1350 = vmatprep.subr.mxu0 %v71
  %1351 = vmatpush1.msra.mxu0 %v70
  %1352 = vmatprep.subr.mxu0 %v67
  %1353 = vmatpush1.msra.mxu0 %v66
  %1354 = vmatprep.subr.mxu0 %v63
  %1355 = vmatpush1.msra.mxu0 %v62
  %1356 = vmatprep.subr.mxu0 %v59
  %1357 = vmatpush1.msra.mxu0 %v58
  %1358 = vmatprep.subr.mxu0 %v55
  %1359 = vmatpush1.msra.mxu0 %v54
  %1360 = vmatprep.subr.mxu0 %v51
  %1361 = vmatpush1.msra.mxu0 %v50
  %1362 = vmatprep.subr.mxu0 %v47
  %1363 = vmatpush1.msra.mxu0 %v46
  %1364 = vmatprep.subr.mxu0 %v43
  %1365 = vmatpush1.msra.mxu0 %v42
  %1366 = vmatprep.subr.mxu0 %v39
  %1367 = vmatpush1.msra.mxu0 %v38
  %1368 = vmatprep.subr.mxu0 %v35
  %1369 = vmatpush1.msra.mxu0 %v34
  %1370 = vmatprep.subr.mxu0 0.0
  %1371 = vmatpush2.msra.mxu0 0.0
  %1372 = vmatprep.subr.mxu0 0.0
  %1373 = vmatpush2.msra.mxu0 0.0
  %1374 = vmatprep.subr.mxu0 0.0
  %1375 = vmatpush2.msra.mxu0 0.0
  %1376 = vmatprep.subr.mxu0 0.0
  %1377 = vmatpush2.msra.mxu0 0.0
  %1378 = vmatprep.subr.mxu0 0.0
  %1379 = vmatpush2.msra.mxu0 0.0
  %1380 = vmatprep.subr.mxu0 0.0
  %1381 = vmatpush2.msra.mxu0 0.0
  %1382 = vmatprep.subr.mxu0 0.0
  %1383 = vmatpush2.msra.mxu0 0.0
  %1384 = vmatprep.subr.mxu0 0.0
  %1385 = vmatpush2.msra.mxu0 0.0
  %1386 = vmatprep.subr.mxu0 0.0
  %1387 = vmatpush2.msra.mxu0 0.0
  %1388 = vmatprep.subr.mxu0 0.0
  %1389 = vmatpush2.msra.mxu0 0.0
  %1390 = vmatprep.subr.mxu0 0.0
  %1391 = vmatpush2.msra.mxu0 0.0
  %1392 = vmatprep.subr.mxu0 0.0
  %1393 = vmatpush2.msra.mxu0 0.0
  %1394 = vmatprep.subr.mxu0 0.0
  %1395 = vmatpush2.msra.mxu0 0.0
  %1396 = vmatprep.subr.mxu0 0.0
  %1397 = vmatpush2.msra.mxu0 0.0
  %1398 = vmatprep.subr.mxu0 0.0
  %1399 = vmatpush2.msra.mxu0 0.0
  %1400 = vmatprep.subr.mxu0 0.0
  %1401 = vmatpush2.msra.mxu0 0.0
  %1402 = vmatprep.mubr.f32.mxu0 0.0
  %1403 = vmatmul.mubr.f32.gmra.mxu0 %v1235
  %v1404 = vpop.f32.mrf.mxu0
  %v1405 = vadd.f32 0.0, %v1404
  %v1406 = vpop.f32.mrf.mxu0
  %v1407 = vadd.f32 0.0, %v1406
  %1408 = vdwg.mxu0
  %v1409 = vadd.f32 %v1263, %v1334
  %v1410 = vadd.f32 %v1264, %v1336
  %v1411 = vadd.f32 %v1265, %v1405
  %v1412 = vadd.f32 %v1266, %v1407
  %1413 = vmatprep.subr.mxu0 %v157
  %1414 = vmatpush1.msra.mxu0 %v156
  %1415 = vmatprep.subr.mxu0 %v153
  %1416 = vmatpush1.msra.mxu0 %v152
  %1417 = vmatprep.subr.mxu0 %v149
  %1418 = vmatpush1.msra.mxu0 %v148
  %1419 = vmatprep.subr.mxu0 %v145
  %1420 = vmatpush1.msra.mxu0 %v144
  %1421 = vmatprep.subr.mxu0 %v141
  %1422 = vmatpush1.msra.mxu0 %v140
  %1423 = vmatprep.subr.mxu0 %v137
  %1424 = vmatpush1.msra.mxu0 %v136
  %1425 = vmatprep.subr.mxu0 %v133
  %1426 = vmatpush1.msra.mxu0 %v132
  %1427 = vmatprep.subr.mxu0 %v129
  %1428 = vmatpush1.msra.mxu0 %v128
  %1429 = vmatprep.subr.mxu0 %v125
  %1430 = vmatpush1.msra.mxu0 %v124
  %1431 = vmatprep.subr.mxu0 %v121
  %1432 = vmatpush1.msra.mxu0 %v120
  %1433 = vmatprep.subr.mxu0 %v117
  %1434 = vmatpush1.msra.mxu0 %v116
  %1435 = vmatprep.subr.mxu0 %v113
  %1436 = vmatpush1.msra.mxu0 %v112
  %1437 = vmatprep.subr.mxu0 %v109
  %1438 = vmatpush1.msra.mxu0 %v108
  %1439 = vmatprep.subr.mxu0 %v105
  %1440 = vmatpush1.msra.mxu0 %v104
  %1441 = vmatprep.subr.mxu0 %v101
  %1442 = vmatpush1.msra.mxu0 %v100
  %1443 = vmatprep.subr.mxu0 %v97
  %1444 = vmatpush1.msra.mxu0 %v96
  %1445 = vmatprep.subr.mxu0 0.0
  %1446 = vmatpush2.msra.mxu0 0.0
  %1447 = vmatprep.subr.mxu0 0.0
  %1448 = vmatpush2.msra.mxu0 0.0
  %1449 = vmatprep.subr.mxu0 0.0
  %1450 = vmatpush2.msra.mxu0 0.0
  %1451 = vmatprep.subr.mxu0 0.0
  %1452 = vmatpush2.msra.mxu0 0.0
  %1453 = vmatprep.subr.mxu0 0.0
  %1454 = vmatpush2.msra.mxu0 0.0
  %1455 = vmatprep.subr.mxu0 0.0
  %1456 = vmatpush2.msra.mxu0 0.0
  %1457 = vmatprep.subr.mxu0 0.0
  %1458 = vmatpush2.msra.mxu0 0.0
  %1459 = vmatprep.subr.mxu0 0.0
  %1460 = vmatpush2.msra.mxu0 0.0
  %1461 = vmatprep.subr.mxu0 0.0
  %1462 = vmatpush2.msra.mxu0 0.0
  %1463 = vmatprep.subr.mxu0 0.0
  %1464 = vmatpush2.msra.mxu0 0.0
  %1465 = vmatprep.subr.mxu0 0.0
  %1466 = vmatpush2.msra.mxu0 0.0
  %1467 = vmatprep.subr.mxu0 0.0
  %1468 = vmatpush2.msra.mxu0 0.0
  %1469 = vmatprep.subr.mxu0 0.0
  %1470 = vmatpush2.msra.mxu0 0.0
  %1471 = vmatprep.subr.mxu0 0.0
  %1472 = vmatpush2.msra.mxu0 0.0
  %1473 = vmatprep.subr.mxu0 0.0
  %1474 = vmatpush2.msra.mxu0 0.0
  %1475 = vmatprep.subr.mxu0 0.0
  %1476 = vmatpush2.msra.mxu0 0.0
  %1477 = vmatprep.mubr.f32.mxu0 0.0
  %1478 = vmatmul.mubr.f32.gmra.mxu0 %v1235
  %v1479 = vpop.f32.mrf.mxu0
  %v1480 = vadd.f32 0.0, %v1479
  %v1481 = vpop.f32.mrf.mxu0
  %v1482 = vadd.f32 0.0, %v1481
  %1483 = vdwg.mxu0
  %1484 = vmatprep.subr.mxu0 %v159
  %1485 = vmatpush1.msra.mxu0 %v158
  %1486 = vmatprep.subr.mxu0 %v155
  %1487 = vmatpush1.msra.mxu0 %v154
  %1488 = vmatprep.subr.mxu0 %v151
  %1489 = vmatpush1.msra.mxu0 %v150
  %1490 = vmatprep.subr.mxu0 %v147
  %1491 = vmatpush1.msra.mxu0 %v146
  %1492 = vmatprep.subr.mxu0 %v143
  %1493 = vmatpush1.msra.mxu0 %v142
  %1494 = vmatprep.subr.mxu0 %v139
  %1495 = vmatpush1.msra.mxu0 %v138
  %1496 = vmatprep.subr.mxu0 %v135
  %1497 = vmatpush1.msra.mxu0 %v134
  %1498 = vmatprep.subr.mxu0 %v131
  %1499 = vmatpush1.msra.mxu0 %v130
  %1500 = vmatprep.subr.mxu0 %v127
  %1501 = vmatpush1.msra.mxu0 %v126
  %1502 = vmatprep.subr.mxu0 %v123
  %1503 = vmatpush1.msra.mxu0 %v122
  %1504 = vmatprep.subr.mxu0 %v119
  %1505 = vmatpush1.msra.mxu0 %v118
  %1506 = vmatprep.subr.mxu0 %v115
  %1507 = vmatpush1.msra.mxu0 %v114
  %1508 = vmatprep.subr.mxu0 %v111
  %1509 = vmatpush1.msra.mxu0 %v110
  %1510 = vmatprep.subr.mxu0 %v107
  %1511 = vmatpush1.msra.mxu0 %v106
  %1512 = vmatprep.subr.mxu0 %v103
  %1513 = vmatpush1.msra.mxu0 %v102
  %1514 = vmatprep.subr.mxu0 %v99
  %1515 = vmatpush1.msra.mxu0 %v98
  %1516 = vmatprep.subr.mxu0 0.0
  %1517 = vmatpush2.msra.mxu0 0.0
  %1518 = vmatprep.subr.mxu0 0.0
  %1519 = vmatpush2.msra.mxu0 0.0
  %1520 = vmatprep.subr.mxu0 0.0
  %1521 = vmatpush2.msra.mxu0 0.0
  %1522 = vmatprep.subr.mxu0 0.0
  %1523 = vmatpush2.msra.mxu0 0.0
  %1524 = vmatprep.subr.mxu0 0.0
  %1525 = vmatpush2.msra.mxu0 0.0
  %1526 = vmatprep.subr.mxu0 0.0
  %1527 = vmatpush2.msra.mxu0 0.0
  %1528 = vmatprep.subr.mxu0 0.0
  %1529 = vmatpush2.msra.mxu0 0.0
  %1530 = vmatprep.subr.mxu0 0.0
  %1531 = vmatpush2.msra.mxu0 0.0
  %1532 = vmatprep.subr.mxu0 0.0
  %1533 = vmatpush2.msra.mxu0 0.0
  %1534 = vmatprep.subr.mxu0 0.0
  %1535 = vmatpush2.msra.mxu0 0.0
  %1536 = vmatprep.subr.mxu0 0.0
  %1537 = vmatpush2.msra.mxu0 0.0
  %1538 = vmatprep.subr.mxu0 0.0
  %1539 = vmatpush2.msra.mxu0 0.0
  %1540 = vmatprep.subr.mxu0 0.0
  %1541 = vmatpush2.msra.mxu0 0.0
  %1542 = vmatprep.subr.mxu0 0.0
  %1543 = vmatpush2.msra.mxu0 0.0
  %1544 = vmatprep.subr.mxu0 0.0
  %1545 = vmatpush2.msra.mxu0 0.0
  %1546 = vmatprep.subr.mxu0 0.0
  %1547 = vmatpush2.msra.mxu0 0.0
  %1548 = vmatprep.mubr.f32.mxu0 0.0
  %1549 = vmatmul.mubr.f32.gmra.mxu0 %v1235
  %v1550 = vpop.f32.mrf.mxu0
  %v1551 = vadd.f32 0.0, %v1550
  %v1552 = vpop.f32.mrf.mxu0
  %v1553 = vadd.f32 0.0, %v1552
  %1554 = vdwg.mxu0
  %v1555 = vadd.f32 %v552, %v1480
  %v1556 = vadd.f32 %v556, %v1482
  %v1557 = vadd.f32 %v560, %v1551
  %v1558 = vadd.f32 %v564, %v1553
  %1559 = vmatprep.subr.mxu0 %v221
  %1560 = vmatpush1.msra.mxu0 %v220
  %1561 = vmatprep.subr.mxu0 %v217
  %1562 = vmatpush1.msra.mxu0 %v216
  %1563 = vmatprep.subr.mxu0 %v213
  %1564 = vmatpush1.msra.mxu0 %v212
  %1565 = vmatprep.subr.mxu0 %v209
  %1566 = vmatpush1.msra.mxu0 %v208
  %1567 = vmatprep.subr.mxu0 %v205
  %1568 = vmatpush1.msra.mxu0 %v204
  %1569 = vmatprep.subr.mxu0 %v201
  %1570 = vmatpush1.msra.mxu0 %v200
  %1571 = vmatprep.subr.mxu0 %v197
  %1572 = vmatpush1.msra.mxu0 %v196
  %1573 = vmatprep.subr.mxu0 %v193
  %1574 = vmatpush1.msra.mxu0 %v192
  %1575 = vmatprep.subr.mxu0 %v189
  %1576 = vmatpush1.msra.mxu0 %v188
  %1577 = vmatprep.subr.mxu0 %v185
  %1578 = vmatpush1.msra.mxu0 %v184
  %1579 = vmatprep.subr.mxu0 %v181
  %1580 = vmatpush1.msra.mxu0 %v180
  %1581 = vmatprep.subr.mxu0 %v177
  %1582 = vmatpush1.msra.mxu0 %v176
  %1583 = vmatprep.subr.mxu0 %v173
  %1584 = vmatpush1.msra.mxu0 %v172
  %1585 = vmatprep.subr.mxu0 %v169
  %1586 = vmatpush1.msra.mxu0 %v168
  %1587 = vmatprep.subr.mxu0 %v165
  %1588 = vmatpush1.msra.mxu0 %v164
  %1589 = vmatprep.subr.mxu0 %v161
  %1590 = vmatpush1.msra.mxu0 %v160
  %1591 = vmatprep.subr.mxu0 0.0
  %1592 = vmatpush2.msra.mxu0 0.0
  %1593 = vmatprep.subr.mxu0 0.0
  %1594 = vmatpush2.msra.mxu0 0.0
  %1595 = vmatprep.subr.mxu0 0.0
  %1596 = vmatpush2.msra.mxu0 0.0
  %1597 = vmatprep.subr.mxu0 0.0
  %1598 = vmatpush2.msra.mxu0 0.0
  %1599 = vmatprep.subr.mxu0 0.0
  %1600 = vmatpush2.msra.mxu0 0.0
  %1601 = vmatprep.subr.mxu0 0.0
  %1602 = vmatpush2.msra.mxu0 0.0
  %1603 = vmatprep.subr.mxu0 0.0
  %1604 = vmatpush2.msra.mxu0 0.0
  %1605 = vmatprep.subr.mxu0 0.0
  %1606 = vmatpush2.msra.mxu0 0.0
  %1607 = vmatprep.subr.mxu0 0.0
  %1608 = vmatpush2.msra.mxu0 0.0
  %1609 = vmatprep.subr.mxu0 0.0
  %1610 = vmatpush2.msra.mxu0 0.0
  %1611 = vmatprep.subr.mxu0 0.0
  %1612 = vmatpush2.msra.mxu0 0.0
  %1613 = vmatprep.subr.mxu0 0.0
  %1614 = vmatpush2.msra.mxu0 0.0
  %1615 = vmatprep.subr.mxu0 0.0
  %1616 = vmatpush2.msra.mxu0 0.0
  %1617 = vmatprep.subr.mxu0 0.0
  %1618 = vmatpush2.msra.mxu0 0.0
  %1619 = vmatprep.subr.mxu0 0.0
  %1620 = vmatpush2.msra.mxu0 0.0
  %1621 = vmatprep.subr.mxu0 0.0
  %1622 = vmatpush2.msra.mxu0 0.0
  %1623 = vmatprep.mubr.f32.mxu0 0.0
  %1624 = vmatmul.mubr.f32.gmra.mxu0 %v1259
  %v1625 = vpop.f32.mrf.mxu0
  %v1626 = vadd.f32 0.0, %v1625
  %v1627 = vpop.f32.mrf.mxu0
  %v1628 = vadd.f32 0.0, %v1627
  %1629 = vdwg.mxu0
  %1630 = vmatprep.subr.mxu0 %v223
  %1631 = vmatpush1.msra.mxu0 %v222
  %1632 = vmatprep.subr.mxu0 %v219
  %1633 = vmatpush1.msra.mxu0 %v218
  %1634 = vmatprep.subr.mxu0 %v215
  %1635 = vmatpush1.msra.mxu0 %v214
  %1636 = vmatprep.subr.mxu0 %v211
  %1637 = vmatpush1.msra.mxu0 %v210
  %1638 = vmatprep.subr.mxu0 %v207
  %1639 = vmatpush1.msra.mxu0 %v206
  %1640 = vmatprep.subr.mxu0 %v203
  %1641 = vmatpush1.msra.mxu0 %v202
  %1642 = vmatprep.subr.mxu0 %v199
  %1643 = vmatpush1.msra.mxu0 %v198
  %1644 = vmatprep.subr.mxu0 %v195
  %1645 = vmatpush1.msra.mxu0 %v194
  %1646 = vmatprep.subr.mxu0 %v191
  %1647 = vmatpush1.msra.mxu0 %v190
  %1648 = vmatprep.subr.mxu0 %v187
  %1649 = vmatpush1.msra.mxu0 %v186
  %1650 = vmatprep.subr.mxu0 %v183
  %1651 = vmatpush1.msra.mxu0 %v182
  %1652 = vmatprep.subr.mxu0 %v179
  %1653 = vmatpush1.msra.mxu0 %v178
  %1654 = vmatprep.subr.mxu0 %v175
  %1655 = vmatpush1.msra.mxu0 %v174
  %1656 = vmatprep.subr.mxu0 %v171
  %1657 = vmatpush1.msra.mxu0 %v170
  %1658 = vmatprep.subr.mxu0 %v167
  %1659 = vmatpush1.msra.mxu0 %v166
  %1660 = vmatprep.subr.mxu0 %v163
  %1661 = vmatpush1.msra.mxu0 %v162
  %1662 = vmatprep.subr.mxu0 0.0
  %1663 = vmatpush2.msra.mxu0 0.0
  %1664 = vmatprep.subr.mxu0 0.0
  %1665 = vmatpush2.msra.mxu0 0.0
  %1666 = vmatprep.subr.mxu0 0.0
  %1667 = vmatpush2.msra.mxu0 0.0
  %1668 = vmatprep.subr.mxu0 0.0
  %1669 = vmatpush2.msra.mxu0 0.0
  %1670 = vmatprep.subr.mxu0 0.0
  %1671 = vmatpush2.msra.mxu0 0.0
  %1672 = vmatprep.subr.mxu0 0.0
  %1673 = vmatpush2.msra.mxu0 0.0
  %1674 = vmatprep.subr.mxu0 0.0
  %1675 = vmatpush2.msra.mxu0 0.0
  %1676 = vmatprep.subr.mxu0 0.0
  %1677 = vmatpush2.msra.mxu0 0.0
  %1678 = vmatprep.subr.mxu0 0.0
  %1679 = vmatpush2.msra.mxu0 0.0
  %1680 = vmatprep.subr.mxu0 0.0
  %1681 = vmatpush2.msra.mxu0 0.0
  %1682 = vmatprep.subr.mxu0 0.0
  %1683 = vmatpush2.msra.mxu0 0.0
  %1684 = vmatprep.subr.mxu0 0.0
  %1685 = vmatpush2.msra.mxu0 0.0
  %1686 = vmatprep.subr.mxu0 0.0
  %1687 = vmatpush2.msra.mxu0 0.0
  %1688 = vmatprep.subr.mxu0 0.0
  %1689 = vmatpush2.msra.mxu0 0.0
  %1690 = vmatprep.subr.mxu0 0.0
  %1691 = vmatpush2.msra.mxu0 0.0
  %1692 = vmatprep.subr.mxu0 0.0
  %1693 = vmatpush2.msra.mxu0 0.0
  %1694 = vmatprep.mubr.f32.mxu0 0.0
  %1695 = vmatmul.mubr.f32.gmra.mxu0 %v1259
  %v1696 = vpop.f32.mrf.mxu0
  %v1697 = vadd.f32 0.0, %v1696
  %v1698 = vpop.f32.mrf.mxu0
  %v1699 = vadd.f32 0.0, %v1698
  %1700 = vdwg.mxu0
  %v1701 = vadd.f32 %v1555, %v1626
  %v1702 = vadd.f32 %v1556, %v1628
  %v1703 = vadd.f32 %v1557, %v1697
  %v1704 = vadd.f32 %v1558, %v1699
  %v1705 = vxor.u32 %v1409, 2147483648
  %v1706 = vxor.u32 %v1410, 2147483648
  %v1707 = vxor.u32 %v1411, 2147483648
  %v1708 = vmul.f32 %v1705, 1.442695
  %v1709 = vpow.pop %v1708
  %v1710 = vmul.f32 %v1706, 1.442695
  %v1711 = vpow.pop %v1710
  %v1712 = vmul.f32 %v1707, 1.442695
  %v1713 = vpow.pop %v1712
  %v1714 = vadd.f32 %v1709, 1.0
  %v1715 = vadd.f32 %v1711, 1.0
  %v1716 = vadd.f32 %v1713, 1.0
  %v1717 = vrcp.pop %v1714
  %v1718 = vmul.f32 1.0, %v1717
  %v1719 = vrcp.pop %v1715
  %v1720 = vmul.f32 1.0, %v1719
  %v1721 = vrcp.pop %v1716
  %v1722 = vmul.f32 1.0, %v1721
  %v1723 = vtanh.pop %v1412
  %v1724 = vmul.f32 %v1720, %v1233
  %v1725 = vmul.f32 %v1718, %v1723
  %v1726 = vadd.f32 %v1724, %v1725
  %v1727 = vtanh.pop %v1726
  %v1728 = vmul.f32 %v1722, %v1727
  %v1729 = vxor.u32 %v1701, 2147483648
  %v1730 = vxor.u32 %v1702, 2147483648
  %v1731 = vxor.u32 %v1703, 2147483648
  %v1732 = vmul.f32 %v1729, 1.442695
  %v1733 = vpow.pop %v1732
  %v1734 = vmul.f32 %v1730, 1.442695
  %v1735 = vpow.pop %v1734
  %v1736 = vmul.f32 %v1731, 1.442695
  %v1737 = vpow.pop %v1736
  %v1738 = vadd.f32 %v1733, 1.0
  %v1739 = vadd.f32 %v1735, 1.0
  %v1740 = vadd.f32 %v1737, 1.0
  %v1741 = vrcp.pop %v1738
  %v1742 = vmul.f32 1.0, %v1741
  %v1743 = vrcp.pop %v1739
  %v1744 = vmul.f32 1.0, %v1743
  %v1745 = vrcp.pop %v1740
  %v1746 = vmul.f32 1.0, %v1745
  %v1747 = vtanh.pop %v1704
  %v1748 = vmul.f32 %v1744, %v1257
  %v1749 = vmul.f32 %v1742, %v1747
  %v1750 = vadd.f32 %v1748, %v1749
  %v1751 = vtanh.pop %v1750
  %v1752 = vmul.f32 %v1746, %v1751
  %s1753 = smul.u32 4, 4
  %s1754 = smul.addr %s1753, 8
  %s1755 = scalar_lea.vmem %s0, %s1754
  %v1756 = vld [vmem:[%s1755] sm:$0xff]
  %v1757 = vld [vmem:[%s1755 + $0x8] sm:$0xff]
  %v1758 = vld [vmem:[%s1755 + $0x10] sm:$0xff]
  %v1759 = vld [vmem:[%s1755 + $0x18] sm:$0xff]
  %1760 = vmatprep.subr.mxu0 %v93
  %1761 = vmatpush1.msra.mxu0 %v92
  %1762 = vmatprep.subr.mxu0 %v89
  %1763 = vmatpush1.msra.mxu0 %v88
  %1764 = vmatprep.subr.mxu0 %v85
  %1765 = vmatpush1.msra.mxu0 %v84
  %1766 = vmatprep.subr.mxu0 %v81
  %1767 = vmatpush1.msra.mxu0 %v80
  %1768 = vmatprep.subr.mxu0 %v77
  %1769 = vmatpush1.msra.mxu0 %v76
  %1770 = vmatprep.subr.mxu0 %v73
  %1771 = vmatpush1.msra.mxu0 %v72
  %1772 = vmatprep.subr.mxu0 %v69
  %1773 = vmatpush1.msra.mxu0 %v68
  %1774 = vmatprep.subr.mxu0 %v65
  %1775 = vmatpush1.msra.mxu0 %v64
  %1776 = vmatprep.subr.mxu0 %v61
  %1777 = vmatpush1.msra.mxu0 %v60
  %1778 = vmatprep.subr.mxu0 %v57
  %1779 = vmatpush1.msra.mxu0 %v56
  %1780 = vmatprep.subr.mxu0 %v53
  %1781 = vmatpush1.msra.mxu0 %v52
  %1782 = vmatprep.subr.mxu0 %v49
  %1783 = vmatpush1.msra.mxu0 %v48
  %1784 = vmatprep.subr.mxu0 %v45
  %1785 = vmatpush1.msra.mxu0 %v44
  %1786 = vmatprep.subr.mxu0 %v41
  %1787 = vmatpush1.msra.mxu0 %v40
  %1788 = vmatprep.subr.mxu0 %v37
  %1789 = vmatpush1.msra.mxu0 %v36
  %1790 = vmatprep.subr.mxu0 %v33
  %1791 = vmatpush1.msra.mxu0 %v32
  %1792 = vmatprep.subr.mxu0 0.0
  %1793 = vmatpush2.msra.mxu0 0.0
  %1794 = vmatprep.subr.mxu0 0.0
  %1795 = vmatpush2.msra.mxu0 0.0
  %1796 = vmatprep.subr.mxu0 0.0
  %1797 = vmatpush2.msra.mxu0 0.0
  %1798 = vmatprep.subr.mxu0 0.0
  %1799 = vmatpush2.msra.mxu0 0.0
  %1800 = vmatprep.subr.mxu0 0.0
  %1801 = vmatpush2.msra.mxu0 0.0
  %1802 = vmatprep.subr.mxu0 0.0
  %1803 = vmatpush2.msra.mxu0 0.0
  %1804 = vmatprep.subr.mxu0 0.0
  %1805 = vmatpush2.msra.mxu0 0.0
  %1806 = vmatprep.subr.mxu0 0.0
  %1807 = vmatpush2.msra.mxu0 0.0
  %1808 = vmatprep.subr.mxu0 0.0
  %1809 = vmatpush2.msra.mxu0 0.0
  %1810 = vmatprep.subr.mxu0 0.0
  %1811 = vmatpush2.msra.mxu0 0.0
  %1812 = vmatprep.subr.mxu0 0.0
  %1813 = vmatpush2.msra.mxu0 0.0
  %1814 = vmatprep.subr.mxu0 0.0
  %1815 = vmatpush2.msra.mxu0 0.0
  %1816 = vmatprep.subr.mxu0 0.0
  %1817 = vmatpush2.msra.mxu0 0.0
  %1818 = vmatprep.subr.mxu0 0.0
  %1819 = vmatpush2.msra.mxu0 0.0
  %1820 = vmatprep.subr.mxu0 0.0
  %1821 = vmatpush2.msra.mxu0 0.0
  %1822 = vmatprep.subr.mxu0 0.0
  %1823 = vmatpush2.msra.mxu0 0.0
  %1824 = vmatprep.mubr.f32.mxu0 0.0
  %1825 = vmatmul.mubr.f32.gmra.mxu0 %v1728
  %v1826 = vpop.f32.mrf.mxu0
  %v1827 = vadd.f32 0.0, %v1826
  %v1828 = vpop.f32.mrf.mxu0
  %v1829 = vadd.f32 0.0, %v1828
  %1830 = vdwg.mxu0
  %1831 = vmatprep.subr.mxu0 %v95
  %1832 = vmatpush1.msra.mxu0 %v94
  %1833 = vmatprep.subr.mxu0 %v91
  %1834 = vmatpush1.msra.mxu0 %v90
  %1835 = vmatprep.subr.mxu0 %v87
  %1836 = vmatpush1.msra.mxu0 %v86
  %1837 = vmatprep.subr.mxu0 %v83
  %1838 = vmatpush1.msra.mxu0 %v82
  %1839 = vmatprep.subr.mxu0 %v79
  %1840 = vmatpush1.msra.mxu0 %v78
  %1841 = vmatprep.subr.mxu0 %v75
  %1842 = vmatpush1.msra.mxu0 %v74
  %1843 = vmatprep.subr.mxu0 %v71
  %1844 = vmatpush1.msra.mxu0 %v70
  %1845 = vmatprep.subr.mxu0 %v67
  %1846 = vmatpush1.msra.mxu0 %v66
  %1847 = vmatprep.subr.mxu0 %v63
  %1848 = vmatpush1.msra.mxu0 %v62
  %1849 = vmatprep.subr.mxu0 %v59
  %1850 = vmatpush1.msra.mxu0 %v58
  %1851 = vmatprep.subr.mxu0 %v55
  %1852 = vmatpush1.msra.mxu0 %v54
  %1853 = vmatprep.subr.mxu0 %v51
  %1854 = vmatpush1.msra.mxu0 %v50
  %1855 = vmatprep.subr.mxu0 %v47
  %1856 = vmatpush1.msra.mxu0 %v46
  %1857 = vmatprep.subr.mxu0 %v43
  %1858 = vmatpush1.msra.mxu0 %v42
  %1859 = vmatprep.subr.mxu0 %v39
  %1860 = vmatpush1.msra.mxu0 %v38
  %1861 = vmatprep.subr.mxu0 %v35
  %1862 = vmatpush1.msra.mxu0 %v34
  %1863 = vmatprep.subr.mxu0 0.0
  %1864 = vmatpush2.msra.mxu0 0.0
  %1865 = vmatprep.subr.mxu0 0.0
  %1866 = vmatpush2.msra.mxu0 0.0
  %1867 = vmatprep.subr.mxu0 0.0
  %1868 = vmatpush2.msra.mxu0 0.0
  %1869 = vmatprep.subr.mxu0 0.0
  %1870 = vmatpush2.msra.mxu0 0.0
  %1871 = vmatprep.subr.mxu0 0.0
  %1872 = vmatpush2.msra.mxu0 0.0
  %1873 = vmatprep.subr.mxu0 0.0
  %1874 = vmatpush2.msra.mxu0 0.0
  %1875 = vmatprep.subr.mxu0 0.0
  %1876 = vmatpush2.msra.mxu0 0.0
  %1877 = vmatprep.subr.mxu0 0.0
  %1878 = vmatpush2.msra.mxu0 0.0
  %1879 = vmatprep.subr.mxu0 0.0
  %1880 = vmatpush2.msra.mxu0 0.0
  %1881 = vmatprep.subr.mxu0 0.0
  %1882 = vmatpush2.msra.mxu0 0.0
  %1883 = vmatprep.subr.mxu0 0.0
  %1884 = vmatpush2.msra.mxu0 0.0
  %1885 = vmatprep.subr.mxu0 0.0
  %1886 = vmatpush2.msra.mxu0 0.0
  %1887 = vmatprep.subr.mxu0 0.0
  %1888 = vmatpush2.msra.mxu0 0.0
  %1889 = vmatprep.subr.mxu0 0.0
  %1890 = vmatpush2.msra.mxu0 0.0
  %1891 = vmatprep.subr.mxu0 0.0
  %1892 = vmatpush2.msra.mxu0 0.0
  %1893 = vmatprep.subr.mxu0 0.0
  %1894 = vmatpush2.msra.mxu0 0.0
  %1895 = vmatprep.mubr.f32.mxu0 0.0
  %1896 = vmatmul.mubr.f32.gmra.mxu0 %v1728
  %v1897 = vpop.f32.mrf.mxu0
  %v1898 = vadd.f32 0.0, %v1897
  %v1899 = vpop.f32.mrf.mxu0
  %v1900 = vadd.f32 0.0, %v1899
  %1901 = vdwg.mxu0
  %v1902 = vadd.f32 %v1756, %v1827
  %v1903 = vadd.f32 %v1757, %v1829
  %v1904 = vadd.f32 %v1758, %v1898
  %v1905 = vadd.f32 %v1759, %v1900
  %1906 = vmatprep.subr.mxu0 %v157
  %1907 = vmatpush1.msra.mxu0 %v156
  %1908 = vmatprep.subr.mxu0 %v153
  %1909 = vmatpush1.msra.mxu0 %v152
  %1910 = vmatprep.subr.mxu0 %v149
  %1911 = vmatpush1.msra.mxu0 %v148
  %1912 = vmatprep.subr.mxu0 %v145
  %1913 = vmatpush1.msra.mxu0 %v144
  %1914 = vmatprep.subr.mxu0 %v141
  %1915 = vmatpush1.msra.mxu0 %v140
  %1916 = vmatprep.subr.mxu0 %v137
  %1917 = vmatpush1.msra.mxu0 %v136
  %1918 = vmatprep.subr.mxu0 %v133
  %1919 = vmatpush1.msra.mxu0 %v132
  %1920 = vmatprep.subr.mxu0 %v129
  %1921 = vmatpush1.msra.mxu0 %v128
  %1922 = vmatprep.subr.mxu0 %v125
  %1923 = vmatpush1.msra.mxu0 %v124
  %1924 = vmatprep.subr.mxu0 %v121
  %1925 = vmatpush1.msra.mxu0 %v120
  %1926 = vmatprep.subr.mxu0 %v117
  %1927 = vmatpush1.msra.mxu0 %v116
  %1928 = vmatprep.subr.mxu0 %v113
  %1929 = vmatpush1.msra.mxu0 %v112
  %1930 = vmatprep.subr.mxu0 %v109
  %1931 = vmatpush1.msra.mxu0 %v108
  %1932 = vmatprep.subr.mxu0 %v105
  %1933 = vmatpush1.msra.mxu0 %v104
  %1934 = vmatprep.subr.mxu0 %v101
  %1935 = vmatpush1.msra.mxu0 %v100
  %1936 = vmatprep.subr.mxu0 %v97
  %1937 = vmatpush1.msra.mxu0 %v96
  %1938 = vmatprep.subr.mxu0 0.0
  %1939 = vmatpush2.msra.mxu0 0.0
  %1940 = vmatprep.subr.mxu0 0.0
  %1941 = vmatpush2.msra.mxu0 0.0
  %1942 = vmatprep.subr.mxu0 0.0
  %1943 = vmatpush2.msra.mxu0 0.0
  %1944 = vmatprep.subr.mxu0 0.0
  %1945 = vmatpush2.msra.mxu0 0.0
  %1946 = vmatprep.subr.mxu0 0.0
  %1947 = vmatpush2.msra.mxu0 0.0
  %1948 = vmatprep.subr.mxu0 0.0
  %1949 = vmatpush2.msra.mxu0 0.0
  %1950 = vmatprep.subr.mxu0 0.0
  %1951 = vmatpush2.msra.mxu0 0.0
  %1952 = vmatprep.subr.mxu0 0.0
  %1953 = vmatpush2.msra.mxu0 0.0
  %1954 = vmatprep.subr.mxu0 0.0
  %1955 = vmatpush2.msra.mxu0 0.0
  %1956 = vmatprep.subr.mxu0 0.0
  %1957 = vmatpush2.msra.mxu0 0.0
  %1958 = vmatprep.subr.mxu0 0.0
  %1959 = vmatpush2.msra.mxu0 0.0
  %1960 = vmatprep.subr.mxu0 0.0
  %1961 = vmatpush2.msra.mxu0 0.0
  %1962 = vmatprep.subr.mxu0 0.0
  %1963 = vmatpush2.msra.mxu0 0.0
  %1964 = vmatprep.subr.mxu0 0.0
  %1965 = vmatpush2.msra.mxu0 0.0
  %1966 = vmatprep.subr.mxu0 0.0
  %1967 = vmatpush2.msra.mxu0 0.0
  %1968 = vmatprep.subr.mxu0 0.0
  %1969 = vmatpush2.msra.mxu0 0.0
  %1970 = vmatprep.mubr.f32.mxu0 0.0
  %1971 = vmatmul.mubr.f32.gmra.mxu0 %v1728
  %v1972 = vpop.f32.mrf.mxu0
  %v1973 = vadd.f32 0.0, %v1972
  %v1974 = vpop.f32.mrf.mxu0
  %v1975 = vadd.f32 0.0, %v1974
  %1976 = vdwg.mxu0
  %1977 = vmatprep.subr.mxu0 %v159
  %1978 = vmatpush1.msra.mxu0 %v158
  %1979 = vmatprep.subr.mxu0 %v155
  %1980 = vmatpush1.msra.mxu0 %v154
  %1981 = vmatprep.subr.mxu0 %v151
  %1982 = vmatpush1.msra.mxu0 %v150
  %1983 = vmatprep.subr.mxu0 %v147
  %1984 = vmatpush1.msra.mxu0 %v146
  %1985 = vmatprep.subr.mxu0 %v143
  %1986 = vmatpush1.msra.mxu0 %v142
  %1987 = vmatprep.subr.mxu0 %v139
  %1988 = vmatpush1.msra.mxu0 %v138
  %1989 = vmatprep.subr.mxu0 %v135
  %1990 = vmatpush1.msra.mxu0 %v134
  %1991 = vmatprep.subr.mxu0 %v131
  %1992 = vmatpush1.msra.mxu0 %v130
  %1993 = vmatprep.subr.mxu0 %v127
  %1994 = vmatpush1.msra.mxu0 %v126
  %1995 = vmatprep.subr.mxu0 %v123
  %1996 = vmatpush1.msra.mxu0 %v122
  %1997 = vmatprep.subr.mxu0 %v119
  %1998 = vmatpush1.msra.mxu0 %v118
  %1999 = vmatprep.subr.mxu0 %v115
  %2000 = vmatpush1.msra.mxu0 %v114
  %2001 = vmatprep.subr.mxu0 %v111
  %2002 = vmatpush1.msra.mxu0 %v110
  %2003 = vmatprep.subr.mxu0 %v107
  %2004 = vmatpush1.msra.mxu0 %v106
  %2005 = vmatprep.subr.mxu0 %v103
  %2006 = vmatpush1.msra.mxu0 %v102
  %2007 = vmatprep.subr.mxu0 %v99
  %2008 = vmatpush1.msra.mxu0 %v98
  %2009 = vmatprep.subr.mxu0 0.0
  %2010 = vmatpush2.msra.mxu0 0.0
  %2011 = vmatprep.subr.mxu0 0.0
  %2012 = vmatpush2.msra.mxu0 0.0
  %2013 = vmatprep.subr.mxu0 0.0
  %2014 = vmatpush2.msra.mxu0 0.0
  %2015 = vmatprep.subr.mxu0 0.0
  %2016 = vmatpush2.msra.mxu0 0.0
  %2017 = vmatprep.subr.mxu0 0.0
  %2018 = vmatpush2.msra.mxu0 0.0
  %2019 = vmatprep.subr.mxu0 0.0
  %2020 = vmatpush2.msra.mxu0 0.0
  %2021 = vmatprep.subr.mxu0 0.0
  %2022 = vmatpush2.msra.mxu0 0.0
  %2023 = vmatprep.subr.mxu0 0.0
  %2024 = vmatpush2.msra.mxu0 0.0
  %2025 = vmatprep.subr.mxu0 0.0
  %2026 = vmatpush2.msra.mxu0 0.0
  %2027 = vmatprep.subr.mxu0 0.0
  %2028 = vmatpush2.msra.mxu0 0.0
  %2029 = vmatprep.subr.mxu0 0.0
  %2030 = vmatpush2.msra.mxu0 0.0
  %2031 = vmatprep.subr.mxu0 0.0
  %2032 = vmatpush2.msra.mxu0 0.0
  %2033 = vmatprep.subr.mxu0 0.0
  %2034 = vmatpush2.msra.mxu0 0.0
  %2035 = vmatprep.subr.mxu0 0.0
  %2036 = vmatpush2.msra.mxu0 0.0
  %2037 = vmatprep.subr.mxu0 0.0
  %2038 = vmatpush2.msra.mxu0 0.0
  %2039 = vmatprep.subr.mxu0 0.0
  %2040 = vmatpush2.msra.mxu0 0.0
  %2041 = vmatprep.mubr.f32.mxu0 0.0
  %2042 = vmatmul.mubr.f32.gmra.mxu0 %v1728
  %v2043 = vpop.f32.mrf.mxu0
  %v2044 = vadd.f32 0.0, %v2043
  %v2045 = vpop.f32.mrf.mxu0
  %v2046 = vadd.f32 0.0, %v2045
  %2047 = vdwg.mxu0
  %v2048 = vadd.f32 %v552, %v1973
  %v2049 = vadd.f32 %v556, %v1975
  %v2050 = vadd.f32 %v560, %v2044
  %v2051 = vadd.f32 %v564, %v2046
  %2052 = vmatprep.subr.mxu0 %v221
  %2053 = vmatpush1.msra.mxu0 %v220
  %2054 = vmatprep.subr.mxu0 %v217
  %2055 = vmatpush1.msra.mxu0 %v216
  %2056 = vmatprep.subr.mxu0 %v213
  %2057 = vmatpush1.msra.mxu0 %v212
  %2058 = vmatprep.subr.mxu0 %v209
  %2059 = vmatpush1.msra.mxu0 %v208
  %2060 = vmatprep.subr.mxu0 %v205
  %2061 = vmatpush1.msra.mxu0 %v204
  %2062 = vmatprep.subr.mxu0 %v201
  %2063 = vmatpush1.msra.mxu0 %v200
  %2064 = vmatprep.subr.mxu0 %v197
  %2065 = vmatpush1.msra.mxu0 %v196
  %2066 = vmatprep.subr.mxu0 %v193
  %2067 = vmatpush1.msra.mxu0 %v192
  %2068 = vmatprep.subr.mxu0 %v189
  %2069 = vmatpush1.msra.mxu0 %v188
  %2070 = vmatprep.subr.mxu0 %v185
  %2071 = vmatpush1.msra.mxu0 %v184
  %2072 = vmatprep.subr.mxu0 %v181
  %2073 = vmatpush1.msra.mxu0 %v180
  %2074 = vmatprep.subr.mxu0 %v177
  %2075 = vmatpush1.msra.mxu0 %v176
  %2076 = vmatprep.subr.mxu0 %v173
  %2077 = vmatpush1.msra.mxu0 %v172
  %2078 = vmatprep.subr.mxu0 %v169
  %2079 = vmatpush1.msra.mxu0 %v168
  %2080 = vmatprep.subr.mxu0 %v165
  %2081 = vmatpush1.msra.mxu0 %v164
  %2082 = vmatprep.subr.mxu0 %v161
  %2083 = vmatpush1.msra.mxu0 %v160
  %2084 = vmatprep.subr.mxu0 0.0
  %2085 = vmatpush2.msra.mxu0 0.0
  %2086 = vmatprep.subr.mxu0 0.0
  %2087 = vmatpush2.msra.mxu0 0.0
  %2088 = vmatprep.subr.mxu0 0.0
  %2089 = vmatpush2.msra.mxu0 0.0
  %2090 = vmatprep.subr.mxu0 0.0
  %2091 = vmatpush2.msra.mxu0 0.0
  %2092 = vmatprep.subr.mxu0 0.0
  %2093 = vmatpush2.msra.mxu0 0.0
  %2094 = vmatprep.subr.mxu0 0.0
  %2095 = vmatpush2.msra.mxu0 0.0
  %2096 = vmatprep.subr.mxu0 0.0
  %2097 = vmatpush2.msra.mxu0 0.0
  %2098 = vmatprep.subr.mxu0 0.0
  %2099 = vmatpush2.msra.mxu0 0.0
  %2100 = vmatprep.subr.mxu0 0.0
  %2101 = vmatpush2.msra.mxu0 0.0
  %2102 = vmatprep.subr.mxu0 0.0
  %2103 = vmatpush2.msra.mxu0 0.0
  %2104 = vmatprep.subr.mxu0 0.0
  %2105 = vmatpush2.msra.mxu0 0.0
  %2106 = vmatprep.subr.mxu0 0.0
  %2107 = vmatpush2.msra.mxu0 0.0
  %2108 = vmatprep.subr.mxu0 0.0
  %2109 = vmatpush2.msra.mxu0 0.0
  %2110 = vmatprep.subr.mxu0 0.0
  %2111 = vmatpush2.msra.mxu0 0.0
  %2112 = vmatprep.subr.mxu0 0.0
  %2113 = vmatpush2.msra.mxu0 0.0
  %2114 = vmatprep.subr.mxu0 0.0
  %2115 = vmatpush2.msra.mxu0 0.0
  %2116 = vmatprep.mubr.f32.mxu0 0.0
  %2117 = vmatmul.mubr.f32.gmra.mxu0 %v1752
  %v2118 = vpop.f32.mrf.mxu0
  %v2119 = vadd.f32 0.0, %v2118
  %v2120 = vpop.f32.mrf.mxu0
  %v2121 = vadd.f32 0.0, %v2120
  %2122 = vdwg.mxu0
  %2123 = vmatprep.subr.mxu0 %v223
  %2124 = vmatpush1.msra.mxu0 %v222
  %2125 = vmatprep.subr.mxu0 %v219
  %2126 = vmatpush1.msra.mxu0 %v218
  %2127 = vmatprep.subr.mxu0 %v215
  %2128 = vmatpush1.msra.mxu0 %v214
  %2129 = vmatprep.subr.mxu0 %v211
  %2130 = vmatpush1.msra.mxu0 %v210
  %2131 = vmatprep.subr.mxu0 %v207
  %2132 = vmatpush1.msra.mxu0 %v206
  %2133 = vmatprep.subr.mxu0 %v203
  %2134 = vmatpush1.msra.mxu0 %v202
  %2135 = vmatprep.subr.mxu0 %v199
  %2136 = vmatpush1.msra.mxu0 %v198
  %2137 = vmatprep.subr.mxu0 %v195
  %2138 = vmatpush1.msra.mxu0 %v194
  %2139 = vmatprep.subr.mxu0 %v191
  %2140 = vmatpush1.msra.mxu0 %v190
  %2141 = vmatprep.subr.mxu0 %v187
  %2142 = vmatpush1.msra.mxu0 %v186
  %2143 = vmatprep.subr.mxu0 %v183
  %2144 = vmatpush1.msra.mxu0 %v182
  %2145 = vmatprep.subr.mxu0 %v179
  %2146 = vmatpush1.msra.mxu0 %v178
  %2147 = vmatprep.subr.mxu0 %v175
  %2148 = vmatpush1.msra.mxu0 %v174
  %2149 = vmatprep.subr.mxu0 %v171
  %2150 = vmatpush1.msra.mxu0 %v170
  %2151 = vmatprep.subr.mxu0 %v167
  %2152 = vmatpush1.msra.mxu0 %v166
  %2153 = vmatprep.subr.mxu0 %v163
  %2154 = vmatpush1.msra.mxu0 %v162
  %2155 = vmatprep.subr.mxu0 0.0
  %2156 = vmatpush2.msra.mxu0 0.0
  %2157 = vmatprep.subr.mxu0 0.0
  %2158 = vmatpush2.msra.mxu0 0.0
  %2159 = vmatprep.subr.mxu0 0.0
  %2160 = vmatpush2.msra.mxu0 0.0
  %2161 = vmatprep.subr.mxu0 0.0
  %2162 = vmatpush2.msra.mxu0 0.0
  %2163 = vmatprep.subr.mxu0 0.0
  %2164 = vmatpush2.msra.mxu0 0.0
  %2165 = vmatprep.subr.mxu0 0.0
  %2166 = vmatpush2.msra.mxu0 0.0
  %2167 = vmatprep.subr.mxu0 0.0
  %2168 = vmatpush2.msra.mxu0 0.0
  %2169 = vmatprep.subr.mxu0 0.0
  %2170 = vmatpush2.msra.mxu0 0.0
  %2171 = vmatprep.subr.mxu0 0.0
  %2172 = vmatpush2.msra.mxu0 0.0
  %2173 = vmatprep.subr.mxu0 0.0
  %2174 = vmatpush2.msra.mxu0 0.0
  %2175 = vmatprep.subr.mxu0 0.0
  %2176 = vmatpush2.msra.mxu0 0.0
  %2177 = vmatprep.subr.mxu0 0.0
  %2178 = vmatpush2.msra.mxu0 0.0
  %2179 = vmatprep.subr.mxu0 0.0
  %2180 = vmatpush2.msra.mxu0 0.0
  %2181 = vmatprep.subr.mxu0 0.0
  %2182 = vmatpush2.msra.mxu0 0.0
  %2183 = vmatprep.subr.mxu0 0.0
  %2184 = vmatpush2.msra.mxu0 0.0
  %2185 = vmatprep.subr.mxu0 0.0
  %2186 = vmatpush2.msra.mxu0 0.0
  %2187 = vmatprep.mubr.f32.mxu0 0.0
  %2188 = vmatmul.mubr.f32.gmra.mxu0 %v1752
  %v2189 = vpop.f32.mrf.mxu0
  %v2190 = vadd.f32 0.0, %v2189
  %v2191 = vpop.f32.mrf.mxu0
  %v2192 = vadd.f32 0.0, %v2191
  %2193 = vdwg.mxu0
  %v2194 = vadd.f32 %v2048, %v2119
  %v2195 = vadd.f32 %v2049, %v2121
  %v2196 = vadd.f32 %v2050, %v2190
  %v2197 = vadd.f32 %v2051, %v2192
  %v2198 = vxor.u32 %v1902, 2147483648
  %v2199 = vxor.u32 %v1903, 2147483648
  %v2200 = vxor.u32 %v1904, 2147483648
  %v2201 = vmul.f32 %v2198, 1.442695
  %v2202 = vpow.pop %v2201
  %v2203 = vmul.f32 %v2199, 1.442695
  %v2204 = vpow.pop %v2203
  %v2205 = vmul.f32 %v2200, 1.442695
  %v2206 = vpow.pop %v2205
  %v2207 = vadd.f32 %v2202, 1.0
  %v2208 = vadd.f32 %v2204, 1.0
  %v2209 = vadd.f32 %v2206, 1.0
  %v2210 = vrcp.pop %v2207
  %v2211 = vmul.f32 1.0, %v2210
  %v2212 = vrcp.pop %v2208
  %v2213 = vmul.f32 1.0, %v2212
  %v2214 = vrcp.pop %v2209
  %v2215 = vmul.f32 1.0, %v2214
  %v2216 = vtanh.pop %v1905
  %v2217 = vmul.f32 %v2213, %v1726
  %v2218 = vmul.f32 %v2211, %v2216
  %v2219 = vadd.f32 %v2217, %v2218
  %v2220 = vtanh.pop %v2219
  %v2221 = vmul.f32 %v2215, %v2220
  %v2222 = vxor.u32 %v2194, 2147483648
  %v2223 = vxor.u32 %v2195, 2147483648
  %v2224 = vxor.u32 %v2196, 2147483648
  %v2225 = vmul.f32 %v2222, 1.442695
  %v2226 = vpow.pop %v2225
  %v2227 = vmul.f32 %v2223, 1.442695
  %v2228 = vpow.pop %v2227
  %v2229 = vmul.f32 %v2224, 1.442695
  %v2230 = vpow.pop %v2229
  %v2231 = vadd.f32 %v2226, 1.0
  %v2232 = vadd.f32 %v2228, 1.0
  %v2233 = vadd.f32 %v2230, 1.0
  %v2234 = vrcp.pop %v2231
  %v2235 = vmul.f32 1.0, %v2234
  %v2236 = vrcp.pop %v2232
  %v2237 = vmul.f32 1.0, %v2236
  %v2238 = vrcp.pop %v2233
  %v2239 = vmul.f32 1.0, %v2238
  %v2240 = vtanh.pop %v2197
  %v2241 = vmul.f32 %v2237, %v1750
  %v2242 = vmul.f32 %v2235, %v2240
  %v2243 = vadd.f32 %v2241, %v2242
  %v2244 = vtanh.pop %v2243
  %v2245 = vmul.f32 %v2239, %v2244
  %s2246 = smul.u32 5, 4
  %s2247 = smul.addr %s2246, 8
  %s2248 = scalar_lea.vmem %s0, %s2247
  %v2249 = vld [vmem:[%s2248] sm:$0xff]
  %v2250 = vld [vmem:[%s2248 + $0x8] sm:$0xff]
  %v2251 = vld [vmem:[%s2248 + $0x10] sm:$0xff]
  %v2252 = vld [vmem:[%s2248 + $0x18] sm:$0xff]
  %2253 = vmatprep.subr.mxu0 %v93
  %2254 = vmatpush1.msra.mxu0 %v92
  %2255 = vmatprep.subr.mxu0 %v89
  %2256 = vmatpush1.msra.mxu0 %v88
  %2257 = vmatprep.subr.mxu0 %v85
  %2258 = vmatpush1.msra.mxu0 %v84
  %2259 = vmatprep.subr.mxu0 %v81
  %2260 = vmatpush1.msra.mxu0 %v80
  %2261 = vmatprep.subr.mxu0 %v77
  %2262 = vmatpush1.msra.mxu0 %v76
  %2263 = vmatprep.subr.mxu0 %v73
  %2264 = vmatpush1.msra.mxu0 %v72
  %2265 = vmatprep.subr.mxu0 %v69
  %2266 = vmatpush1.msra.mxu0 %v68
  %2267 = vmatprep.subr.mxu0 %v65
  %2268 = vmatpush1.msra.mxu0 %v64
  %2269 = vmatprep.subr.mxu0 %v61
  %2270 = vmatpush1.msra.mxu0 %v60
  %2271 = vmatprep.subr.mxu0 %v57
  %2272 = vmatpush1.msra.mxu0 %v56
  %2273 = vmatprep.subr.mxu0 %v53
  %2274 = vmatpush1.msra.mxu0 %v52
  %2275 = vmatprep.subr.mxu0 %v49
  %2276 = vmatpush1.msra.mxu0 %v48
  %2277 = vmatprep.subr.mxu0 %v45
  %2278 = vmatpush1.msra.mxu0 %v44
  %2279 = vmatprep.subr.mxu0 %v41
  %2280 = vmatpush1.msra.mxu0 %v40
  %2281 = vmatprep.subr.mxu0 %v37
  %2282 = vmatpush1.msra.mxu0 %v36
  %2283 = vmatprep.subr.mxu0 %v33
  %2284 = vmatpush1.msra.mxu0 %v32
  %2285 = vmatprep.subr.mxu0 0.0
  %2286 = vmatpush2.msra.mxu0 0.0
  %2287 = vmatprep.subr.mxu0 0.0
  %2288 = vmatpush2.msra.mxu0 0.0
  %2289 = vmatprep.subr.mxu0 0.0
  %2290 = vmatpush2.msra.mxu0 0.0
  %2291 = vmatprep.subr.mxu0 0.0
  %2292 = vmatpush2.msra.mxu0 0.0
  %2293 = vmatprep.subr.mxu0 0.0
  %2294 = vmatpush2.msra.mxu0 0.0
  %2295 = vmatprep.subr.mxu0 0.0
  %2296 = vmatpush2.msra.mxu0 0.0
  %2297 = vmatprep.subr.mxu0 0.0
  %2298 = vmatpush2.msra.mxu0 0.0
  %2299 = vmatprep.subr.mxu0 0.0
  %2300 = vmatpush2.msra.mxu0 0.0
  %2301 = vmatprep.subr.mxu0 0.0
  %2302 = vmatpush2.msra.mxu0 0.0
  %2303 = vmatprep.subr.mxu0 0.0
  %2304 = vmatpush2.msra.mxu0 0.0
  %2305 = vmatprep.subr.mxu0 0.0
  %2306 = vmatpush2.msra.mxu0 0.0
  %2307 = vmatprep.subr.mxu0 0.0
  %2308 = vmatpush2.msra.mxu0 0.0
  %2309 = vmatprep.subr.mxu0 0.0
  %2310 = vmatpush2.msra.mxu0 0.0
  %2311 = vmatprep.subr.mxu0 0.0
  %2312 = vmatpush2.msra.mxu0 0.0
  %2313 = vmatprep.subr.mxu0 0.0
  %2314 = vmatpush2.msra.mxu0 0.0
  %2315 = vmatprep.subr.mxu0 0.0
  %2316 = vmatpush2.msra.mxu0 0.0
  %2317 = vmatprep.mubr.f32.mxu0 0.0
  %2318 = vmatmul.mubr.f32.gmra.mxu0 %v2221
  %v2319 = vpop.f32.mrf.mxu0
  %v2320 = vadd.f32 0.0, %v2319
  %v2321 = vpop.f32.mrf.mxu0
  %v2322 = vadd.f32 0.0, %v2321
  %2323 = vdwg.mxu0
  %2324 = vmatprep.subr.mxu0 %v95
  %2325 = vmatpush1.msra.mxu0 %v94
  %2326 = vmatprep.subr.mxu0 %v91
  %2327 = vmatpush1.msra.mxu0 %v90
  %2328 = vmatprep.subr.mxu0 %v87
  %2329 = vmatpush1.msra.mxu0 %v86
  %2330 = vmatprep.subr.mxu0 %v83
  %2331 = vmatpush1.msra.mxu0 %v82
  %2332 = vmatprep.subr.mxu0 %v79
  %2333 = vmatpush1.msra.mxu0 %v78
  %2334 = vmatprep.subr.mxu0 %v75
  %2335 = vmatpush1.msra.mxu0 %v74
  %2336 = vmatprep.subr.mxu0 %v71
  %2337 = vmatpush1.msra.mxu0 %v70
  %2338 = vmatprep.subr.mxu0 %v67
  %2339 = vmatpush1.msra.mxu0 %v66
  %2340 = vmatprep.subr.mxu0 %v63
  %2341 = vmatpush1.msra.mxu0 %v62
  %2342 = vmatprep.subr.mxu0 %v59
  %2343 = vmatpush1.msra.mxu0 %v58
  %2344 = vmatprep.subr.mxu0 %v55
  %2345 = vmatpush1.msra.mxu0 %v54
  %2346 = vmatprep.subr.mxu0 %v51
  %2347 = vmatpush1.msra.mxu0 %v50
  %2348 = vmatprep.subr.mxu0 %v47
  %2349 = vmatpush1.msra.mxu0 %v46
  %2350 = vmatprep.subr.mxu0 %v43
  %2351 = vmatpush1.msra.mxu0 %v42
  %2352 = vmatprep.subr.mxu0 %v39
  %2353 = vmatpush1.msra.mxu0 %v38
  %2354 = vmatprep.subr.mxu0 %v35
  %2355 = vmatpush1.msra.mxu0 %v34
  %2356 = vmatprep.subr.mxu0 0.0
  %2357 = vmatpush2.msra.mxu0 0.0
  %2358 = vmatprep.subr.mxu0 0.0
  %2359 = vmatpush2.msra.mxu0 0.0
  %2360 = vmatprep.subr.mxu0 0.0
  %2361 = vmatpush2.msra.mxu0 0.0
  %2362 = vmatprep.subr.mxu0 0.0
  %2363 = vmatpush2.msra.mxu0 0.0
  %2364 = vmatprep.subr.mxu0 0.0
  %2365 = vmatpush2.msra.mxu0 0.0
  %2366 = vmatprep.subr.mxu0 0.0
  %2367 = vmatpush2.msra.mxu0 0.0
  %2368 = vmatprep.subr.mxu0 0.0
  %2369 = vmatpush2.msra.mxu0 0.0
  %2370 = vmatprep.subr.mxu0 0.0
  %2371 = vmatpush2.msra.mxu0 0.0
  %2372 = vmatprep.subr.mxu0 0.0
  %2373 = vmatpush2.msra.mxu0 0.0
  %2374 = vmatprep.subr.mxu0 0.0
  %2375 = vmatpush2.msra.mxu0 0.0
  %2376 = vmatprep.subr.mxu0 0.0
  %2377 = vmatpush2.msra.mxu0 0.0
  %2378 = vmatprep.subr.mxu0 0.0
  %2379 = vmatpush2.msra.mxu0 0.0
  %2380 = vmatprep.subr.mxu0 0.0
  %2381 = vmatpush2.msra.mxu0 0.0
  %2382 = vmatprep.subr.mxu0 0.0
  %2383 = vmatpush2.msra.mxu0 0.0
  %2384 = vmatprep.subr.mxu0 0.0
  %2385 = vmatpush2.msra.mxu0 0.0
  %2386 = vmatprep.subr.mxu0 0.0
  %2387 = vmatpush2.msra.mxu0 0.0
  %2388 = vmatprep.mubr.f32.mxu0 0.0
  %2389 = vmatmul.mubr.f32.gmra.mxu0 %v2221
  %v2390 = vpop.f32.mrf.mxu0
  %v2391 = vadd.f32 0.0, %v2390
  %v2392 = vpop.f32.mrf.mxu0
  %v2393 = vadd.f32 0.0, %v2392
  %2394 = vdwg.mxu0
  %v2395 = vadd.f32 %v2249, %v2320
  %v2396 = vadd.f32 %v2250, %v2322
  %v2397 = vadd.f32 %v2251, %v2391
  %v2398 = vadd.f32 %v2252, %v2393
  %2399 = vmatprep.subr.mxu0 %v157
  %2400 = vmatpush1.msra.mxu0 %v156
  %2401 = vmatprep.subr.mxu0 %v153
  %2402 = vmatpush1.msra.mxu0 %v152
  %2403 = vmatprep.subr.mxu0 %v149
  %2404 = vmatpush1.msra.mxu0 %v148
  %2405 = vmatprep.subr.mxu0 %v145
  %2406 = vmatpush1.msra.mxu0 %v144
  %2407 = vmatprep.subr.mxu0 %v141
  %2408 = vmatpush1.msra.mxu0 %v140
  %2409 = vmatprep.subr.mxu0 %v137
  %2410 = vmatpush1.msra.mxu0 %v136
  %2411 = vmatprep.subr.mxu0 %v133
  %2412 = vmatpush1.msra.mxu0 %v132
  %2413 = vmatprep.subr.mxu0 %v129
  %2414 = vmatpush1.msra.mxu0 %v128
  %2415 = vmatprep.subr.mxu0 %v125
  %2416 = vmatpush1.msra.mxu0 %v124
  %2417 = vmatprep.subr.mxu0 %v121
  %2418 = vmatpush1.msra.mxu0 %v120
  %2419 = vmatprep.subr.mxu0 %v117
  %2420 = vmatpush1.msra.mxu0 %v116
  %2421 = vmatprep.subr.mxu0 %v113
  %2422 = vmatpush1.msra.mxu0 %v112
  %2423 = vmatprep.subr.mxu0 %v109
  %2424 = vmatpush1.msra.mxu0 %v108
  %2425 = vmatprep.subr.mxu0 %v105
  %2426 = vmatpush1.msra.mxu0 %v104
  %2427 = vmatprep.subr.mxu0 %v101
  %2428 = vmatpush1.msra.mxu0 %v100
  %2429 = vmatprep.subr.mxu0 %v97
  %2430 = vmatpush1.msra.mxu0 %v96
  %2431 = vmatprep.subr.mxu0 0.0
  %2432 = vmatpush2.msra.mxu0 0.0
  %2433 = vmatprep.subr.mxu0 0.0
  %2434 = vmatpush2.msra.mxu0 0.0
  %2435 = vmatprep.subr.mxu0 0.0
  %2436 = vmatpush2.msra.mxu0 0.0
  %2437 = vmatprep.subr.mxu0 0.0
  %2438 = vmatpush2.msra.mxu0 0.0
  %2439 = vmatprep.subr.mxu0 0.0
  %2440 = vmatpush2.msra.mxu0 0.0
  %2441 = vmatprep.subr.mxu0 0.0
  %2442 = vmatpush2.msra.mxu0 0.0
  %2443 = vmatprep.subr.mxu0 0.0
  %2444 = vmatpush2.msra.mxu0 0.0
  %2445 = vmatprep.subr.mxu0 0.0
  %2446 = vmatpush2.msra.mxu0 0.0
  %2447 = vmatprep.subr.mxu0 0.0
  %2448 = vmatpush2.msra.mxu0 0.0
  %2449 = vmatprep.subr.mxu0 0.0
  %2450 = vmatpush2.msra.mxu0 0.0
  %2451 = vmatprep.subr.mxu0 0.0
  %2452 = vmatpush2.msra.mxu0 0.0
  %2453 = vmatprep.subr.mxu0 0.0
  %2454 = vmatpush2.msra.mxu0 0.0
  %2455 = vmatprep.subr.mxu0 0.0
  %2456 = vmatpush2.msra.mxu0 0.0
  %2457 = vmatprep.subr.mxu0 0.0
  %2458 = vmatpush2.msra.mxu0 0.0
  %2459 = vmatprep.subr.mxu0 0.0
  %2460 = vmatpush2.msra.mxu0 0.0
  %2461 = vmatprep.subr.mxu0 0.0
  %2462 = vmatpush2.msra.mxu0 0.0
  %2463 = vmatprep.mubr.f32.mxu0 0.0
  %2464 = vmatmul.mubr.f32.gmra.mxu0 %v2221
  %v2465 = vpop.f32.mrf.mxu0
  %v2466 = vadd.f32 0.0, %v2465
  %v2467 = vpop.f32.mrf.mxu0
  %v2468 = vadd.f32 0.0, %v2467
  %2469 = vdwg.mxu0
  %2470 = vmatprep.subr.mxu0 %v159
  %2471 = vmatpush1.msra.mxu0 %v158
  %2472 = vmatprep.subr.mxu0 %v155
  %2473 = vmatpush1.msra.mxu0 %v154
  %2474 = vmatprep.subr.mxu0 %v151
  %2475 = vmatpush1.msra.mxu0 %v150
  %2476 = vmatprep.subr.mxu0 %v147
  %2477 = vmatpush1.msra.mxu0 %v146
  %2478 = vmatprep.subr.mxu0 %v143
  %2479 = vmatpush1.msra.mxu0 %v142
  %2480 = vmatprep.subr.mxu0 %v139
  %2481 = vmatpush1.msra.mxu0 %v138
  %2482 = vmatprep.subr.mxu0 %v135
  %2483 = vmatpush1.msra.mxu0 %v134
  %2484 = vmatprep.subr.mxu0 %v131
  %2485 = vmatpush1.msra.mxu0 %v130
  %2486 = vmatprep.subr.mxu0 %v127
  %2487 = vmatpush1.msra.mxu0 %v126
  %2488 = vmatprep.subr.mxu0 %v123
  %2489 = vmatpush1.msra.mxu0 %v122
  %2490 = vmatprep.subr.mxu0 %v119
  %2491 = vmatpush1.msra.mxu0 %v118
  %2492 = vmatprep.subr.mxu0 %v115
  %2493 = vmatpush1.msra.mxu0 %v114
  %2494 = vmatprep.subr.mxu0 %v111
  %2495 = vmatpush1.msra.mxu0 %v110
  %2496 = vmatprep.subr.mxu0 %v107
  %2497 = vmatpush1.msra.mxu0 %v106
  %2498 = vmatprep.subr.mxu0 %v103
  %2499 = vmatpush1.msra.mxu0 %v102
  %2500 = vmatprep.subr.mxu0 %v99
  %2501 = vmatpush1.msra.mxu0 %v98
  %2502 = vmatprep.subr.mxu0 0.0
  %2503 = vmatpush2.msra.mxu0 0.0
  %2504 = vmatprep.subr.mxu0 0.0
  %2505 = vmatpush2.msra.mxu0 0.0
  %2506 = vmatprep.subr.mxu0 0.0
  %2507 = vmatpush2.msra.mxu0 0.0
  %2508 = vmatprep.subr.mxu0 0.0
  %2509 = vmatpush2.msra.mxu0 0.0
  %2510 = vmatprep.subr.mxu0 0.0
  %2511 = vmatpush2.msra.mxu0 0.0
  %2512 = vmatprep.subr.mxu0 0.0
  %2513 = vmatpush2.msra.mxu0 0.0
  %2514 = vmatprep.subr.mxu0 0.0
  %2515 = vmatpush2.msra.mxu0 0.0
  %2516 = vmatprep.subr.mxu0 0.0
  %2517 = vmatpush2.msra.mxu0 0.0
  %2518 = vmatprep.subr.mxu0 0.0
  %2519 = vmatpush2.msra.mxu0 0.0
  %2520 = vmatprep.subr.mxu0 0.0
  %2521 = vmatpush2.msra.mxu0 0.0
  %2522 = vmatprep.subr.mxu0 0.0
  %2523 = vmatpush2.msra.mxu0 0.0
  %2524 = vmatprep.subr.mxu0 0.0
  %2525 = vmatpush2.msra.mxu0 0.0
  %2526 = vmatprep.subr.mxu0 0.0
  %2527 = vmatpush2.msra.mxu0 0.0
  %2528 = vmatprep.subr.mxu0 0.0
  %2529 = vmatpush2.msra.mxu0 0.0
  %2530 = vmatprep.subr.mxu0 0.0
  %2531 = vmatpush2.msra.mxu0 0.0
  %2532 = vmatprep.subr.mxu0 0.0
  %2533 = vmatpush2.msra.mxu0 0.0
  %2534 = vmatprep.mubr.f32.mxu0 0.0
  %2535 = vmatmul.mubr.f32.gmra.mxu0 %v2221
  %v2536 = vpop.f32.mrf.mxu0
  %v2537 = vadd.f32 0.0, %v2536
  %v2538 = vpop.f32.mrf.mxu0
  %v2539 = vadd.f32 0.0, %v2538
  %2540 = vdwg.mxu0
  %v2541 = vadd.f32 %v552, %v2466
  %v2542 = vadd.f32 %v556, %v2468
  %v2543 = vadd.f32 %v560, %v2537
  %v2544 = vadd.f32 %v564, %v2539
  %2545 = vmatprep.subr.mxu0 %v221
  %2546 = vmatpush1.msra.mxu0 %v220
  %2547 = vmatprep.subr.mxu0 %v217
  %2548 = vmatpush1.msra.mxu0 %v216
  %2549 = vmatprep.subr.mxu0 %v213
  %2550 = vmatpush1.msra.mxu0 %v212
  %2551 = vmatprep.subr.mxu0 %v209
  %2552 = vmatpush1.msra.mxu0 %v208
  %2553 = vmatprep.subr.mxu0 %v205
  %2554 = vmatpush1.msra.mxu0 %v204
  %2555 = vmatprep.subr.mxu0 %v201
  %2556 = vmatpush1.msra.mxu0 %v200
  %2557 = vmatprep.subr.mxu0 %v197
  %2558 = vmatpush1.msra.mxu0 %v196
  %2559 = vmatprep.subr.mxu0 %v193
  %2560 = vmatpush1.msra.mxu0 %v192
  %2561 = vmatprep.subr.mxu0 %v189
  %2562 = vmatpush1.msra.mxu0 %v188
  %2563 = vmatprep.subr.mxu0 %v185
  %2564 = vmatpush1.msra.mxu0 %v184
  %2565 = vmatprep.subr.mxu0 %v181
  %2566 = vmatpush1.msra.mxu0 %v180
  %2567 = vmatprep.subr.mxu0 %v177
  %2568 = vmatpush1.msra.mxu0 %v176
  %2569 = vmatprep.subr.mxu0 %v173
  %2570 = vmatpush1.msra.mxu0 %v172
  %2571 = vmatprep.subr.mxu0 %v169
  %2572 = vmatpush1.msra.mxu0 %v168
  %2573 = vmatprep.subr.mxu0 %v165
  %2574 = vmatpush1.msra.mxu0 %v164
  %2575 = vmatprep.subr.mxu0 %v161
  %2576 = vmatpush1.msra.mxu0 %v160
  %2577 = vmatprep.subr.mxu0 0.0
  %2578 = vmatpush2.msra.mxu0 0.0
  %2579 = vmatprep.subr.mxu0 0.0
  %2580 = vmatpush2.msra.mxu0 0.0
  %2581 = vmatprep.subr.mxu0 0.0
  %2582 = vmatpush2.msra.mxu0 0.0
  %2583 = vmatprep.subr.mxu0 0.0
  %2584 = vmatpush2.msra.mxu0 0.0
  %2585 = vmatprep.subr.mxu0 0.0
  %2586 = vmatpush2.msra.mxu0 0.0
  %2587 = vmatprep.subr.mxu0 0.0
  %2588 = vmatpush2.msra.mxu0 0.0
  %2589 = vmatprep.subr.mxu0 0.0
  %2590 = vmatpush2.msra.mxu0 0.0
  %2591 = vmatprep.subr.mxu0 0.0
  %2592 = vmatpush2.msra.mxu0 0.0
  %2593 = vmatprep.subr.mxu0 0.0
  %2594 = vmatpush2.msra.mxu0 0.0
  %2595 = vmatprep.subr.mxu0 0.0
  %2596 = vmatpush2.msra.mxu0 0.0
  %2597 = vmatprep.subr.mxu0 0.0
  %2598 = vmatpush2.msra.mxu0 0.0
  %2599 = vmatprep.subr.mxu0 0.0
  %2600 = vmatpush2.msra.mxu0 0.0
  %2601 = vmatprep.subr.mxu0 0.0
  %2602 = vmatpush2.msra.mxu0 0.0
  %2603 = vmatprep.subr.mxu0 0.0
  %2604 = vmatpush2.msra.mxu0 0.0
  %2605 = vmatprep.subr.mxu0 0.0
  %2606 = vmatpush2.msra.mxu0 0.0
  %2607 = vmatprep.subr.mxu0 0.0
  %2608 = vmatpush2.msra.mxu0 0.0
  %2609 = vmatprep.mubr.f32.mxu0 0.0
  %2610 = vmatmul.mubr.f32.gmra.mxu0 %v2245
  %v2611 = vpop.f32.mrf.mxu0
  %v2612 = vadd.f32 0.0, %v2611
  %v2613 = vpop.f32.mrf.mxu0
  %v2614 = vadd.f32 0.0, %v2613
  %2615 = vdwg.mxu0
  %2616 = vmatprep.subr.mxu0 %v223
  %2617 = vmatpush1.msra.mxu0 %v222
  %2618 = vmatprep.subr.mxu0 %v219
  %2619 = vmatpush1.msra.mxu0 %v218
  %2620 = vmatprep.subr.mxu0 %v215
  %2621 = vmatpush1.msra.mxu0 %v214
  %2622 = vmatprep.subr.mxu0 %v211
  %2623 = vmatpush1.msra.mxu0 %v210
  %2624 = vmatprep.subr.mxu0 %v207
  %2625 = vmatpush1.msra.mxu0 %v206
  %2626 = vmatprep.subr.mxu0 %v203
  %2627 = vmatpush1.msra.mxu0 %v202
  %2628 = vmatprep.subr.mxu0 %v199
  %2629 = vmatpush1.msra.mxu0 %v198
  %2630 = vmatprep.subr.mxu0 %v195
  %2631 = vmatpush1.msra.mxu0 %v194
  %2632 = vmatprep.subr.mxu0 %v191
  %2633 = vmatpush1.msra.mxu0 %v190
  %2634 = vmatprep.subr.mxu0 %v187
  %2635 = vmatpush1.msra.mxu0 %v186
  %2636 = vmatprep.subr.mxu0 %v183
  %2637 = vmatpush1.msra.mxu0 %v182
  %2638 = vmatprep.subr.mxu0 %v179
  %2639 = vmatpush1.msra.mxu0 %v178
  %2640 = vmatprep.subr.mxu0 %v175
  %2641 = vmatpush1.msra.mxu0 %v174
  %2642 = vmatprep.subr.mxu0 %v171
  %2643 = vmatpush1.msra.mxu0 %v170
  %2644 = vmatprep.subr.mxu0 %v167
  %2645 = vmatpush1.msra.mxu0 %v166
  %2646 = vmatprep.subr.mxu0 %v163
  %2647 = vmatpush1.msra.mxu0 %v162
  %2648 = vmatprep.subr.mxu0 0.0
  %2649 = vmatpush2.msra.mxu0 0.0
  %2650 = vmatprep.subr.mxu0 0.0
  %2651 = vmatpush2.msra.mxu0 0.0
  %2652 = vmatprep.subr.mxu0 0.0
  %2653 = vmatpush2.msra.mxu0 0.0
  %2654 = vmatprep.subr.mxu0 0.0
  %2655 = vmatpush2.msra.mxu0 0.0
  %2656 = vmatprep.subr.mxu0 0.0
  %2657 = vmatpush2.msra.mxu0 0.0
  %2658 = vmatprep.subr.mxu0 0.0
  %2659 = vmatpush2.msra.mxu0 0.0
  %2660 = vmatprep.subr.mxu0 0.0
  %2661 = vmatpush2.msra.mxu0 0.0
  %2662 = vmatprep.subr.mxu0 0.0
  %2663 = vmatpush2.msra.mxu0 0.0
  %2664 = vmatprep.subr.mxu0 0.0
  %2665 = vmatpush2.msra.mxu0 0.0
  %2666 = vmatprep.subr.mxu0 0.0
  %2667 = vmatpush2.msra.mxu0 0.0
  %2668 = vmatprep.subr.mxu0 0.0
  %2669 = vmatpush2.msra.mxu0 0.0
  %2670 = vmatprep.subr.mxu0 0.0
  %2671 = vmatpush2.msra.mxu0 0.0
  %2672 = vmatprep.subr.mxu0 0.0
  %2673 = vmatpush2.msra.mxu0 0.0
  %2674 = vmatprep.subr.mxu0 0.0
  %2675 = vmatpush2.msra.mxu0 0.0
  %2676 = vmatprep.subr.mxu0 0.0
  %2677 = vmatpush2.msra.mxu0 0.0
  %2678 = vmatprep.subr.mxu0 0.0
  %2679 = vmatpush2.msra.mxu0 0.0
  %2680 = vmatprep.mubr.f32.mxu0 0.0
  %2681 = vmatmul.mubr.f32.gmra.mxu0 %v2245
  %v2682 = vpop.f32.mrf.mxu0
  %v2683 = vadd.f32 0.0, %v2682
  %v2684 = vpop.f32.mrf.mxu0
  %v2685 = vadd.f32 0.0, %v2684
  %2686 = vdwg.mxu0
  %v2687 = vadd.f32 %v2541, %v2612
  %v2688 = vadd.f32 %v2542, %v2614
  %v2689 = vadd.f32 %v2543, %v2683
  %v2690 = vadd.f32 %v2544, %v2685
  %v2691 = vxor.u32 %v2395, 2147483648
  %v2692 = vxor.u32 %v2396, 2147483648
  %v2693 = vxor.u32 %v2397, 2147483648
  %v2694 = vmul.f32 %v2691, 1.442695
  %v2695 = vpow.pop %v2694
  %v2696 = vmul.f32 %v2692, 1.442695
  %v2697 = vpow.pop %v2696
  %v2698 = vmul.f32 %v2693, 1.442695
  %v2699 = vpow.pop %v2698
  %v2700 = vadd.f32 %v2695, 1.0
  %v2701 = vadd.f32 %v2697, 1.0
  %v2702 = vadd.f32 %v2699, 1.0
  %v2703 = vrcp.pop %v2700
  %v2704 = vmul.f32 1.0, %v2703
  %v2705 = vrcp.pop %v2701
  %v2706 = vmul.f32 1.0, %v2705
  %v2707 = vrcp.pop %v2702
  %v2708 = vmul.f32 1.0, %v2707
  %v2709 = vtanh.pop %v2398
  %v2710 = vmul.f32 %v2706, %v2219
  %v2711 = vmul.f32 %v2704, %v2709
  %v2712 = vadd.f32 %v2710, %v2711
  %v2713 = vtanh.pop %v2712
  %v2714 = vmul.f32 %v2708, %v2713
  %v2715 = vxor.u32 %v2687, 2147483648
  %v2716 = vxor.u32 %v2688, 2147483648
  %v2717 = vxor.u32 %v2689, 2147483648
  %v2718 = vmul.f32 %v2715, 1.442695
  %v2719 = vpow.pop %v2718
  %v2720 = vmul.f32 %v2716, 1.442695
  %v2721 = vpow.pop %v2720
  %v2722 = vmul.f32 %v2717, 1.442695
  %v2723 = vpow.pop %v2722
  %v2724 = vadd.f32 %v2719, 1.0
  %v2725 = vadd.f32 %v2721, 1.0
  %v2726 = vadd.f32 %v2723, 1.0
  %v2727 = vrcp.pop %v2724
  %v2728 = vmul.f32 1.0, %v2727
  %v2729 = vrcp.pop %v2725
  %v2730 = vmul.f32 1.0, %v2729
  %v2731 = vrcp.pop %v2726
  %v2732 = vmul.f32 1.0, %v2731
  %v2733 = vtanh.pop %v2690
  %v2734 = vmul.f32 %v2730, %v2243
  %v2735 = vmul.f32 %v2728, %v2733
  %v2736 = vadd.f32 %v2734, %v2735
  %v2737 = vtanh.pop %v2736
  %v2738 = vmul.f32 %v2732, %v2737
  %s2739 = smul.u32 6, 4
  %s2740 = smul.addr %s2739, 8
  %s2741 = scalar_lea.vmem %s0, %s2740
  %v2742 = vld [vmem:[%s2741] sm:$0xff]
  %v2743 = vld [vmem:[%s2741 + $0x8] sm:$0xff]
  %v2744 = vld [vmem:[%s2741 + $0x10] sm:$0xff]
  %v2745 = vld [vmem:[%s2741 + $0x18] sm:$0xff]
  %2746 = vmatprep.subr.mxu0 %v93
  %2747 = vmatpush1.msra.mxu0 %v92
  %2748 = vmatprep.subr.mxu0 %v89
  %2749 = vmatpush1.msra.mxu0 %v88
  %2750 = vmatprep.subr.mxu0 %v85
  %2751 = vmatpush1.msra.mxu0 %v84
  %2752 = vmatprep.subr.mxu0 %v81
  %2753 = vmatpush1.msra.mxu0 %v80
  %2754 = vmatprep.subr.mxu0 %v77
  %2755 = vmatpush1.msra.mxu0 %v76
  %2756 = vmatprep.subr.mxu0 %v73
  %2757 = vmatpush1.msra.mxu0 %v72
  %2758 = vmatprep.subr.mxu0 %v69
  %2759 = vmatpush1.msra.mxu0 %v68
  %2760 = vmatprep.subr.mxu0 %v65
  %2761 = vmatpush1.msra.mxu0 %v64
  %2762 = vmatprep.subr.mxu0 %v61
  %2763 = vmatpush1.msra.mxu0 %v60
  %2764 = vmatprep.subr.mxu0 %v57
  %2765 = vmatpush1.msra.mxu0 %v56
  %2766 = vmatprep.subr.mxu0 %v53
  %2767 = vmatpush1.msra.mxu0 %v52
  %2768 = vmatprep.subr.mxu0 %v49
  %2769 = vmatpush1.msra.mxu0 %v48
  %2770 = vmatprep.subr.mxu0 %v45
  %2771 = vmatpush1.msra.mxu0 %v44
  %2772 = vmatprep.subr.mxu0 %v41
  %2773 = vmatpush1.msra.mxu0 %v40
  %2774 = vmatprep.subr.mxu0 %v37
  %2775 = vmatpush1.msra.mxu0 %v36
  %2776 = vmatprep.subr.mxu0 %v33
  %2777 = vmatpush1.msra.mxu0 %v32
  %2778 = vmatprep.subr.mxu0 0.0
  %2779 = vmatpush2.msra.mxu0 0.0
  %2780 = vmatprep.subr.mxu0 0.0
  %2781 = vmatpush2.msra.mxu0 0.0
  %2782 = vmatprep.subr.mxu0 0.0
  %2783 = vmatpush2.msra.mxu0 0.0
  %2784 = vmatprep.subr.mxu0 0.0
  %2785 = vmatpush2.msra.mxu0 0.0
  %2786 = vmatprep.subr.mxu0 0.0
  %2787 = vmatpush2.msra.mxu0 0.0
  %2788 = vmatprep.subr.mxu0 0.0
  %2789 = vmatpush2.msra.mxu0 0.0
  %2790 = vmatprep.subr.mxu0 0.0
  %2791 = vmatpush2.msra.mxu0 0.0
  %2792 = vmatprep.subr.mxu0 0.0
  %2793 = vmatpush2.msra.mxu0 0.0
  %2794 = vmatprep.subr.mxu0 0.0
  %2795 = vmatpush2.msra.mxu0 0.0
  %2796 = vmatprep.subr.mxu0 0.0
  %2797 = vmatpush2.msra.mxu0 0.0
  %2798 = vmatprep.subr.mxu0 0.0
  %2799 = vmatpush2.msra.mxu0 0.0
  %2800 = vmatprep.subr.mxu0 0.0
  %2801 = vmatpush2.msra.mxu0 0.0
  %2802 = vmatprep.subr.mxu0 0.0
  %2803 = vmatpush2.msra.mxu0 0.0
  %2804 = vmatprep.subr.mxu0 0.0
  %2805 = vmatpush2.msra.mxu0 0.0
  %2806 = vmatprep.subr.mxu0 0.0
  %2807 = vmatpush2.msra.mxu0 0.0
  %2808 = vmatprep.subr.mxu0 0.0
  %2809 = vmatpush2.msra.mxu0 0.0
  %2810 = vmatprep.mubr.f32.mxu0 0.0
  %2811 = vmatmul.mubr.f32.gmra.mxu0 %v2714
  %v2812 = vpop.f32.mrf.mxu0
  %v2813 = vadd.f32 0.0, %v2812
  %v2814 = vpop.f32.mrf.mxu0
  %v2815 = vadd.f32 0.0, %v2814
  %2816 = vdwg.mxu0
  %2817 = vmatprep.subr.mxu0 %v95
  %2818 = vmatpush1.msra.mxu0 %v94
  %2819 = vmatprep.subr.mxu0 %v91
  %2820 = vmatpush1.msra.mxu0 %v90
  %2821 = vmatprep.subr.mxu0 %v87
  %2822 = vmatpush1.msra.mxu0 %v86
  %2823 = vmatprep.subr.mxu0 %v83
  %2824 = vmatpush1.msra.mxu0 %v82
  %2825 = vmatprep.subr.mxu0 %v79
  %2826 = vmatpush1.msra.mxu0 %v78
  %2827 = vmatprep.subr.mxu0 %v75
  %2828 = vmatpush1.msra.mxu0 %v74
  %2829 = vmatprep.subr.mxu0 %v71
  %2830 = vmatpush1.msra.mxu0 %v70
  %2831 = vmatprep.subr.mxu0 %v67
  %2832 = vmatpush1.msra.mxu0 %v66
  %2833 = vmatprep.subr.mxu0 %v63
  %2834 = vmatpush1.msra.mxu0 %v62
  %2835 = vmatprep.subr.mxu0 %v59
  %2836 = vmatpush1.msra.mxu0 %v58
  %2837 = vmatprep.subr.mxu0 %v55
  %2838 = vmatpush1.msra.mxu0 %v54
  %2839 = vmatprep.subr.mxu0 %v51
  %2840 = vmatpush1.msra.mxu0 %v50
  %2841 = vmatprep.subr.mxu0 %v47
  %2842 = vmatpush1.msra.mxu0 %v46
  %2843 = vmatprep.subr.mxu0 %v43
  %2844 = vmatpush1.msra.mxu0 %v42
  %2845 = vmatprep.subr.mxu0 %v39
  %2846 = vmatpush1.msra.mxu0 %v38
  %2847 = vmatprep.subr.mxu0 %v35
  %2848 = vmatpush1.msra.mxu0 %v34
  %2849 = vmatprep.subr.mxu0 0.0
  %2850 = vmatpush2.msra.mxu0 0.0
  %2851 = vmatprep.subr.mxu0 0.0
  %2852 = vmatpush2.msra.mxu0 0.0
  %2853 = vmatprep.subr.mxu0 0.0
  %2854 = vmatpush2.msra.mxu0 0.0
  %2855 = vmatprep.subr.mxu0 0.0
  %2856 = vmatpush2.msra.mxu0 0.0
  %2857 = vmatprep.subr.mxu0 0.0
  %2858 = vmatpush2.msra.mxu0 0.0
  %2859 = vmatprep.subr.mxu0 0.0
  %2860 = vmatpush2.msra.mxu0 0.0
  %2861 = vmatprep.subr.mxu0 0.0
  %2862 = vmatpush2.msra.mxu0 0.0
  %2863 = vmatprep.subr.mxu0 0.0
  %2864 = vmatpush2.msra.mxu0 0.0
  %2865 = vmatprep.subr.mxu0 0.0
  %2866 = vmatpush2.msra.mxu0 0.0
  %2867 = vmatprep.subr.mxu0 0.0
  %2868 = vmatpush2.msra.mxu0 0.0
  %2869 = vmatprep.subr.mxu0 0.0
  %2870 = vmatpush2.msra.mxu0 0.0
  %2871 = vmatprep.subr.mxu0 0.0
  %2872 = vmatpush2.msra.mxu0 0.0
  %2873 = vmatprep.subr.mxu0 0.0
  %2874 = vmatpush2.msra.mxu0 0.0
  %2875 = vmatprep.subr.mxu0 0.0
  %2876 = vmatpush2.msra.mxu0 0.0
  %2877 = vmatprep.subr.mxu0 0.0
  %2878 = vmatpush2.msra.mxu0 0.0
  %2879 = vmatprep.subr.mxu0 0.0
  %2880 = vmatpush2.msra.mxu0 0.0
  %2881 = vmatprep.mubr.f32.mxu0 0.0
  %2882 = vmatmul.mubr.f32.gmra.mxu0 %v2714
  %v2883 = vpop.f32.mrf.mxu0
  %v2884 = vadd.f32 0.0, %v2883
  %v2885 = vpop.f32.mrf.mxu0
  %v2886 = vadd.f32 0.0, %v2885
  %2887 = vdwg.mxu0
  %v2888 = vadd.f32 %v2742, %v2813
  %v2889 = vadd.f32 %v2743, %v2815
  %v2890 = vadd.f32 %v2744, %v2884
  %v2891 = vadd.f32 %v2745, %v2886
  %2892 = vmatprep.subr.mxu0 %v157
  %2893 = vmatpush1.msra.mxu0 %v156
  %2894 = vmatprep.subr.mxu0 %v153
  %2895 = vmatpush1.msra.mxu0 %v152
  %2896 = vmatprep.subr.mxu0 %v149
  %2897 = vmatpush1.msra.mxu0 %v148
  %2898 = vmatprep.subr.mxu0 %v145
  %2899 = vmatpush1.msra.mxu0 %v144
  %2900 = vmatprep.subr.mxu0 %v141
  %2901 = vmatpush1.msra.mxu0 %v140
  %2902 = vmatprep.subr.mxu0 %v137
  %2903 = vmatpush1.msra.mxu0 %v136
  %2904 = vmatprep.subr.mxu0 %v133
  %2905 = vmatpush1.msra.mxu0 %v132
  %2906 = vmatprep.subr.mxu0 %v129
  %2907 = vmatpush1.msra.mxu0 %v128
  %2908 = vmatprep.subr.mxu0 %v125
  %2909 = vmatpush1.msra.mxu0 %v124
  %2910 = vmatprep.subr.mxu0 %v121
  %2911 = vmatpush1.msra.mxu0 %v120
  %2912 = vmatprep.subr.mxu0 %v117
  %2913 = vmatpush1.msra.mxu0 %v116
  %2914 = vmatprep.subr.mxu0 %v113
  %2915 = vmatpush1.msra.mxu0 %v112
  %2916 = vmatprep.subr.mxu0 %v109
  %2917 = vmatpush1.msra.mxu0 %v108
  %2918 = vmatprep.subr.mxu0 %v105
  %2919 = vmatpush1.msra.mxu0 %v104
  %2920 = vmatprep.subr.mxu0 %v101
  %2921 = vmatpush1.msra.mxu0 %v100
  %2922 = vmatprep.subr.mxu0 %v97
  %2923 = vmatpush1.msra.mxu0 %v96
  %2924 = vmatprep.subr.mxu0 0.0
  %2925 = vmatpush2.msra.mxu0 0.0
  %2926 = vmatprep.subr.mxu0 0.0
  %2927 = vmatpush2.msra.mxu0 0.0
  %2928 = vmatprep.subr.mxu0 0.0
  %2929 = vmatpush2.msra.mxu0 0.0
  %2930 = vmatprep.subr.mxu0 0.0
  %2931 = vmatpush2.msra.mxu0 0.0
  %2932 = vmatprep.subr.mxu0 0.0
  %2933 = vmatpush2.msra.mxu0 0.0
  %2934 = vmatprep.subr.mxu0 0.0
  %2935 = vmatpush2.msra.mxu0 0.0
  %2936 = vmatprep.subr.mxu0 0.0
  %2937 = vmatpush2.msra.mxu0 0.0
  %2938 = vmatprep.subr.mxu0 0.0
  %2939 = vmatpush2.msra.mxu0 0.0
  %2940 = vmatprep.subr.mxu0 0.0
  %2941 = vmatpush2.msra.mxu0 0.0
  %2942 = vmatprep.subr.mxu0 0.0
  %2943 = vmatpush2.msra.mxu0 0.0
  %2944 = vmatprep.subr.mxu0 0.0
  %2945 = vmatpush2.msra.mxu0 0.0
  %2946 = vmatprep.subr.mxu0 0.0
  %2947 = vmatpush2.msra.mxu0 0.0
  %2948 = vmatprep.subr.mxu0 0.0
  %2949 = vmatpush2.msra.mxu0 0.0
  %2950 = vmatprep.subr.mxu0 0.0
  %2951 = vmatpush2.msra.mxu0 0.0
  %2952 = vmatprep.subr.mxu0 0.0
  %2953 = vmatpush2.msra.mxu0 0.0
  %2954 = vmatprep.subr.mxu0 0.0
  %2955 = vmatpush2.msra.mxu0 0.0
  %2956 = vmatprep.mubr.f32.mxu0 0.0
  %2957 = vmatmul.mubr.f32.gmra.mxu0 %v2714
  %v2958 = vpop.f32.mrf.mxu0
  %v2959 = vadd.f32 0.0, %v2958
  %v2960 = vpop.f32.mrf.mxu0
  %v2961 = vadd.f32 0.0, %v2960
  %2962 = vdwg.mxu0
  %2963 = vmatprep.subr.mxu0 %v159
  %2964 = vmatpush1.msra.mxu0 %v158
  %2965 = vmatprep.subr.mxu0 %v155
  %2966 = vmatpush1.msra.mxu0 %v154
  %2967 = vmatprep.subr.mxu0 %v151
  %2968 = vmatpush1.msra.mxu0 %v150
  %2969 = vmatprep.subr.mxu0 %v147
  %2970 = vmatpush1.msra.mxu0 %v146
  %2971 = vmatprep.subr.mxu0 %v143
  %2972 = vmatpush1.msra.mxu0 %v142
  %2973 = vmatprep.subr.mxu0 %v139
  %2974 = vmatpush1.msra.mxu0 %v138
  %2975 = vmatprep.subr.mxu0 %v135
  %2976 = vmatpush1.msra.mxu0 %v134
  %2977 = vmatprep.subr.mxu0 %v131
  %2978 = vmatpush1.msra.mxu0 %v130
  %2979 = vmatprep.subr.mxu0 %v127
  %2980 = vmatpush1.msra.mxu0 %v126
  %2981 = vmatprep.subr.mxu0 %v123
  %2982 = vmatpush1.msra.mxu0 %v122
  %2983 = vmatprep.subr.mxu0 %v119
  %2984 = vmatpush1.msra.mxu0 %v118
  %2985 = vmatprep.subr.mxu0 %v115
  %2986 = vmatpush1.msra.mxu0 %v114
  %2987 = vmatprep.subr.mxu0 %v111
  %2988 = vmatpush1.msra.mxu0 %v110
  %2989 = vmatprep.subr.mxu0 %v107
  %2990 = vmatpush1.msra.mxu0 %v106
  %2991 = vmatprep.subr.mxu0 %v103
  %2992 = vmatpush1.msra.mxu0 %v102
  %2993 = vmatprep.subr.mxu0 %v99
  %2994 = vmatpush1.msra.mxu0 %v98
  %2995 = vmatprep.subr.mxu0 0.0
  %2996 = vmatpush2.msra.mxu0 0.0
  %2997 = vmatprep.subr.mxu0 0.0
  %2998 = vmatpush2.msra.mxu0 0.0
  %2999 = vmatprep.subr.mxu0 0.0
  %3000 = vmatpush2.msra.mxu0 0.0
  %3001 = vmatprep.subr.mxu0 0.0
  %3002 = vmatpush2.msra.mxu0 0.0
  %3003 = vmatprep.subr.mxu0 0.0
  %3004 = vmatpush2.msra.mxu0 0.0
  %3005 = vmatprep.subr.mxu0 0.0
  %3006 = vmatpush2.msra.mxu0 0.0
  %3007 = vmatprep.subr.mxu0 0.0
  %3008 = vmatpush2.msra.mxu0 0.0
  %3009 = vmatprep.subr.mxu0 0.0
  %3010 = vmatpush2.msra.mxu0 0.0
  %3011 = vmatprep.subr.mxu0 0.0
  %3012 = vmatpush2.msra.mxu0 0.0
  %3013 = vmatprep.subr.mxu0 0.0
  %3014 = vmatpush2.msra.mxu0 0.0
  %3015 = vmatprep.subr.mxu0 0.0
  %3016 = vmatpush2.msra.mxu0 0.0
  %3017 = vmatprep.subr.mxu0 0.0
  %3018 = vmatpush2.msra.mxu0 0.0
  %3019 = vmatprep.subr.mxu0 0.0
  %3020 = vmatpush2.msra.mxu0 0.0
  %3021 = vmatprep.subr.mxu0 0.0
  %3022 = vmatpush2.msra.mxu0 0.0
  %3023 = vmatprep.subr.mxu0 0.0
  %3024 = vmatpush2.msra.mxu0 0.0
  %3025 = vmatprep.subr.mxu0 0.0
  %3026 = vmatpush2.msra.mxu0 0.0
  %3027 = vmatprep.mubr.f32.mxu0 0.0
  %3028 = vmatmul.mubr.f32.gmra.mxu0 %v2714
  %v3029 = vpop.f32.mrf.mxu0
  %v3030 = vadd.f32 0.0, %v3029
  %v3031 = vpop.f32.mrf.mxu0
  %v3032 = vadd.f32 0.0, %v3031
  %3033 = vdwg.mxu0
  %v3034 = vadd.f32 %v552, %v2959
  %v3035 = vadd.f32 %v556, %v2961
  %v3036 = vadd.f32 %v560, %v3030
  %v3037 = vadd.f32 %v564, %v3032
  %3038 = vmatprep.subr.mxu0 %v221
  %3039 = vmatpush1.msra.mxu0 %v220
  %3040 = vmatprep.subr.mxu0 %v217
  %3041 = vmatpush1.msra.mxu0 %v216
  %3042 = vmatprep.subr.mxu0 %v213
  %3043 = vmatpush1.msra.mxu0 %v212
  %3044 = vmatprep.subr.mxu0 %v209
  %3045 = vmatpush1.msra.mxu0 %v208
  %3046 = vmatprep.subr.mxu0 %v205
  %3047 = vmatpush1.msra.mxu0 %v204
  %3048 = vmatprep.subr.mxu0 %v201
  %3049 = vmatpush1.msra.mxu0 %v200
  %3050 = vmatprep.subr.mxu0 %v197
  %3051 = vmatpush1.msra.mxu0 %v196
  %3052 = vmatprep.subr.mxu0 %v193
  %3053 = vmatpush1.msra.mxu0 %v192
  %3054 = vmatprep.subr.mxu0 %v189
  %3055 = vmatpush1.msra.mxu0 %v188
  %3056 = vmatprep.subr.mxu0 %v185
  %3057 = vmatpush1.msra.mxu0 %v184
  %3058 = vmatprep.subr.mxu0 %v181
  %3059 = vmatpush1.msra.mxu0 %v180
  %3060 = vmatprep.subr.mxu0 %v177
  %3061 = vmatpush1.msra.mxu0 %v176
  %3062 = vmatprep.subr.mxu0 %v173
  %3063 = vmatpush1.msra.mxu0 %v172
  %3064 = vmatprep.subr.mxu0 %v169
  %3065 = vmatpush1.msra.mxu0 %v168
  %3066 = vmatprep.subr.mxu0 %v165
  %3067 = vmatpush1.msra.mxu0 %v164
  %3068 = vmatprep.subr.mxu0 %v161
  %3069 = vmatpush1.msra.mxu0 %v160
  %3070 = vmatprep.subr.mxu0 0.0
  %3071 = vmatpush2.msra.mxu0 0.0
  %3072 = vmatprep.subr.mxu0 0.0
  %3073 = vmatpush2.msra.mxu0 0.0
  %3074 = vmatprep.subr.mxu0 0.0
  %3075 = vmatpush2.msra.mxu0 0.0
  %3076 = vmatprep.subr.mxu0 0.0
  %3077 = vmatpush2.msra.mxu0 0.0
  %3078 = vmatprep.subr.mxu0 0.0
  %3079 = vmatpush2.msra.mxu0 0.0
  %3080 = vmatprep.subr.mxu0 0.0
  %3081 = vmatpush2.msra.mxu0 0.0
  %3082 = vmatprep.subr.mxu0 0.0
  %3083 = vmatpush2.msra.mxu0 0.0
  %3084 = vmatprep.subr.mxu0 0.0
  %3085 = vmatpush2.msra.mxu0 0.0
  %3086 = vmatprep.subr.mxu0 0.0
  %3087 = vmatpush2.msra.mxu0 0.0
  %3088 = vmatprep.subr.mxu0 0.0
  %3089 = vmatpush2.msra.mxu0 0.0
  %3090 = vmatprep.subr.mxu0 0.0
  %3091 = vmatpush2.msra.mxu0 0.0
  %3092 = vmatprep.subr.mxu0 0.0
  %3093 = vmatpush2.msra.mxu0 0.0
  %3094 = vmatprep.subr.mxu0 0.0
  %3095 = vmatpush2.msra.mxu0 0.0
  %3096 = vmatprep.subr.mxu0 0.0
  %3097 = vmatpush2.msra.mxu0 0.0
  %3098 = vmatprep.subr.mxu0 0.0
  %3099 = vmatpush2.msra.mxu0 0.0
  %3100 = vmatprep.subr.mxu0 0.0
  %3101 = vmatpush2.msra.mxu0 0.0
  %3102 = vmatprep.mubr.f32.mxu0 0.0
  %3103 = vmatmul.mubr.f32.gmra.mxu0 %v2738
  %v3104 = vpop.f32.mrf.mxu0
  %v3105 = vadd.f32 0.0, %v3104
  %v3106 = vpop.f32.mrf.mxu0
  %v3107 = vadd.f32 0.0, %v3106
  %3108 = vdwg.mxu0
  %3109 = vmatprep.subr.mxu0 %v223
  %3110 = vmatpush1.msra.mxu0 %v222
  %3111 = vmatprep.subr.mxu0 %v219
  %3112 = vmatpush1.msra.mxu0 %v218
  %3113 = vmatprep.subr.mxu0 %v215
  %3114 = vmatpush1.msra.mxu0 %v214
  %3115 = vmatprep.subr.mxu0 %v211
  %3116 = vmatpush1.msra.mxu0 %v210
  %3117 = vmatprep.subr.mxu0 %v207
  %3118 = vmatpush1.msra.mxu0 %v206
  %3119 = vmatprep.subr.mxu0 %v203
  %3120 = vmatpush1.msra.mxu0 %v202
  %3121 = vmatprep.subr.mxu0 %v199
  %3122 = vmatpush1.msra.mxu0 %v198
  %3123 = vmatprep.subr.mxu0 %v195
  %3124 = vmatpush1.msra.mxu0 %v194
  %3125 = vmatprep.subr.mxu0 %v191
  %3126 = vmatpush1.msra.mxu0 %v190
  %3127 = vmatprep.subr.mxu0 %v187
  %3128 = vmatpush1.msra.mxu0 %v186
  %3129 = vmatprep.subr.mxu0 %v183
  %3130 = vmatpush1.msra.mxu0 %v182
  %3131 = vmatprep.subr.mxu0 %v179
  %3132 = vmatpush1.msra.mxu0 %v178
  %3133 = vmatprep.subr.mxu0 %v175
  %3134 = vmatpush1.msra.mxu0 %v174
  %3135 = vmatprep.subr.mxu0 %v171
  %3136 = vmatpush1.msra.mxu0 %v170
  %3137 = vmatprep.subr.mxu0 %v167
  %3138 = vmatpush1.msra.mxu0 %v166
  %3139 = vmatprep.subr.mxu0 %v163
  %3140 = vmatpush1.msra.mxu0 %v162
  %3141 = vmatprep.subr.mxu0 0.0
  %3142 = vmatpush2.msra.mxu0 0.0
  %3143 = vmatprep.subr.mxu0 0.0
  %3144 = vmatpush2.msra.mxu0 0.0
  %3145 = vmatprep.subr.mxu0 0.0
  %3146 = vmatpush2.msra.mxu0 0.0
  %3147 = vmatprep.subr.mxu0 0.0
  %3148 = vmatpush2.msra.mxu0 0.0
  %3149 = vmatprep.subr.mxu0 0.0
  %3150 = vmatpush2.msra.mxu0 0.0
  %3151 = vmatprep.subr.mxu0 0.0
  %3152 = vmatpush2.msra.mxu0 0.0
  %3153 = vmatprep.subr.mxu0 0.0
  %3154 = vmatpush2.msra.mxu0 0.0
  %3155 = vmatprep.subr.mxu0 0.0
  %3156 = vmatpush2.msra.mxu0 0.0
  %3157 = vmatprep.subr.mxu0 0.0
  %3158 = vmatpush2.msra.mxu0 0.0
  %3159 = vmatprep.subr.mxu0 0.0
  %3160 = vmatpush2.msra.mxu0 0.0
  %3161 = vmatprep.subr.mxu0 0.0
  %3162 = vmatpush2.msra.mxu0 0.0
  %3163 = vmatprep.subr.mxu0 0.0
  %3164 = vmatpush2.msra.mxu0 0.0
  %3165 = vmatprep.subr.mxu0 0.0
  %3166 = vmatpush2.msra.mxu0 0.0
  %3167 = vmatprep.subr.mxu0 0.0
  %3168 = vmatpush2.msra.mxu0 0.0
  %3169 = vmatprep.subr.mxu0 0.0
  %3170 = vmatpush2.msra.mxu0 0.0
  %3171 = vmatprep.subr.mxu0 0.0
  %3172 = vmatpush2.msra.mxu0 0.0
  %3173 = vmatprep.mubr.f32.mxu0 0.0
  %3174 = vmatmul.mubr.f32.gmra.mxu0 %v2738
  %v3175 = vpop.f32.mrf.mxu0
  %v3176 = vadd.f32 0.0, %v3175
  %v3177 = vpop.f32.mrf.mxu0
  %v3178 = vadd.f32 0.0, %v3177
  %3179 = vdwg.mxu0
  %v3180 = vadd.f32 %v3034, %v3105
  %v3181 = vadd.f32 %v3035, %v3107
  %v3182 = vadd.f32 %v3036, %v3176
  %v3183 = vadd.f32 %v3037, %v3178
  %v3184 = vxor.u32 %v2888, 2147483648
  %v3185 = vxor.u32 %v2889, 2147483648
  %v3186 = vxor.u32 %v2890, 2147483648
  %v3187 = vmul.f32 %v3184, 1.442695
  %v3188 = vpow.pop %v3187
  %v3189 = vmul.f32 %v3185, 1.442695
  %v3190 = vpow.pop %v3189
  %v3191 = vmul.f32 %v3186, 1.442695
  %v3192 = vpow.pop %v3191
  %v3193 = vadd.f32 %v3188, 1.0
  %v3194 = vadd.f32 %v3190, 1.0
  %v3195 = vadd.f32 %v3192, 1.0
  %v3196 = vrcp.pop %v3193
  %v3197 = vmul.f32 1.0, %v3196
  %v3198 = vrcp.pop %v3194
  %v3199 = vmul.f32 1.0, %v3198
  %v3200 = vrcp.pop %v3195
  %v3201 = vmul.f32 1.0, %v3200
  %v3202 = vtanh.pop %v2891
  %v3203 = vmul.f32 %v3199, %v2712
  %v3204 = vmul.f32 %v3197, %v3202
  %v3205 = vadd.f32 %v3203, %v3204
  %v3206 = vtanh.pop %v3205
  %v3207 = vmul.f32 %v3201, %v3206
  %v3208 = vxor.u32 %v3180, 2147483648
  %v3209 = vxor.u32 %v3181, 2147483648
  %v3210 = vxor.u32 %v3182, 2147483648
  %v3211 = vmul.f32 %v3208, 1.442695
  %v3212 = vpow.pop %v3211
  %v3213 = vmul.f32 %v3209, 1.442695
  %v3214 = vpow.pop %v3213
  %v3215 = vmul.f32 %v3210, 1.442695
  %v3216 = vpow.pop %v3215
  %v3217 = vadd.f32 %v3212, 1.0
  %v3218 = vadd.f32 %v3214, 1.0
  %v3219 = vadd.f32 %v3216, 1.0
  %v3220 = vrcp.pop %v3217
  %v3221 = vmul.f32 1.0, %v3220
  %v3222 = vrcp.pop %v3218
  %v3223 = vmul.f32 1.0, %v3222
  %v3224 = vrcp.pop %v3219
  %v3225 = vmul.f32 1.0, %v3224
  %v3226 = vtanh.pop %v3183
  %v3227 = vmul.f32 %v3223, %v2736
  %v3228 = vmul.f32 %v3221, %v3226
  %v3229 = vadd.f32 %v3227, %v3228
  %v3230 = vtanh.pop %v3229
  %v3231 = vmul.f32 %v3225, %v3230
  %s3232 = smul.u32 7, 4
  %s3233 = smul.addr %s3232, 8
  %s3234 = scalar_lea.vmem %s0, %s3233
  %v3235 = vld [vmem:[%s3234] sm:$0xff]
  %v3236 = vld [vmem:[%s3234 + $0x8] sm:$0xff]
  %v3237 = vld [vmem:[%s3234 + $0x10] sm:$0xff]
  %v3238 = vld [vmem:[%s3234 + $0x18] sm:$0xff]
  %3239 = vmatprep.subr.mxu0 %v93
  %3240 = vmatpush1.msra.mxu0 %v92
  %3241 = vmatprep.subr.mxu0 %v89
  %3242 = vmatpush1.msra.mxu0 %v88
  %3243 = vmatprep.subr.mxu0 %v85
  %3244 = vmatpush1.msra.mxu0 %v84
  %3245 = vmatprep.subr.mxu0 %v81
  %3246 = vmatpush1.msra.mxu0 %v80
  %3247 = vmatprep.subr.mxu0 %v77
  %3248 = vmatpush1.msra.mxu0 %v76
  %3249 = vmatprep.subr.mxu0 %v73
  %3250 = vmatpush1.msra.mxu0 %v72
  %3251 = vmatprep.subr.mxu0 %v69
  %3252 = vmatpush1.msra.mxu0 %v68
  %3253 = vmatprep.subr.mxu0 %v65
  %3254 = vmatpush1.msra.mxu0 %v64
  %3255 = vmatprep.subr.mxu0 %v61
  %3256 = vmatpush1.msra.mxu0 %v60
  %3257 = vmatprep.subr.mxu0 %v57
  %3258 = vmatpush1.msra.mxu0 %v56
  %3259 = vmatprep.subr.mxu0 %v53
  %3260 = vmatpush1.msra.mxu0 %v52
  %3261 = vmatprep.subr.mxu0 %v49
  %3262 = vmatpush1.msra.mxu0 %v48
  %3263 = vmatprep.subr.mxu0 %v45
  %3264 = vmatpush1.msra.mxu0 %v44
  %3265 = vmatprep.subr.mxu0 %v41
  %3266 = vmatpush1.msra.mxu0 %v40
  %3267 = vmatprep.subr.mxu0 %v37
  %3268 = vmatpush1.msra.mxu0 %v36
  %3269 = vmatprep.subr.mxu0 %v33
  %3270 = vmatpush1.msra.mxu0 %v32
  %3271 = vmatprep.subr.mxu0 0.0
  %3272 = vmatpush2.msra.mxu0 0.0
  %3273 = vmatprep.subr.mxu0 0.0
  %3274 = vmatpush2.msra.mxu0 0.0
  %3275 = vmatprep.subr.mxu0 0.0
  %3276 = vmatpush2.msra.mxu0 0.0
  %3277 = vmatprep.subr.mxu0 0.0
  %3278 = vmatpush2.msra.mxu0 0.0
  %3279 = vmatprep.subr.mxu0 0.0
  %3280 = vmatpush2.msra.mxu0 0.0
  %3281 = vmatprep.subr.mxu0 0.0
  %3282 = vmatpush2.msra.mxu0 0.0
  %3283 = vmatprep.subr.mxu0 0.0
  %3284 = vmatpush2.msra.mxu0 0.0
  %3285 = vmatprep.subr.mxu0 0.0
  %3286 = vmatpush2.msra.mxu0 0.0
  %3287 = vmatprep.subr.mxu0 0.0
  %3288 = vmatpush2.msra.mxu0 0.0
  %3289 = vmatprep.subr.mxu0 0.0
  %3290 = vmatpush2.msra.mxu0 0.0
  %3291 = vmatprep.subr.mxu0 0.0
  %3292 = vmatpush2.msra.mxu0 0.0
  %3293 = vmatprep.subr.mxu0 0.0
  %3294 = vmatpush2.msra.mxu0 0.0
  %3295 = vmatprep.subr.mxu0 0.0
  %3296 = vmatpush2.msra.mxu0 0.0
  %3297 = vmatprep.subr.mxu0 0.0
  %3298 = vmatpush2.msra.mxu0 0.0
  %3299 = vmatprep.subr.mxu0 0.0
  %3300 = vmatpush2.msra.mxu0 0.0
  %3301 = vmatprep.subr.mxu0 0.0
  %3302 = vmatpush2.msra.mxu0 0.0
  %3303 = vmatprep.mubr.f32.mxu0 0.0
  %3304 = vmatmul.mubr.f32.gmra.mxu0 %v3207
  %v3305 = vpop.f32.mrf.mxu0
  %v3306 = vadd.f32 0.0, %v3305
  %v3307 = vpop.f32.mrf.mxu0
  %v3308 = vadd.f32 0.0, %v3307
  %3309 = vdwg.mxu0
  %3310 = vmatprep.subr.mxu0 %v95
  %3311 = vmatpush1.msra.mxu0 %v94
  %3312 = vmatprep.subr.mxu0 %v91
  %3313 = vmatpush1.msra.mxu0 %v90
  %3314 = vmatprep.subr.mxu0 %v87
  %3315 = vmatpush1.msra.mxu0 %v86
  %3316 = vmatprep.subr.mxu0 %v83
  %3317 = vmatpush1.msra.mxu0 %v82
  %3318 = vmatprep.subr.mxu0 %v79
  %3319 = vmatpush1.msra.mxu0 %v78
  %3320 = vmatprep.subr.mxu0 %v75
  %3321 = vmatpush1.msra.mxu0 %v74
  %3322 = vmatprep.subr.mxu0 %v71
  %3323 = vmatpush1.msra.mxu0 %v70
  %3324 = vmatprep.subr.mxu0 %v67
  %3325 = vmatpush1.msra.mxu0 %v66
  %3326 = vmatprep.subr.mxu0 %v63
  %3327 = vmatpush1.msra.mxu0 %v62
  %3328 = vmatprep.subr.mxu0 %v59
  %3329 = vmatpush1.msra.mxu0 %v58
  %3330 = vmatprep.subr.mxu0 %v55
  %3331 = vmatpush1.msra.mxu0 %v54
  %3332 = vmatprep.subr.mxu0 %v51
  %3333 = vmatpush1.msra.mxu0 %v50
  %3334 = vmatprep.subr.mxu0 %v47
  %3335 = vmatpush1.msra.mxu0 %v46
  %3336 = vmatprep.subr.mxu0 %v43
  %3337 = vmatpush1.msra.mxu0 %v42
  %3338 = vmatprep.subr.mxu0 %v39
  %3339 = vmatpush1.msra.mxu0 %v38
  %3340 = vmatprep.subr.mxu0 %v35
  %3341 = vmatpush1.msra.mxu0 %v34
  %3342 = vmatprep.subr.mxu0 0.0
  %3343 = vmatpush2.msra.mxu0 0.0
  %3344 = vmatprep.subr.mxu0 0.0
  %3345 = vmatpush2.msra.mxu0 0.0
  %3346 = vmatprep.subr.mxu0 0.0
  %3347 = vmatpush2.msra.mxu0 0.0
  %3348 = vmatprep.subr.mxu0 0.0
  %3349 = vmatpush2.msra.mxu0 0.0
  %3350 = vmatprep.subr.mxu0 0.0
  %3351 = vmatpush2.msra.mxu0 0.0
  %3352 = vmatprep.subr.mxu0 0.0
  %3353 = vmatpush2.msra.mxu0 0.0
  %3354 = vmatprep.subr.mxu0 0.0
  %3355 = vmatpush2.msra.mxu0 0.0
  %3356 = vmatprep.subr.mxu0 0.0
  %3357 = vmatpush2.msra.mxu0 0.0
  %3358 = vmatprep.subr.mxu0 0.0
  %3359 = vmatpush2.msra.mxu0 0.0
  %3360 = vmatprep.subr.mxu0 0.0
  %3361 = vmatpush2.msra.mxu0 0.0
  %3362 = vmatprep.subr.mxu0 0.0
  %3363 = vmatpush2.msra.mxu0 0.0
  %3364 = vmatprep.subr.mxu0 0.0
  %3365 = vmatpush2.msra.mxu0 0.0
  %3366 = vmatprep.subr.mxu0 0.0
  %3367 = vmatpush2.msra.mxu0 0.0
  %3368 = vmatprep.subr.mxu0 0.0
  %3369 = vmatpush2.msra.mxu0 0.0
  %3370 = vmatprep.subr.mxu0 0.0
  %3371 = vmatpush2.msra.mxu0 0.0
  %3372 = vmatprep.subr.mxu0 0.0
  %3373 = vmatpush2.msra.mxu0 0.0
  %3374 = vmatprep.mubr.f32.mxu0 0.0
  %3375 = vmatmul.mubr.f32.gmra.mxu0 %v3207
  %v3376 = vpop.f32.mrf.mxu0
  %v3377 = vadd.f32 0.0, %v3376
  %v3378 = vpop.f32.mrf.mxu0
  %v3379 = vadd.f32 0.0, %v3378
  %3380 = vdwg.mxu0
  %v3381 = vadd.f32 %v3235, %v3306
  %v3382 = vadd.f32 %v3236, %v3308
  %v3383 = vadd.f32 %v3237, %v3377
  %v3384 = vadd.f32 %v3238, %v3379
  %3385 = vmatprep.subr.mxu0 %v157
  %3386 = vmatpush1.msra.mxu0 %v156
  %3387 = vmatprep.subr.mxu0 %v153
  %3388 = vmatpush1.msra.mxu0 %v152
  %3389 = vmatprep.subr.mxu0 %v149
  %3390 = vmatpush1.msra.mxu0 %v148
  %3391 = vmatprep.subr.mxu0 %v145
  %3392 = vmatpush1.msra.mxu0 %v144
  %3393 = vmatprep.subr.mxu0 %v141
  %3394 = vmatpush1.msra.mxu0 %v140
  %3395 = vmatprep.subr.mxu0 %v137
  %3396 = vmatpush1.msra.mxu0 %v136
  %3397 = vmatprep.subr.mxu0 %v133
  %3398 = vmatpush1.msra.mxu0 %v132
  %3399 = vmatprep.subr.mxu0 %v129
  %3400 = vmatpush1.msra.mxu0 %v128
  %3401 = vmatprep.subr.mxu0 %v125
  %3402 = vmatpush1.msra.mxu0 %v124
  %3403 = vmatprep.subr.mxu0 %v121
  %3404 = vmatpush1.msra.mxu0 %v120
  %3405 = vmatprep.subr.mxu0 %v117
  %3406 = vmatpush1.msra.mxu0 %v116
  %3407 = vmatprep.subr.mxu0 %v113
  %3408 = vmatpush1.msra.mxu0 %v112
  %3409 = vmatprep.subr.mxu0 %v109
  %3410 = vmatpush1.msra.mxu0 %v108
  %3411 = vmatprep.subr.mxu0 %v105
  %3412 = vmatpush1.msra.mxu0 %v104
  %3413 = vmatprep.subr.mxu0 %v101
  %3414 = vmatpush1.msra.mxu0 %v100
  %3415 = vmatprep.subr.mxu0 %v97
  %3416 = vmatpush1.msra.mxu0 %v96
  %3417 = vmatprep.subr.mxu0 0.0
  %3418 = vmatpush2.msra.mxu0 0.0
  %3419 = vmatprep.subr.mxu0 0.0
  %3420 = vmatpush2.msra.mxu0 0.0
  %3421 = vmatprep.subr.mxu0 0.0
  %3422 = vmatpush2.msra.mxu0 0.0
  %3423 = vmatprep.subr.mxu0 0.0
  %3424 = vmatpush2.msra.mxu0 0.0
  %3425 = vmatprep.subr.mxu0 0.0
  %3426 = vmatpush2.msra.mxu0 0.0
  %3427 = vmatprep.subr.mxu0 0.0
  %3428 = vmatpush2.msra.mxu0 0.0
  %3429 = vmatprep.subr.mxu0 0.0
  %3430 = vmatpush2.msra.mxu0 0.0
  %3431 = vmatprep.subr.mxu0 0.0
  %3432 = vmatpush2.msra.mxu0 0.0
  %3433 = vmatprep.subr.mxu0 0.0
  %3434 = vmatpush2.msra.mxu0 0.0
  %3435 = vmatprep.subr.mxu0 0.0
  %3436 = vmatpush2.msra.mxu0 0.0
  %3437 = vmatprep.subr.mxu0 0.0
  %3438 = vmatpush2.msra.mxu0 0.0
  %3439 = vmatprep.subr.mxu0 0.0
  %3440 = vmatpush2.msra.mxu0 0.0
  %3441 = vmatprep.subr.mxu0 0.0
  %3442 = vmatpush2.msra.mxu0 0.0
  %3443 = vmatprep.subr.mxu0 0.0
  %3444 = vmatpush2.msra.mxu0 0.0
  %3445 = vmatprep.subr.mxu0 0.0
  %3446 = vmatpush2.msra.mxu0 0.0
  %3447 = vmatprep.subr.mxu0 0.0
  %3448 = vmatpush2.msra.mxu0 0.0
  %3449 = vmatprep.mubr.f32.mxu0 0.0
  %3450 = vmatmul.mubr.f32.gmra.mxu0 %v3207
  %v3451 = vpop.f32.mrf.mxu0
  %v3452 = vadd.f32 0.0, %v3451
  %v3453 = vpop.f32.mrf.mxu0
  %v3454 = vadd.f32 0.0, %v3453
  %3455 = vdwg.mxu0
  %3456 = vmatprep.subr.mxu0 %v159
  %3457 = vmatpush1.msra.mxu0 %v158
  %3458 = vmatprep.subr.mxu0 %v155
  %3459 = vmatpush1.msra.mxu0 %v154
  %3460 = vmatprep.subr.mxu0 %v151
  %3461 = vmatpush1.msra.mxu0 %v150
  %3462 = vmatprep.subr.mxu0 %v147
  %3463 = vmatpush1.msra.mxu0 %v146
  %3464 = vmatprep.subr.mxu0 %v143
  %3465 = vmatpush1.msra.mxu0 %v142
  %3466 = vmatprep.subr.mxu0 %v139
  %3467 = vmatpush1.msra.mxu0 %v138
  %3468 = vmatprep.subr.mxu0 %v135
  %3469 = vmatpush1.msra.mxu0 %v134
  %3470 = vmatprep.subr.mxu0 %v131
  %3471 = vmatpush1.msra.mxu0 %v130
  %3472 = vmatprep.subr.mxu0 %v127
  %3473 = vmatpush1.msra.mxu0 %v126
  %3474 = vmatprep.subr.mxu0 %v123
  %3475 = vmatpush1.msra.mxu0 %v122
  %3476 = vmatprep.subr.mxu0 %v119
  %3477 = vmatpush1.msra.mxu0 %v118
  %3478 = vmatprep.subr.mxu0 %v115
  %3479 = vmatpush1.msra.mxu0 %v114
  %3480 = vmatprep.subr.mxu0 %v111
  %3481 = vmatpush1.msra.mxu0 %v110
  %3482 = vmatprep.subr.mxu0 %v107
  %3483 = vmatpush1.msra.mxu0 %v106
  %3484 = vmatprep.subr.mxu0 %v103
  %3485 = vmatpush1.msra.mxu0 %v102
  %3486 = vmatprep.subr.mxu0 %v99
  %3487 = vmatpush1.msra.mxu0 %v98
  %3488 = vmatprep.subr.mxu0 0.0
  %3489 = vmatpush2.msra.mxu0 0.0
  %3490 = vmatprep.subr.mxu0 0.0
  %3491 = vmatpush2.msra.mxu0 0.0
  %3492 = vmatprep.subr.mxu0 0.0
  %3493 = vmatpush2.msra.mxu0 0.0
  %3494 = vmatprep.subr.mxu0 0.0
  %3495 = vmatpush2.msra.mxu0 0.0
  %3496 = vmatprep.subr.mxu0 0.0
  %3497 = vmatpush2.msra.mxu0 0.0
  %3498 = vmatprep.subr.mxu0 0.0
  %3499 = vmatpush2.msra.mxu0 0.0
  %3500 = vmatprep.subr.mxu0 0.0
  %3501 = vmatpush2.msra.mxu0 0.0
  %3502 = vmatprep.subr.mxu0 0.0
  %3503 = vmatpush2.msra.mxu0 0.0
  %3504 = vmatprep.subr.mxu0 0.0
  %3505 = vmatpush2.msra.mxu0 0.0
  %3506 = vmatprep.subr.mxu0 0.0
  %3507 = vmatpush2.msra.mxu0 0.0
  %3508 = vmatprep.subr.mxu0 0.0
  %3509 = vmatpush2.msra.mxu0 0.0
  %3510 = vmatprep.subr.mxu0 0.0
  %3511 = vmatpush2.msra.mxu0 0.0
  %3512 = vmatprep.subr.mxu0 0.0
  %3513 = vmatpush2.msra.mxu0 0.0
  %3514 = vmatprep.subr.mxu0 0.0
  %3515 = vmatpush2.msra.mxu0 0.0
  %3516 = vmatprep.subr.mxu0 0.0
  %3517 = vmatpush2.msra.mxu0 0.0
  %3518 = vmatprep.subr.mxu0 0.0
  %3519 = vmatpush2.msra.mxu0 0.0
  %3520 = vmatprep.mubr.f32.mxu0 0.0
  %3521 = vmatmul.mubr.f32.gmra.mxu0 %v3207
  %v3522 = vpop.f32.mrf.mxu0
  %v3523 = vadd.f32 0.0, %v3522
  %v3524 = vpop.f32.mrf.mxu0
  %v3525 = vadd.f32 0.0, %v3524
  %3526 = vdwg.mxu0
  %v3527 = vadd.f32 %v552, %v3452
  %v3528 = vadd.f32 %v556, %v3454
  %v3529 = vadd.f32 %v560, %v3523
  %v3530 = vadd.f32 %v564, %v3525
  %3531 = vmatprep.subr.mxu0 %v221
  %3532 = vmatpush1.msra.mxu0 %v220
  %3533 = vmatprep.subr.mxu0 %v217
  %3534 = vmatpush1.msra.mxu0 %v216
  %3535 = vmatprep.subr.mxu0 %v213
  %3536 = vmatpush1.msra.mxu0 %v212
  %3537 = vmatprep.subr.mxu0 %v209
  %3538 = vmatpush1.msra.mxu0 %v208
  %3539 = vmatprep.subr.mxu0 %v205
  %3540 = vmatpush1.msra.mxu0 %v204
  %3541 = vmatprep.subr.mxu0 %v201
  %3542 = vmatpush1.msra.mxu0 %v200
  %3543 = vmatprep.subr.mxu0 %v197
  %3544 = vmatpush1.msra.mxu0 %v196
  %3545 = vmatprep.subr.mxu0 %v193
  %3546 = vmatpush1.msra.mxu0 %v192
  %3547 = vmatprep.subr.mxu0 %v189
  %3548 = vmatpush1.msra.mxu0 %v188
  %3549 = vmatprep.subr.mxu0 %v185
  %3550 = vmatpush1.msra.mxu0 %v184
  %3551 = vmatprep.subr.mxu0 %v181
  %3552 = vmatpush1.msra.mxu0 %v180
  %3553 = vmatprep.subr.mxu0 %v177
  %3554 = vmatpush1.msra.mxu0 %v176
  %3555 = vmatprep.subr.mxu0 %v173
  %3556 = vmatpush1.msra.mxu0 %v172
  %3557 = vmatprep.subr.mxu0 %v169
  %3558 = vmatpush1.msra.mxu0 %v168
  %3559 = vmatprep.subr.mxu0 %v165
  %3560 = vmatpush1.msra.mxu0 %v164
  %3561 = vmatprep.subr.mxu0 %v161
  %3562 = vmatpush1.msra.mxu0 %v160
  %3563 = vmatprep.subr.mxu0 0.0
  %3564 = vmatpush2.msra.mxu0 0.0
  %3565 = vmatprep.subr.mxu0 0.0
  %3566 = vmatpush2.msra.mxu0 0.0
  %3567 = vmatprep.subr.mxu0 0.0
  %3568 = vmatpush2.msra.mxu0 0.0
  %3569 = vmatprep.subr.mxu0 0.0
  %3570 = vmatpush2.msra.mxu0 0.0
  %3571 = vmatprep.subr.mxu0 0.0
  %3572 = vmatpush2.msra.mxu0 0.0
  %3573 = vmatprep.subr.mxu0 0.0
  %3574 = vmatpush2.msra.mxu0 0.0
  %3575 = vmatprep.subr.mxu0 0.0
  %3576 = vmatpush2.msra.mxu0 0.0
  %3577 = vmatprep.subr.mxu0 0.0
  %3578 = vmatpush2.msra.mxu0 0.0
  %3579 = vmatprep.subr.mxu0 0.0
  %3580 = vmatpush2.msra.mxu0 0.0
  %3581 = vmatprep.subr.mxu0 0.0
  %3582 = vmatpush2.msra.mxu0 0.0
  %3583 = vmatprep.subr.mxu0 0.0
  %3584 = vmatpush2.msra.mxu0 0.0
  %3585 = vmatprep.subr.mxu0 0.0
  %3586 = vmatpush2.msra.mxu0 0.0
  %3587 = vmatprep.subr.mxu0 0.0
  %3588 = vmatpush2.msra.mxu0 0.0
  %3589 = vmatprep.subr.mxu0 0.0
  %3590 = vmatpush2.msra.mxu0 0.0
  %3591 = vmatprep.subr.mxu0 0.0
  %3592 = vmatpush2.msra.mxu0 0.0
  %3593 = vmatprep.subr.mxu0 0.0
  %3594 = vmatpush2.msra.mxu0 0.0
  %3595 = vmatprep.mubr.f32.mxu0 0.0
  %3596 = vmatmul.mubr.f32.gmra.mxu0 %v3231
  %v3597 = vpop.f32.mrf.mxu0
  %v3598 = vadd.f32 0.0, %v3597
  %v3599 = vpop.f32.mrf.mxu0
  %v3600 = vadd.f32 0.0, %v3599
  %3601 = vdwg.mxu0
  %3602 = vmatprep.subr.mxu0 %v223
  %3603 = vmatpush1.msra.mxu0 %v222
  %3604 = vmatprep.subr.mxu0 %v219
  %3605 = vmatpush1.msra.mxu0 %v218
  %3606 = vmatprep.subr.mxu0 %v215
  %3607 = vmatpush1.msra.mxu0 %v214
  %3608 = vmatprep.subr.mxu0 %v211
  %3609 = vmatpush1.msra.mxu0 %v210
  %3610 = vmatprep.subr.mxu0 %v207
  %3611 = vmatpush1.msra.mxu0 %v206
  %3612 = vmatprep.subr.mxu0 %v203
  %3613 = vmatpush1.msra.mxu0 %v202
  %3614 = vmatprep.subr.mxu0 %v199
  %3615 = vmatpush1.msra.mxu0 %v198
  %3616 = vmatprep.subr.mxu0 %v195
  %3617 = vmatpush1.msra.mxu0 %v194
  %3618 = vmatprep.subr.mxu0 %v191
  %3619 = vmatpush1.msra.mxu0 %v190
  %3620 = vmatprep.subr.mxu0 %v187
  %3621 = vmatpush1.msra.mxu0 %v186
  %3622 = vmatprep.subr.mxu0 %v183
  %3623 = vmatpush1.msra.mxu0 %v182
  %3624 = vmatprep.subr.mxu0 %v179
  %3625 = vmatpush1.msra.mxu0 %v178
  %3626 = vmatprep.subr.mxu0 %v175
  %3627 = vmatpush1.msra.mxu0 %v174
  %3628 = vmatprep.subr.mxu0 %v171
  %3629 = vmatpush1.msra.mxu0 %v170
  %3630 = vmatprep.subr.mxu0 %v167
  %3631 = vmatpush1.msra.mxu0 %v166
  %3632 = vmatprep.subr.mxu0 %v163
  %3633 = vmatpush1.msra.mxu0 %v162
  %3634 = vmatprep.subr.mxu0 0.0
  %3635 = vmatpush2.msra.mxu0 0.0
  %3636 = vmatprep.subr.mxu0 0.0
  %3637 = vmatpush2.msra.mxu0 0.0
  %3638 = vmatprep.subr.mxu0 0.0
  %3639 = vmatpush2.msra.mxu0 0.0
  %3640 = vmatprep.subr.mxu0 0.0
  %3641 = vmatpush2.msra.mxu0 0.0
  %3642 = vmatprep.subr.mxu0 0.0
  %3643 = vmatpush2.msra.mxu0 0.0
  %3644 = vmatprep.subr.mxu0 0.0
  %3645 = vmatpush2.msra.mxu0 0.0
  %3646 = vmatprep.subr.mxu0 0.0
  %3647 = vmatpush2.msra.mxu0 0.0
  %3648 = vmatprep.subr.mxu0 0.0
  %3649 = vmatpush2.msra.mxu0 0.0
  %3650 = vmatprep.subr.mxu0 0.0
  %3651 = vmatpush2.msra.mxu0 0.0
  %3652 = vmatprep.subr.mxu0 0.0
  %3653 = vmatpush2.msra.mxu0 0.0
  %3654 = vmatprep.subr.mxu0 0.0
  %3655 = vmatpush2.msra.mxu0 0.0
  %3656 = vmatprep.subr.mxu0 0.0
  %3657 = vmatpush2.msra.mxu0 0.0
  %3658 = vmatprep.subr.mxu0 0.0
  %3659 = vmatpush2.msra.mxu0 0.0
  %3660 = vmatprep.subr.mxu0 0.0
  %3661 = vmatpush2.msra.mxu0 0.0
  %3662 = vmatprep.subr.mxu0 0.0
  %3663 = vmatpush2.msra.mxu0 0.0
  %3664 = vmatprep.subr.mxu0 0.0
  %3665 = vmatpush2.msra.mxu0 0.0
  %3666 = vmatprep.mubr.f32.mxu0 0.0
  %3667 = vmatmul.mubr.f32.gmra.mxu0 %v3231
  %v3668 = vpop.f32.mrf.mxu0
  %v3669 = vadd.f32 0.0, %v3668
  %v3670 = vpop.f32.mrf.mxu0
  %v3671 = vadd.f32 0.0, %v3670
  %3672 = vdwg.mxu0
  %v3673 = vadd.f32 %v3527, %v3598
  %v3674 = vadd.f32 %v3528, %v3600
  %v3675 = vadd.f32 %v3529, %v3669
  %v3676 = vadd.f32 %v3530, %v3671
  %v3677 = vxor.u32 %v3381, 2147483648
  %v3678 = vxor.u32 %v3382, 2147483648
  %v3679 = vxor.u32 %v3383, 2147483648
  %v3680 = vmul.f32 %v3677, 1.442695
  %v3681 = vpow.pop %v3680
  %v3682 = vmul.f32 %v3678, 1.442695
  %v3683 = vpow.pop %v3682
  %v3684 = vmul.f32 %v3679, 1.442695
  %v3685 = vpow.pop %v3684
  %v3686 = vadd.f32 %v3681, 1.0
  %v3687 = vadd.f32 %v3683, 1.0
  %v3688 = vadd.f32 %v3685, 1.0
  %v3689 = vrcp.pop %v3686
  %v3690 = vmul.f32 1.0, %v3689
  %v3691 = vrcp.pop %v3687
  %v3692 = vmul.f32 1.0, %v3691
  %v3693 = vrcp.pop %v3688
  %v3694 = vmul.f32 1.0, %v3693
  %v3695 = vtanh.pop %v3384
  %v3696 = vmul.f32 %v3692, %v3205
  %v3697 = vmul.f32 %v3690, %v3695
  %v3698 = vadd.f32 %v3696, %v3697
  %v3699 = vtanh.pop %v3698
  %v3700 = vmul.f32 %v3694, %v3699
  %v3701 = vxor.u32 %v3673, 2147483648
  %v3702 = vxor.u32 %v3674, 2147483648
  %v3703 = vxor.u32 %v3675, 2147483648
  %v3704 = vmul.f32 %v3701, 1.442695
  %v3705 = vpow.pop %v3704
  %v3706 = vmul.f32 %v3702, 1.442695
  %v3707 = vpow.pop %v3706
  %v3708 = vmul.f32 %v3703, 1.442695
  %v3709 = vpow.pop %v3708
  %v3710 = vadd.f32 %v3705, 1.0
  %v3711 = vadd.f32 %v3707, 1.0
  %v3712 = vadd.f32 %v3709, 1.0
  %v3713 = vrcp.pop %v3710
  %v3714 = vmul.f32 1.0, %v3713
  %v3715 = vrcp.pop %v3711
  %v3716 = vmul.f32 1.0, %v3715
  %v3717 = vrcp.pop %v3712
  %v3718 = vmul.f32 1.0, %v3717
  %v3719 = vtanh.pop %v3676
  %v3720 = vmul.f32 %v3716, %v3229
  %v3721 = vmul.f32 %v3714, %v3719
  %v3722 = vadd.f32 %v3720, %v3721
  %v3723 = vtanh.pop %v3722
  %v3724 = vmul.f32 %v3718, %v3723
  %3725 = vmatprep.subr.mxu0 %v157
  %3726 = vmatpush1.msra.mxu0 %v156
  %3727 = vmatprep.subr.mxu0 %v153
  %3728 = vmatpush1.msra.mxu0 %v152
  %3729 = vmatprep.subr.mxu0 %v149
  %3730 = vmatpush1.msra.mxu0 %v148
  %3731 = vmatprep.subr.mxu0 %v145
  %3732 = vmatpush1.msra.mxu0 %v144
  %3733 = vmatprep.subr.mxu0 %v141
  %3734 = vmatpush1.msra.mxu0 %v140
  %3735 = vmatprep.subr.mxu0 %v137
  %3736 = vmatpush1.msra.mxu0 %v136
  %3737 = vmatprep.subr.mxu0 %v133
  %3738 = vmatpush1.msra.mxu0 %v132
  %3739 = vmatprep.subr.mxu0 %v129
  %3740 = vmatpush1.msra.mxu0 %v128
  %3741 = vmatprep.subr.mxu0 %v125
  %3742 = vmatpush1.msra.mxu0 %v124
  %3743 = vmatprep.subr.mxu0 %v121
  %3744 = vmatpush1.msra.mxu0 %v120
  %3745 = vmatprep.subr.mxu0 %v117
  %3746 = vmatpush1.msra.mxu0 %v116
  %3747 = vmatprep.subr.mxu0 %v113
  %3748 = vmatpush1.msra.mxu0 %v112
  %3749 = vmatprep.subr.mxu0 %v109
  %3750 = vmatpush1.msra.mxu0 %v108
  %3751 = vmatprep.subr.mxu0 %v105
  %3752 = vmatpush1.msra.mxu0 %v104
  %3753 = vmatprep.subr.mxu0 %v101
  %3754 = vmatpush1.msra.mxu0 %v100
  %3755 = vmatprep.subr.mxu0 %v97
  %3756 = vmatpush1.msra.mxu0 %v96
  %3757 = vmatprep.subr.mxu0 0.0
  %3758 = vmatpush2.msra.mxu0 0.0
  %3759 = vmatprep.subr.mxu0 0.0
  %3760 = vmatpush2.msra.mxu0 0.0
  %3761 = vmatprep.subr.mxu0 0.0
  %3762 = vmatpush2.msra.mxu0 0.0
  %3763 = vmatprep.subr.mxu0 0.0
  %3764 = vmatpush2.msra.mxu0 0.0
  %3765 = vmatprep.subr.mxu0 0.0
  %3766 = vmatpush2.msra.mxu0 0.0
  %3767 = vmatprep.subr.mxu0 0.0
  %3768 = vmatpush2.msra.mxu0 0.0
  %3769 = vmatprep.subr.mxu0 0.0
  %3770 = vmatpush2.msra.mxu0 0.0
  %3771 = vmatprep.subr.mxu0 0.0
  %3772 = vmatpush2.msra.mxu0 0.0
  %3773 = vmatprep.subr.mxu0 0.0
  %3774 = vmatpush2.msra.mxu0 0.0
  %3775 = vmatprep.subr.mxu0 0.0
  %3776 = vmatpush2.msra.mxu0 0.0
  %3777 = vmatprep.subr.mxu0 0.0
  %3778 = vmatpush2.msra.mxu0 0.0
  %3779 = vmatprep.subr.mxu0 0.0
  %3780 = vmatpush2.msra.mxu0 0.0
  %3781 = vmatprep.subr.mxu0 0.0
  %3782 = vmatpush2.msra.mxu0 0.0
  %3783 = vmatprep.subr.mxu0 0.0
  %3784 = vmatpush2.msra.mxu0 0.0
  %3785 = vmatprep.subr.mxu0 0.0
  %3786 = vmatpush2.msra.mxu0 0.0
  %3787 = vmatprep.subr.mxu0 0.0
  %3788 = vmatpush2.msra.mxu0 0.0
  %3789 = vmatprep.mubr.f32.mxu0 0.0
  %3790 = vmatmul.mubr.f32.gmra.mxu0 %v3700
  %v3791 = vpop.f32.mrf.mxu0
  %v3792 = vadd.f32 0.0, %v3791
  %v3793 = vpop.f32.mrf.mxu0
  %v3794 = vadd.f32 0.0, %v3793
  %3795 = vdwg.mxu0
  %3796 = vmatprep.subr.mxu0 %v159
  %3797 = vmatpush1.msra.mxu0 %v158
  %3798 = vmatprep.subr.mxu0 %v155
  %3799 = vmatpush1.msra.mxu0 %v154
  %3800 = vmatprep.subr.mxu0 %v151
  %3801 = vmatpush1.msra.mxu0 %v150
  %3802 = vmatprep.subr.mxu0 %v147
  %3803 = vmatpush1.msra.mxu0 %v146
  %3804 = vmatprep.subr.mxu0 %v143
  %3805 = vmatpush1.msra.mxu0 %v142
  %3806 = vmatprep.subr.mxu0 %v139
  %3807 = vmatpush1.msra.mxu0 %v138
  %3808 = vmatprep.subr.mxu0 %v135
  %3809 = vmatpush1.msra.mxu0 %v134
  %3810 = vmatprep.subr.mxu0 %v131
  %3811 = vmatpush1.msra.mxu0 %v130
  %3812 = vmatprep.subr.mxu0 %v127
  %3813 = vmatpush1.msra.mxu0 %v126
  %3814 = vmatprep.subr.mxu0 %v123
  %3815 = vmatpush1.msra.mxu0 %v122
  %3816 = vmatprep.subr.mxu0 %v119
  %3817 = vmatpush1.msra.mxu0 %v118
  %3818 = vmatprep.subr.mxu0 %v115
  %3819 = vmatpush1.msra.mxu0 %v114
  %3820 = vmatprep.subr.mxu0 %v111
  %3821 = vmatpush1.msra.mxu0 %v110
  %3822 = vmatprep.subr.mxu0 %v107
  %3823 = vmatpush1.msra.mxu0 %v106
  %3824 = vmatprep.subr.mxu0 %v103
  %3825 = vmatpush1.msra.mxu0 %v102
  %3826 = vmatprep.subr.mxu0 %v99
  %3827 = vmatpush1.msra.mxu0 %v98
  %3828 = vmatprep.subr.mxu0 0.0
  %3829 = vmatpush2.msra.mxu0 0.0
  %3830 = vmatprep.subr.mxu0 0.0
  %3831 = vmatpush2.msra.mxu0 0.0
  %3832 = vmatprep.subr.mxu0 0.0
  %3833 = vmatpush2.msra.mxu0 0.0
  %3834 = vmatprep.subr.mxu0 0.0
  %3835 = vmatpush2.msra.mxu0 0.0
  %3836 = vmatprep.subr.mxu0 0.0
  %3837 = vmatpush2.msra.mxu0 0.0
  %3838 = vmatprep.subr.mxu0 0.0
  %3839 = vmatpush2.msra.mxu0 0.0
  %3840 = vmatprep.subr.mxu0 0.0
  %3841 = vmatpush2.msra.mxu0 0.0
  %3842 = vmatprep.subr.mxu0 0.0
  %3843 = vmatpush2.msra.mxu0 0.0
  %3844 = vmatprep.subr.mxu0 0.0
  %3845 = vmatpush2.msra.mxu0 0.0
  %3846 = vmatprep.subr.mxu0 0.0
  %3847 = vmatpush2.msra.mxu0 0.0
  %3848 = vmatprep.subr.mxu0 0.0
  %3849 = vmatpush2.msra.mxu0 0.0
  %3850 = vmatprep.subr.mxu0 0.0
  %3851 = vmatpush2.msra.mxu0 0.0
  %3852 = vmatprep.subr.mxu0 0.0
  %3853 = vmatpush2.msra.mxu0 0.0
  %3854 = vmatprep.subr.mxu0 0.0
  %3855 = vmatpush2.msra.mxu0 0.0
  %3856 = vmatprep.subr.mxu0 0.0
  %3857 = vmatpush2.msra.mxu0 0.0
  %3858 = vmatprep.subr.mxu0 0.0
  %3859 = vmatpush2.msra.mxu0 0.0
  %3860 = vmatprep.mubr.f32.mxu0 0.0
  %3861 = vmatmul.mubr.f32.gmra.mxu0 %v3700
  %v3862 = vpop.f32.mrf.mxu0
  %v3863 = vadd.f32 0.0, %v3862
  %v3864 = vpop.f32.mrf.mxu0
  %v3865 = vadd.f32 0.0, %v3864
  %3866 = vdwg.mxu0
  %v3867 = vadd.f32 %v552, %v3792
  %v3868 = vadd.f32 %v556, %v3794
  %v3869 = vadd.f32 %v560, %v3863
  %v3870 = vadd.f32 %v564, %v3865
  %3871 = vmatprep.subr.mxu0 %v221
  %3872 = vmatpush1.msra.mxu0 %v220
  %3873 = vmatprep.subr.mxu0 %v217
  %3874 = vmatpush1.msra.mxu0 %v216
  %3875 = vmatprep.subr.mxu0 %v213
  %3876 = vmatpush1.msra.mxu0 %v212
  %3877 = vmatprep.subr.mxu0 %v209
  %3878 = vmatpush1.msra.mxu0 %v208
  %3879 = vmatprep.subr.mxu0 %v205
  %3880 = vmatpush1.msra.mxu0 %v204
  %3881 = vmatprep.subr.mxu0 %v201
  %3882 = vmatpush1.msra.mxu0 %v200
  %3883 = vmatprep.subr.mxu0 %v197
  %3884 = vmatpush1.msra.mxu0 %v196
  %3885 = vmatprep.subr.mxu0 %v193
  %3886 = vmatpush1.msra.mxu0 %v192
  %3887 = vmatprep.subr.mxu0 %v189
  %3888 = vmatpush1.msra.mxu0 %v188
  %3889 = vmatprep.subr.mxu0 %v185
  %3890 = vmatpush1.msra.mxu0 %v184
  %3891 = vmatprep.subr.mxu0 %v181
  %3892 = vmatpush1.msra.mxu0 %v180
  %3893 = vmatprep.subr.mxu0 %v177
  %3894 = vmatpush1.msra.mxu0 %v176
  %3895 = vmatprep.subr.mxu0 %v173
  %3896 = vmatpush1.msra.mxu0 %v172
  %3897 = vmatprep.subr.mxu0 %v169
  %3898 = vmatpush1.msra.mxu0 %v168
  %3899 = vmatprep.subr.mxu0 %v165
  %3900 = vmatpush1.msra.mxu0 %v164
  %3901 = vmatprep.subr.mxu0 %v161
  %3902 = vmatpush1.msra.mxu0 %v160
  %3903 = vmatprep.subr.mxu0 0.0
  %3904 = vmatpush2.msra.mxu0 0.0
  %3905 = vmatprep.subr.mxu0 0.0
  %3906 = vmatpush2.msra.mxu0 0.0
  %3907 = vmatprep.subr.mxu0 0.0
  %3908 = vmatpush2.msra.mxu0 0.0
  %3909 = vmatprep.subr.mxu0 0.0
  %3910 = vmatpush2.msra.mxu0 0.0
  %3911 = vmatprep.subr.mxu0 0.0
  %3912 = vmatpush2.msra.mxu0 0.0
  %3913 = vmatprep.subr.mxu0 0.0
  %3914 = vmatpush2.msra.mxu0 0.0
  %3915 = vmatprep.subr.mxu0 0.0
  %3916 = vmatpush2.msra.mxu0 0.0
  %3917 = vmatprep.subr.mxu0 0.0
  %3918 = vmatpush2.msra.mxu0 0.0
  %3919 = vmatprep.subr.mxu0 0.0
  %3920 = vmatpush2.msra.mxu0 0.0
  %3921 = vmatprep.subr.mxu0 0.0
  %3922 = vmatpush2.msra.mxu0 0.0
  %3923 = vmatprep.subr.mxu0 0.0
  %3924 = vmatpush2.msra.mxu0 0.0
  %3925 = vmatprep.subr.mxu0 0.0
  %3926 = vmatpush2.msra.mxu0 0.0
  %3927 = vmatprep.subr.mxu0 0.0
  %3928 = vmatpush2.msra.mxu0 0.0
  %3929 = vmatprep.subr.mxu0 0.0
  %3930 = vmatpush2.msra.mxu0 0.0
  %3931 = vmatprep.subr.mxu0 0.0
  %3932 = vmatpush2.msra.mxu0 0.0
  %3933 = vmatprep.subr.mxu0 0.0
  %3934 = vmatpush2.msra.mxu0 0.0
  %3935 = vmatprep.mubr.f32.mxu0 0.0
  %3936 = vmatmul.mubr.f32.gmra.mxu0 %v3724
  %v3937 = vpop.f32.mrf.mxu0
  %v3938 = vadd.f32 0.0, %v3937
  %v3939 = vpop.f32.mrf.mxu0
  %v3940 = vadd.f32 0.0, %v3939
  %3941 = vdwg.mxu0
  %3942 = vmatprep.subr.mxu0 %v223
  %3943 = vmatpush1.msra.mxu0 %v222
  %3944 = vmatprep.subr.mxu0 %v219
  %3945 = vmatpush1.msra.mxu0 %v218
  %3946 = vmatprep.subr.mxu0 %v215
  %3947 = vmatpush1.msra.mxu0 %v214
  %3948 = vmatprep.subr.mxu0 %v211
  %3949 = vmatpush1.msra.mxu0 %v210
  %3950 = vmatprep.subr.mxu0 %v207
  %3951 = vmatpush1.msra.mxu0 %v206
  %3952 = vmatprep.subr.mxu0 %v203
  %3953 = vmatpush1.msra.mxu0 %v202
  %3954 = vmatprep.subr.mxu0 %v199
  %3955 = vmatpush1.msra.mxu0 %v198
  %3956 = vmatprep.subr.mxu0 %v195
  %3957 = vmatpush1.msra.mxu0 %v194
  %3958 = vmatprep.subr.mxu0 %v191
  %3959 = vmatpush1.msra.mxu0 %v190
  %3960 = vmatprep.subr.mxu0 %v187
  %3961 = vmatpush1.msra.mxu0 %v186
  %3962 = vmatprep.subr.mxu0 %v183
  %3963 = vmatpush1.msra.mxu0 %v182
  %3964 = vmatprep.subr.mxu0 %v179
  %3965 = vmatpush1.msra.mxu0 %v178
  %3966 = vmatprep.subr.mxu0 %v175
  %3967 = vmatpush1.msra.mxu0 %v174
  %3968 = vmatprep.subr.mxu0 %v171
  %3969 = vmatpush1.msra.mxu0 %v170
  %3970 = vmatprep.subr.mxu0 %v167
  %3971 = vmatpush1.msra.mxu0 %v166
  %3972 = vmatprep.subr.mxu0 %v163
  %3973 = vmatpush1.msra.mxu0 %v162
  %3974 = vmatprep.subr.mxu0 0.0
  %3975 = vmatpush2.msra.mxu0 0.0
  %3976 = vmatprep.subr.mxu0 0.0
  %3977 = vmatpush2.msra.mxu0 0.0
  %3978 = vmatprep.subr.mxu0 0.0
  %3979 = vmatpush2.msra.mxu0 0.0
  %3980 = vmatprep.subr.mxu0 0.0
  %3981 = vmatpush2.msra.mxu0 0.0
  %3982 = vmatprep.subr.mxu0 0.0
  %3983 = vmatpush2.msra.mxu0 0.0
  %3984 = vmatprep.subr.mxu0 0.0
  %3985 = vmatpush2.msra.mxu0 0.0
  %3986 = vmatprep.subr.mxu0 0.0
  %3987 = vmatpush2.msra.mxu0 0.0
  %3988 = vmatprep.subr.mxu0 0.0
  %3989 = vmatpush2.msra.mxu0 0.0
  %3990 = vmatprep.subr.mxu0 0.0
  %3991 = vmatpush2.msra.mxu0 0.0
  %3992 = vmatprep.subr.mxu0 0.0
  %3993 = vmatpush2.msra.mxu0 0.0
  %3994 = vmatprep.subr.mxu0 0.0
  %3995 = vmatpush2.msra.mxu0 0.0
  %3996 = vmatprep.subr.mxu0 0.0
  %3997 = vmatpush2.msra.mxu0 0.0
  %3998 = vmatprep.subr.mxu0 0.0
  %3999 = vmatpush2.msra.mxu0 0.0
  %4000 = vmatprep.subr.mxu0 0.0
  %4001 = vmatpush2.msra.mxu0 0.0
  %4002 = vmatprep.subr.mxu0 0.0
  %4003 = vmatpush2.msra.mxu0 0.0
  %4004 = vmatprep.subr.mxu0 0.0
  %4005 = vmatpush2.msra.mxu0 0.0
  %4006 = vmatprep.mubr.f32.mxu0 0.0
  %4007 = vmatmul.mubr.f32.gmra.mxu0 %v3724
  %v4008 = vpop.f32.mrf.mxu0
  %v4009 = vadd.f32 0.0, %v4008
  %v4010 = vpop.f32.mrf.mxu0
  %v4011 = vadd.f32 0.0, %v4010
  %4012 = vdwg.mxu0
  %v4013 = vadd.f32 %v3867, %v3938
  %v4014 = vadd.f32 %v3868, %v3940
  %v4015 = vadd.f32 %v3869, %v4009
  %v4016 = vadd.f32 %v3870, %v4011
  %v4017 = vxor.u32 %v4013, 2147483648
  %v4018 = vxor.u32 %v4014, 2147483648
  %v4019 = vxor.u32 %v4015, 2147483648
  %v4020 = vmul.f32 %v4017, 1.442695
  %v4021 = vpow.pop %v4020
  %v4022 = vmul.f32 %v4018, 1.442695
  %v4023 = vpow.pop %v4022
  %v4024 = vmul.f32 %v4019, 1.442695
  %v4025 = vpow.pop %v4024
  %v4026 = vadd.f32 %v4021, 1.0
  %v4027 = vadd.f32 %v4023, 1.0
  %v4028 = vadd.f32 %v4025, 1.0
  %v4029 = vrcp.pop %v4026
  %v4030 = vmul.f32 1.0, %v4029
  %v4031 = vrcp.pop %v4027
  %v4032 = vmul.f32 1.0, %v4031
  %v4033 = vrcp.pop %v4028
  %v4034 = vmul.f32 1.0, %v4033
  %v4035 = vtanh.pop %v4016
  %v4036 = vmul.f32 %v4032, %v3722
  %v4037 = vmul.f32 %v4030, %v4035
  %v4038 = vadd.f32 %v4036, %v4037
  %v4039 = vtanh.pop %v4038
  %v4040 = vmul.f32 %v4034, %v4039
  %4041 = vadd.xlane.f32.xlu0 %v4040
  %v4042 = vpop.xlane.xlu0 %4041
  %v4043 = vmul.f32 %v4042, 0.015625
  %v4044 = vmul.f32 %v4040, %v4040
  %4045 = vadd.xlane.f32.xlu0 %v4044
  %v4046 = vpop.xlane.xlu0 %4045
  %v4047 = vmul.f32 %v4046, 0.015625
  %v4048 = vmul.f32 %v4043, %v4043
  %v4049 = vsub.f32 %v4047, %v4048
  %v4050 = vmax.f32 %v4049, 0.0
  %v4051 = vsub.f32 %v4040, %v4043
  %v4052 = vadd.f32 %v4050, 1e-05
  %v4053 = vrsqrt.pop %v4052
  %v4054 = vmul.f32 %v4051, %v4053
  %v4055 = vld [vmem:[%s5] sm:$0x1]
  %v4057 = vlaneseq
  %v4058 = vshrl.u32 %v4057, 7
  %v4059 = vsub.s32 0, %v4058
  %v4060 = vrot.slane %v4055, %v4059
  %v4062 = vmul.f32 %v4054, %v4060
  %v4063 = vld [vmem:[%s6] sm:$0x1]
  %v4065 = vlaneseq
  %v4066 = vshrl.u32 %v4065, 7
  %v4067 = vsub.s32 0, %v4066
  %v4068 = vrot.slane %v4063, %v4067
  %v4070 = vadd.f32 %v4062, %v4068
  %v4071 = vld [vmem:[%s7] sm:$0xff]
  %v4072 = vld [vmem:[%s7 + $0x8] sm:$0xff]
  %v4073 = vld [vmem:[%s7 + $0x10] sm:$0xff]
  %v4074 = vld [vmem:[%s7 + $0x18] sm:$0xff]
  %v4075 = vld [vmem:[%s7 + $0x20] sm:$0xff]
  %v4076 = vld [vmem:[%s7 + $0x28] sm:$0xff]
  %v4077 = vld [vmem:[%s7 + $0x30] sm:$0xff]
  %v4078 = vld [vmem:[%s7 + $0x38] sm:$0xff]
  %v4079 = vld [vmem:[%s7 + $0x40] sm:$0xff]
  %v4080 = vld [vmem:[%s7 + $0x48] sm:$0xff]
  %v4081 = vld [vmem:[%s7 + $0x50] sm:$0xff]
  %v4082 = vld [vmem:[%s7 + $0x58] sm:$0xff]
  %v4083 = vld [vmem:[%s7 + $0x60] sm:$0xff]
  %v4084 = vld [vmem:[%s7 + $0x68] sm:$0xff]
  %v4085 = vld [vmem:[%s7 + $0x70] sm:$0xff]
  %v4086 = vld [vmem:[%s7 + $0x78] sm:$0xff]
  %v4087 = vld [vmem:[%s8] sm:$0x1]
  %v4089 = vlaneseq
  %v4090 = vshrl.u32 %v4089, 7
  %v4091 = vsub.s32 0, %v4090
  %v4092 = vrot.slane %v4087, %v4091
  %4094 = vmatprep.subr.mxu0 0.0
  %4095 = vmatpush1.msra.mxu0 %v4086
  %4096 = vmatprep.subr.mxu0 0.0
  %4097 = vmatpush1.msra.mxu0 %v4085
  %4098 = vmatprep.subr.mxu0 0.0
  %4099 = vmatpush1.msra.mxu0 %v4084
  %4100 = vmatprep.subr.mxu0 0.0
  %4101 = vmatpush1.msra.mxu0 %v4083
  %4102 = vmatprep.subr.mxu0 0.0
  %4103 = vmatpush1.msra.mxu0 %v4082
  %4104 = vmatprep.subr.mxu0 0.0
  %4105 = vmatpush1.msra.mxu0 %v4081
  %4106 = vmatprep.subr.mxu0 0.0
  %4107 = vmatpush1.msra.mxu0 %v4080
  %4108 = vmatprep.subr.mxu0 0.0
  %4109 = vmatpush1.msra.mxu0 %v4079
  %4110 = vmatprep.subr.mxu0 0.0
  %4111 = vmatpush1.msra.mxu0 %v4078
  %4112 = vmatprep.subr.mxu0 0.0
  %4113 = vmatpush1.msra.mxu0 %v4077
  %4114 = vmatprep.subr.mxu0 0.0
  %4115 = vmatpush1.msra.mxu0 %v4076
  %4116 = vmatprep.subr.mxu0 0.0
  %4117 = vmatpush1.msra.mxu0 %v4075
  %4118 = vmatprep.subr.mxu0 0.0
  %4119 = vmatpush1.msra.mxu0 %v4074
  %4120 = vmatprep.subr.mxu0 0.0
  %4121 = vmatpush1.msra.mxu0 %v4073
  %4122 = vmatprep.subr.mxu0 0.0
  %4123 = vmatpush1.msra.mxu0 %v4072
  %4124 = vmatprep.subr.mxu0 0.0
  %4125 = vmatpush1.msra.mxu0 %v4071
  %4126 = vmatprep.subr.mxu0 0.0
  %4127 = vmatpush2.msra.mxu0 0.0
  %4128 = vmatprep.subr.mxu0 0.0
  %4129 = vmatpush2.msra.mxu0 0.0
  %4130 = vmatprep.subr.mxu0 0.0
  %4131 = vmatpush2.msra.mxu0 0.0
  %4132 = vmatprep.subr.mxu0 0.0
  %4133 = vmatpush2.msra.mxu0 0.0
  %4134 = vmatprep.subr.mxu0 0.0
  %4135 = vmatpush2.msra.mxu0 0.0
  %4136 = vmatprep.subr.mxu0 0.0
  %4137 = vmatpush2.msra.mxu0 0.0
  %4138 = vmatprep.subr.mxu0 0.0
  %4139 = vmatpush2.msra.mxu0 0.0
  %4140 = vmatprep.subr.mxu0 0.0
  %4141 = vmatpush2.msra.mxu0 0.0
  %4142 = vmatprep.subr.mxu0 0.0
  %4143 = vmatpush2.msra.mxu0 0.0
  %4144 = vmatprep.subr.mxu0 0.0
  %4145 = vmatpush2.msra.mxu0 0.0
  %4146 = vmatprep.subr.mxu0 0.0
  %4147 = vmatpush2.msra.mxu0 0.0
  %4148 = vmatprep.subr.mxu0 0.0
  %4149 = vmatpush2.msra.mxu0 0.0
  %4150 = vmatprep.subr.mxu0 0.0
  %4151 = vmatpush2.msra.mxu0 0.0
  %4152 = vmatprep.subr.mxu0 0.0
  %4153 = vmatpush2.msra.mxu0 0.0
  %4154 = vmatprep.subr.mxu0 0.0
  %4155 = vmatpush2.msra.mxu0 0.0
  %4156 = vmatprep.subr.mxu0 0.0
  %4157 = vmatpush2.msra.mxu0 0.0
  %4158 = vmatprep.mubr.f32.mxu0 0.0
  %4159 = vmatmul.mubr.f32.gmra.mxu0 %v4070
  %v4160 = vpop.f32.mrf.mxu0
  %v4161 = vadd.f32 %v4092, %v4160
  %v4162 = vpop.f32.mrf.mxu0
  %4163 = vdwg.mxu0
  %4164 = vst [vmem:[%s9] sm:$0xff] %v4161
  // Predicated region
  $region38: #{regularized_lstm_forward.1} parent=0 // pred_check
    _
  $region39: #{regularized_lstm_forward.1} parent=0 // pred_check_branch
    %4166 = sbr.rel (0) target = $region41
  $region40: #{regularized_lstm_forward.1} parent=0 // pred_region
    _
  $region41: #{regularized_lstm_forward.1} parent=0 // pred_fallthru
    _
  // Predicated region
  $region42: #{regularized_lstm_forward.1} parent=0 // pred_check
    _
  $region43: #{regularized_lstm_forward.1} parent=0 // pred_check_branch
    %4168 = sbr.rel (0) target = $region45
  $region44: #{regularized_lstm_forward.1} parent=0 // pred_region
    _
  $region45: #{regularized_lstm_forward.1} parent=0 // pred_fallthru
    _

</llo_original>
